<compile_context>
chip_gen: v7x
topology: tpu7x:2x2x1
jax: 0.10.0
libtpu: 0.0.40
codegen_flags: <defaults>
</compile_context>

<pallas_src>
import functools

import jax
import jax.numpy as jnp
from jax.experimental import pallas as pl
from jax.experimental.pallas import tpu as pltpu


def _round_up(x, m):
    return ((x + m - 1) // m) * m


# ----------------------------------------------------------------------------
# Kernel 1: Y = act(X @ W + b), tiled over M.  X/W are bf16, accumulation f32.
# ----------------------------------------------------------------------------
def _matmul_bias_act_kernel(x_ref, w_ref, b_ref, o_ref, *, apply_relu):
    acc = jnp.dot(x_ref[...], w_ref[...], preferred_element_type=jnp.float32)
    acc = acc + b_ref[...]                     # (1, N) broadcasts over rows
    if apply_relu:
        acc = jnp.maximum(acc, 0.0)
    o_ref[...] = acc.astype(o_ref.dtype)


def matmul_bias_act(x, w, b, *, apply_relu, out_dtype, tile_m=512):
    """x: (M, K) bf16, w: (K, N) bf16, b: (N,) f32 -> act(x @ w + b), (M, N)."""
    M, K = x.shape
    K2, N = w.shape
    assert K == K2
    # Pick an M tile: sublane-friendly (mult of 16 for bf16), sized well under
    # the v7x 64 MiB VMEM / 32 MiB scoped default even when double-buffered.
    if M <= tile_m:
        tm = _round_up(max(M, 16), 16)
        m_pad = tm
    else:
        tm = tile_m
        m_pad = _round_up(M, tm)
    if m_pad != M:
        x = jnp.pad(x, ((0, m_pad - M), (0, 0)))
    b2 = b.reshape(1, N).astype(jnp.float32)

    out = pl.pallas_call(
        functools.partial(_matmul_bias_act_kernel, apply_relu=apply_relu),
        out_shape=jax.ShapeDtypeStruct((m_pad, N), out_dtype),
        grid_spec=pl.GridSpec(
            grid=(m_pad // tm,),
            in_specs=[
                pl.BlockSpec((tm, K), lambda i: (i, 0)),   # X: per-tile rows
                pl.BlockSpec((K, N), lambda i: (0, 0)),    # W: resident
                pl.BlockSpec((1, N), lambda i: (0, 0)),    # b: resident
            ],
            out_specs=pl.BlockSpec((tm, N), lambda i: (i, 0)),
        ),
        compiler_params=pltpu.CompilerParams(
            dimension_semantics=("parallel",)),
    )(x, w, b2)
    return out[:M]


# ----------------------------------------------------------------------------
# Kernel 2: fused FC head  Y = (X @ W1 + b1) @ W2 + b2   (no ReLU, per module)
# W1/W2 are pre-padded to 128 lanes so both matmul outputs are lane-dense.
# ----------------------------------------------------------------------------
def _fc_head_kernel(x_ref, w1_ref, b1_ref, w2_ref, b2_ref, o_ref):
    h = jnp.dot(x_ref[...], w1_ref[...], preferred_element_type=jnp.float32)
    h = h + b1_ref[...]
    h = h.astype(w2_ref.dtype)                 # back to bf16 for 2nd MXU pass
    y = jnp.dot(h, w2_ref[...], preferred_element_type=jnp.float32)
    o_ref[...] = (y + b2_ref[...]).astype(o_ref.dtype)


def fc_head(x, w1, b1, w2, b2, *, tile_m=256):
    """x: (M, K) bf16, w1: (K, H) bf16, w2: (H, N) bf16 -> (M, N) f32."""
    M, K = x.shape
    H = w1.shape[1]
    N = w2.shape[1]
    if M <= tile_m:
        tm = _round_up(max(M, 16), 16)
        m_pad = tm
    else:
        tm = tile_m
        m_pad = _round_up(M, tm)
    if m_pad != M:
        x = jnp.pad(x, ((0, m_pad - M), (0, 0)))

    out = pl.pallas_call(
        _fc_head_kernel,
        out_shape=jax.ShapeDtypeStruct((m_pad, N), jnp.float32),
        grid_spec=pl.GridSpec(
            grid=(m_pad // tm,),
            in_specs=[
                pl.BlockSpec((tm, K), lambda i: (i, 0)),
                pl.BlockSpec((K, H), lambda i: (0, 0)),
                pl.BlockSpec((1, H), lambda i: (0, 0)),
                pl.BlockSpec((H, N), lambda i: (0, 0)),
                pl.BlockSpec((1, N), lambda i: (0, 0)),
            ],
            out_specs=pl.BlockSpec((tm, N), lambda i: (i, 0)),
        ),
        compiler_params=pltpu.CompilerParams(
            dimension_semantics=("parallel",)),
    )(x, w1, b1.reshape(1, H).astype(jnp.float32),
      w2, b2.reshape(1, N).astype(jnp.float32))
    return out[:M]


# ----------------------------------------------------------------------------
# im2col glue (plain JAX), NHWC, feature ordering (kh, kw, C) — no transpose.
# ----------------------------------------------------------------------------
def im2col_nhwc(x, kh, kw, stride):
    """x: (B, H, W, C) -> (B*OH*OW, kh*kw*C), OH, OW."""
    B, H, W, C = x.shape
    OH = (H - kh) // stride + 1
    OW = (W - kw) // stride + 1
    patches = []
    for i in range(kh):
        for j in range(kw):
            patches.append(
                x[:, i:i + stride * OH:stride, j:j + stride * OW:stride, :])
    p = jnp.stack(patches, axis=3)              # (B, OH, OW, kh*kw, C)
    return p.reshape(B * OH * OW, kh * kw * C), OH, OW


def conv2d_relu_nhwc(x, w_mat, b, *, kh, kw, stride, tile_m=512):
    """x: (B, H, W, C) bf16; w_mat: (kh*kw*C, OC) bf16 -> (B, OH, OW, OC) bf16."""
    B = x.shape[0]
    OC = w_mat.shape[1]
    cols, OH, OW = im2col_nhwc(x, kh, kw, stride)
    y = matmul_bias_act(cols, w_mat, b, apply_relu=True,
                        out_dtype=jnp.bfloat16, tile_m=tile_m)
    return y.reshape(B, OH, OW, OC)


# ----------------------------------------------------------------------------
# Parameters: init in PyTorch layout, then one-time GEMM-ready layout prep.
# ----------------------------------------------------------------------------
def init_params(key):
    ks = jax.random.split(key, 8)
    scale = 0.05
    return {
        # conv1: Conv2d(1, 256, kernel_size=4, stride=2)   (OC, C, kh, kw)
        "conv1_w": scale * jax.random.normal(ks[0], (256, 1, 4, 4), jnp.float32),
        "conv1_b": scale * jax.random.normal(ks[1], (256,), jnp.float32),
        # conv2: Conv2d(256, 128, kernel_size=4, stride=2)
        "conv2_w": scale * jax.random.normal(ks[2], (128, 256, 4, 4), jnp.float32),
        "conv2_b": scale * jax.random.normal(ks[3], (128,), jnp.float32),
        # linear: Linear(128*5*5, 100)  (PyTorch stores (out, in), in = C,H,W)
        "lin1_w": scale * jax.random.normal(ks[4], (100, 128 * 5 * 5), jnp.float32),
        "lin1_b": scale * jax.random.normal(ks[5], (100,), jnp.float32),
        # linear2: Linear(100, 10)
        "lin2_w": scale * jax.random.normal(ks[6], (10, 100), jnp.float32),
        "lin2_b": scale * jax.random.normal(ks[7], (10,), jnp.float32),
    }


def prepare_params(p):
    """One-time layout transforms: PyTorch layout -> NHWC/GEMM-ready bf16."""
    def conv_w_to_mat(w):
        # (OC, C, kh, kw) -> (kh, kw, C, OC) -> (kh*kw*C, OC): matches the
        # (kh, kw, C) feature order produced by im2col_nhwc.
        oc, c, kh, kw = w.shape
        return w.transpose(2, 3, 1, 0).reshape(kh * kw * c, oc).astype(jnp.bfloat16)

    # PyTorch .view flattens (C, H, W); our NHWC flatten is (H, W, C) -> permute.
    l1 = p["lin1_w"].reshape(100, 128, 5, 5).transpose(2, 3, 1, 0)   # (5,5,128,100)
    l1 = l1.reshape(5 * 5 * 128, 100)                                # (3200, 100)
    l1 = jnp.pad(l1, ((0, 0), (0, 28))).astype(jnp.bfloat16)         # (3200, 128)
    b1 = jnp.pad(p["lin1_b"], (0, 28)).astype(jnp.float32)           # (128,)

    l2 = p["lin2_w"].T                                               # (100, 10)
    l2 = jnp.pad(l2, ((0, 28), (0, 118))).astype(jnp.bfloat16)       # (128, 128)
    b2 = jnp.pad(p["lin2_b"], (0, 118)).astype(jnp.float32)          # (128,)

    return {
        "conv1_w": conv_w_to_mat(p["conv1_w"]),
        "conv1_b": p["conv1_b"].astype(jnp.float32),
        "conv2_w": conv_w_to_mat(p["conv2_w"]),
        "conv2_b": p["conv2_b"].astype(jnp.float32),
        "lin1_w": l1, "lin1_b": b1,
        "lin2_w": l2, "lin2_b": b2,
    }


# ----------------------------------------------------------------------------
# simpleNet forward (semantics identical to the PyTorch module, bf16 matmuls)
# ----------------------------------------------------------------------------
@jax.jit
def simple_net_forward(prep, x):
    # x: (B, 1, 28, 28) NCHW (PyTorch convention); go NHWC once, stay NHWC.
    x = x.transpose(0, 2, 3, 1).astype(jnp.bfloat16)                   # (B,28,28,1)
    x = conv2d_relu_nhwc(x, prep["conv1_w"], prep["conv1_b"],
                         kh=4, kw=4, stride=2)                         # (B,13,13,256)
    x = conv2d_relu_nhwc(x, prep["conv2_w"], prep["conv2_b"],
                         kh=4, kw=4, stride=2)                         # (B,5,5,128)
    B = x.shape[0]
    x = x.reshape(B, 5 * 5 * 128)                                      # NHWC flatten
    y = fc_head(x, prep["lin1_w"], prep["lin1_b"],
                prep["lin2_w"], prep["lin2_b"])                        # (B, 128) f32
    return y[:, :10]                                                   # (B, 10)


if __name__ == "__main__":
    key = jax.random.PRNGKey(0)
    pkey, xkey = jax.random.split(key)
    params = init_params(pkey)
    prep = prepare_params(params)          # one-time, outside the forward pass
    # MNIST-sized input: the 128*5*5 view in the module pins spatial = 28x28.
    x = jax.random.normal(xkey, (2, 1, 28, 28), jnp.float32)
    out = simple_net_forward(prep, x)
    jax.block_until_ready(out)
    assert out.shape == (2, 10) and out.dtype == jnp.float32
    print("KERNEL_OK")
</pallas_src>

<mosaic_0001>
module attributes {stable_mosaic.version = 11 : i64} {
  func.func @_matmul_bias_act_kernel(%arg0: i32, %arg1: memref<352x16xbf16, #tpu.memory_space<vmem>>, %arg2: memref<16x256xbf16, #tpu.memory_space<vmem>>, %arg3: memref<1x256xf32, #tpu.memory_space<vmem>>, %arg4: memref<352x256xbf16, #tpu.memory_space<vmem>>) attributes {dimension_semantics = [#tpu.dimension_semantics<parallel>], iteration_bounds = array<i64: 1>, scalar_prefetch = 0 : i64, scratch_operands = 0 : i64, tpu.core_type = #tpu.core_type<tc>, window_params = [{transform_indices = @transform_0, window_bounds = array<i64: 352, 16>}, {pipeline_mode = #tpu.pipeline_mode<synchronous>, transform_indices = @transform_1, window_bounds = array<i64: 16, 256>}, {pipeline_mode = #tpu.pipeline_mode<synchronous>, transform_indices = @transform_2, window_bounds = array<i64: 1, 256>}, {transform_indices = @transform_3, window_bounds = array<i64: 352, 256>}]} {
    %c0 = arith.constant 0 : index
    %c0_0 = arith.constant 0 : index
    %0 = vector.load %arg1[%c0, %c0_0] : memref<352x16xbf16, #tpu.memory_space<vmem>>, vector<352x16xbf16>
    %c0_1 = arith.constant 0 : index
    %c0_2 = arith.constant 0 : index
    %1 = vector.load %arg2[%c0_1, %c0_2] : memref<16x256xbf16, #tpu.memory_space<vmem>>, vector<16x256xbf16>
    %cst = arith.constant dense<0.000000e+00> : vector<352x256xf32>
    %2 = tpu.matmul %0, %1, %cst {dimension_numbers = #tpu.dot_dimension_numbers<[1], [0], [0], [1], [0, 0, 1, 1], [], []>} : vector<352x16xbf16>, vector<16x256xbf16>, vector<352x256xf32> -> vector<352x256xf32>
    %c0_3 = arith.constant 0 : index
    %c0_4 = arith.constant 0 : index
    %3 = vector.load %arg3[%c0_3, %c0_4] : memref<1x256xf32, #tpu.memory_space<vmem>>, vector<1x256xf32>
    %4 = vector.broadcast %3 : vector<1x256xf32> to vector<352x256xf32>
    %5 = arith.addf %2, %4 : vector<352x256xf32>
    %cst_5 = arith.constant 0.000000e+00 : f32
    %6 = vector.broadcast %cst_5 : f32 to vector<352x256xf32>
    %7 = arith.maximumf %5, %6 : vector<352x256xf32>
    %8 = arith.truncf %7 : vector<352x256xf32> to vector<352x256xbf16>
    %c0_6 = arith.constant 0 : index
    %c0_7 = arith.constant 0 : index
    %9 = vector.load %arg4[%c0_6, %c0_7] : memref<352x256xbf16, #tpu.memory_space<vmem>>, vector<352x256xbf16>
    tpu.vector_store %arg4[%c0_6, %c0_7], %8 {strides = array<i32>} : memref<352x256xbf16, #tpu.memory_space<vmem>>, vector<352x256xbf16>,
    return
  }
  func.func @transform_0(%arg0: i32) -> (i32, i32) {
    %c0_i32 = arith.constant 0 : i32
    %c0_i32_0 = arith.constant 0 : i32
    return %arg0, %c0_i32 : i32, i32
  }
  func.func @transform_1(%arg0: i32) -> (i32, i32) {
    %c0_i32 = arith.constant 0 : i32
    %c0_i32_0 = arith.constant 0 : i32
    %c0_i32_1 = arith.constant 0 : i32
    return %c0_i32, %c0_i32_0 : i32, i32
  }
  func.func @transform_2(%arg0: i32) -> (i32, i32) {
    %c0_i32 = arith.constant 0 : i32
    %c0_i32_0 = arith.constant 0 : i32
    %c0_i32_1 = arith.constant 0 : i32
    return %c0_i32, %c0_i32_0 : i32, i32
  }
  func.func @transform_3(%arg0: i32) -> (i32, i32) {
    %c0_i32 = arith.constant 0 : i32
    %c0_i32_0 = arith.constant 0 : i32
    return %arg0, %c0_i32 : i32, i32
  }
}

module attributes {stable_mosaic.version = 11 : i64} {
  func.func @_matmul_bias_act_kernel(%arg0: i32, %arg1: memref<64x4096xbf16, #tpu.memory_space<vmem>>, %arg2: memref<4096x128xbf16, #tpu.memory_space<vmem>>, %arg3: memref<1x128xf32, #tpu.memory_space<vmem>>, %arg4: memref<64x128xbf16, #tpu.memory_space<vmem>>) attributes {dimension_semantics = [#tpu.dimension_semantics<parallel>], iteration_bounds = array<i64: 1>, scalar_prefetch = 0 : i64, scratch_operands = 0 : i64, tpu.core_type = #tpu.core_type<tc>, window_params = [{transform_indices = @transform_0, window_bounds = array<i64: 64, 4096>}, {pipeline_mode = #tpu.pipeline_mode<synchronous>, transform_indices = @transform_1, window_bounds = array<i64: 4096, 128>}, {pipeline_mode = #tpu.pipeline_mode<synchronous>, transform_indices = @transform_2, window_bounds = array<i64: 1, 128>}, {transform_indices = @transform_3, window_bounds = array<i64: 64, 128>}]} {
    %c0 = arith.constant 0 : index
    %c0_0 = arith.constant 0 : index
    %0 = vector.load %arg1[%c0, %c0_0] : memref<64x4096xbf16, #tpu.memory_space<vmem>>, vector<64x4096xbf16>
    %c0_1 = arith.constant 0 : index
    %c0_2 = arith.constant 0 : index
    %1 = vector.load %arg2[%c0_1, %c0_2] : memref<4096x128xbf16, #tpu.memory_space<vmem>>, vector<4096x128xbf16>
    %cst = arith.constant dense<0.000000e+00> : vector<64x128xf32>
    %2 = tpu.matmul %0, %1, %cst {dimension_numbers = #tpu.dot_dimension_numbers<[1], [0], [0], [1], [0, 0, 1, 1], [], []>} : vector<64x4096xbf16>, vector<4096x128xbf16>, vector<64x128xf32> -> vector<64x128xf32>
    %c0_3 = arith.constant 0 : index
    %c0_4 = arith.constant 0 : index
    %3 = vector.load %arg3[%c0_3, %c0_4] : memref<1x128xf32, #tpu.memory_space<vmem>>, vector<1x128xf32>
    %4 = vector.broadcast %3 : vector<1x128xf32> to vector<64x128xf32>
    %5 = arith.addf %2, %4 : vector<64x128xf32>
    %cst_5 = arith.constant 0.000000e+00 : f32
    %6 = vector.broadcast %cst_5 : f32 to vector<64x128xf32>
    %7 = arith.maximumf %5, %6 : vector<64x128xf32>
    %8 = arith.truncf %7 : vector<64x128xf32> to vector<64x128xbf16>
    %c0_6 = arith.constant 0 : index
    %c0_7 = arith.constant 0 : index
    %9 = vector.load %arg4[%c0_6, %c0_7] : memref<64x128xbf16, #tpu.memory_space<vmem>>, vector<64x128xbf16>
    tpu.vector_store %arg4[%c0_6, %c0_7], %8 {strides = array<i32>} : memref<64x128xbf16, #tpu.memory_space<vmem>>, vector<64x128xbf16>,
    return
  }
  func.func @transform_0(%arg0: i32) -> (i32, i32) {
    %c0_i32 = arith.constant 0 : i32
    %c0_i32_0 = arith.constant 0 : i32
    return %arg0, %c0_i32 : i32, i32
  }
  func.func @transform_1(%arg0: i32) -> (i32, i32) {
    %c0_i32 = arith.constant 0 : i32
    %c0_i32_0 = arith.constant 0 : i32
    %c0_i32_1 = arith.constant 0 : i32
    return %c0_i32, %c0_i32_0 : i32, i32
  }
  func.func @transform_2(%arg0: i32) -> (i32, i32) {
    %c0_i32 = arith.constant 0 : i32
    %c0_i32_0 = arith.constant 0 : i32
    %c0_i32_1 = arith.constant 0 : i32
    return %c0_i32, %c0_i32_0 : i32, i32
  }
  func.func @transform_3(%arg0: i32) -> (i32, i32) {
    %c0_i32 = arith.constant 0 : i32
    %c0_i32_0 = arith.constant 0 : i32
    return %arg0, %c0_i32 : i32, i32
  }
}

module attributes {stable_mosaic.version = 11 : i64} {
  func.func @_fc_head_kernel(%arg0: i32, %arg1: memref<16x3200xbf16, #tpu.memory_space<vmem>>, %arg2: memref<3200x128xbf16, #tpu.memory_space<vmem>>, %arg3: memref<1x128xf32, #tpu.memory_space<vmem>>, %arg4: memref<128x128xbf16, #tpu.memory_space<vmem>>, %arg5: memref<1x128xf32, #tpu.memory_space<vmem>>, %arg6: memref<16x128xf32, #tpu.memory_space<vmem>>) attributes {dimension_semantics = [#tpu.dimension_semantics<parallel>], iteration_bounds = array<i64: 1>, scalar_prefetch = 0 : i64, scratch_operands = 0 : i64, tpu.core_type = #tpu.core_type<tc>, window_params = [{transform_indices = @transform_0, window_bounds = array<i64: 16, 3200>}, {pipeline_mode = #tpu.pipeline_mode<synchronous>, transform_indices = @transform_1, window_bounds = array<i64: 3200, 128>}, {pipeline_mode = #tpu.pipeline_mode<synchronous>, transform_indices = @transform_2, window_bounds = array<i64: 1, 128>}, {pipeline_mode = #tpu.pipeline_mode<synchronous>, transform_indices = @transform_3, window_bounds = array<i64: 128, 128>}, {pipeline_mode = #tpu.pipeline_mode<synchronous>, transform_indices = @transform_4, window_bounds = array<i64: 1, 128>}, {transform_indices = @transform_5, window_bounds = array<i64: 16, 128>}]} {
    %c0 = arith.constant 0 : index
    %c0_0 = arith.constant 0 : index
    %0 = vector.load %arg1[%c0, %c0_0] : memref<16x3200xbf16, #tpu.memory_space<vmem>>, vector<16x3200xbf16>
    %c0_1 = arith.constant 0 : index
    %c0_2 = arith.constant 0 : index
    %1 = vector.load %arg2[%c0_1, %c0_2] : memref<3200x128xbf16, #tpu.memory_space<vmem>>, vector<3200x128xbf16>
    %cst = arith.constant dense<0.000000e+00> : vector<16x128xf32>
    %2 = tpu.matmul %0, %1, %cst {dimension_numbers = #tpu.dot_dimension_numbers<[1], [0], [0], [1], [0, 0, 1, 1], [], []>} : vector<16x3200xbf16>, vector<3200x128xbf16>, vector<16x128xf32> -> vector<16x128xf32>
    %c0_3 = arith.constant 0 : index
    %c0_4 = arith.constant 0 : index
    %3 = vector.load %arg3[%c0_3, %c0_4] : memref<1x128xf32, #tpu.memory_space<vmem>>, vector<1x128xf32>
    %4 = vector.broadcast %3 : vector<1x128xf32> to vector<16x128xf32>
    %5 = arith.addf %2, %4 : vector<16x128xf32>
    %6 = arith.truncf %5 : vector<16x128xf32> to vector<16x128xbf16>
    %c0_5 = arith.constant 0 : index
    %c0_6 = arith.constant 0 : index
    %7 = vector.load %arg4[%c0_5, %c0_6] : memref<128x128xbf16, #tpu.memory_space<vmem>>, vector<128x128xbf16>
    %cst_7 = arith.constant dense<0.000000e+00> : vector<16x128xf32>
    %8 = tpu.matmul %6, %7, %cst_7 {dimension_numbers = #tpu.dot_dimension_numbers<[1], [0], [0], [1], [0, 0, 1, 1], [], []>} : vector<16x128xbf16>, vector<128x128xbf16>, vector<16x128xf32> -> vector<16x128xf32>
    %c0_8 = arith.constant 0 : index
    %c0_9 = arith.constant 0 : index
    %9 = vector.load %arg5[%c0_8, %c0_9] : memref<1x128xf32, #tpu.memory_space<vmem>>, vector<1x128xf32>
    %10 = vector.broadcast %9 : vector<1x128xf32> to vector<16x128xf32>
    %11 = arith.addf %8, %10 : vector<16x128xf32>
    %c0_10 = arith.constant 0 : index
    %c0_11 = arith.constant 0 : index
    %12 = vector.load %arg6[%c0_10, %c0_11] : memref<16x128xf32, #tpu.memory_space<vmem>>, vector<16x128xf32>
    tpu.vector_store %arg6[%c0_10, %c0_11], %11 {strides = array<i32>} : memref<16x128xf32, #tpu.memory_space<vmem>>, vector<16x128xf32>,
    return
  }
  func.func @transform_0(%arg0: i32) -> (i32, i32) {
    %c0_i32 = arith.constant 0 : i32
    %c0_i32_0 = arith.constant 0 : i32
    return %arg0, %c0_i32 : i32, i32
  }
  func.func @transform_1(%arg0: i32) -> (i32, i32) {
    %c0_i32 = arith.constant 0 : i32
    %c0_i32_0 = arith.constant 0 : i32
    %c0_i32_1 = arith.constant 0 : i32
    return %c0_i32, %c0_i32_0 : i32, i32
  }
  func.func @transform_2(%arg0: i32) -> (i32, i32) {
    %c0_i32 = arith.constant 0 : i32
    %c0_i32_0 = arith.constant 0 : i32
    %c0_i32_1 = arith.constant 0 : i32
    return %c0_i32, %c0_i32_0 : i32, i32
  }
  func.func @transform_3(%arg0: i32) -> (i32, i32) {
    %c0_i32 = arith.constant 0 : i32
    %c0_i32_0 = arith.constant 0 : i32
    %c0_i32_1 = arith.constant 0 : i32
    return %c0_i32, %c0_i32_0 : i32, i32
  }
  func.func @transform_4(%arg0: i32) -> (i32, i32) {
    %c0_i32 = arith.constant 0 : i32
    %c0_i32_0 = arith.constant 0 : i32
    %c0_i32_1 = arith.constant 0 : i32
    return %c0_i32, %c0_i32_0 : i32, i32
  }
  func.func @transform_5(%arg0: i32) -> (i32, i32) {
    %c0_i32 = arith.constant 0 : i32
    %c0_i32_0 = arith.constant 0 : i32
    return %arg0, %c0_i32 : i32, i32
  }
}

</mosaic_0001>

<llo_original>
// kernel: simple_net_forward.3
$region0: #{simple_net_forward.3}
  #allocation0 [shape = 'u32[]', space=smem, size = 0x4, offset = 0x4, fixed_abs, tag = 'smem constant byte address 0x4 - core index']
  #allocation1 [shape = 'u32[144,128]{1,0:T(1,128)}', space=vmem, size = 0x12000, scoped, tag = 'internal scratch']
  %s0 = inlined_call_operand.vmem [shape: bf16[352,16], index: 0, kind: input, shape index: {}]
  %s1 = inlined_call_operand.vmem [shape: bf16[16,256], index: 1, kind: input, shape index: {}]
  %s2 = inlined_call_operand.vmem [shape: f32[1,256], index: 2, kind: input, shape index: {}]
  %s3 = inlined_call_operand.vmem [shape: bf16[352,256], index: 3, kind: output, shape index: {}]
  %s4 = sld [smem:[#allocation0]]
  $region22: #{simple_net_forward.3} parent=0
    _
  %s6 = ssub.s32 1, %s4
  %s7 = scalar_select 0, %s6, %s4
  // Predicated region
  $region2: #{simple_net_forward.3} parent=0 // pred_check
    _
  $region3: #{simple_net_forward.3} parent=0 // pred_check_branch
    %9 = sbr.rel (0) target = $region5
  $region4: #{simple_net_forward.3} parent=0 // pred_region
    _
  $region5: #{simple_net_forward.3} parent=0 // pred_fallthru
    _
  // Predicated region
  $region6: #{simple_net_forward.3} parent=0 // pred_check
    _
  $region7: #{simple_net_forward.3} parent=0 // pred_check_branch
    %11 = sbr.rel (0) target = $region9
  $region8: #{simple_net_forward.3} parent=0 // pred_region
    _
  $region9: #{simple_net_forward.3} parent=0 // pred_fallthru
    _
  // Predicated region
  $region10: #{simple_net_forward.3} parent=0 // pred_check
    _
  $region11: #{simple_net_forward.3} parent=0 // pred_check_branch
    %13 = sbr.rel (0) target = $region13
  $region12: #{simple_net_forward.3} parent=0 // pred_region
    _
  $region13: #{simple_net_forward.3} parent=0 // pred_fallthru
    _
  %v15 = vld [vmem:[%s0] sm:$0xf]
  %v16 = vld [vmem:[%s0 + $0x4] sm:$0xf]
  %v17 = vld [vmem:[%s0 + $0x8] sm:$0xf]
  %v18 = vld [vmem:[%s0 + $0xc] sm:$0xf]
  %v19 = vld [vmem:[%s0 + $0x10] sm:$0xf]
  %v20 = vld [vmem:[%s0 + $0x14] sm:$0xf]
  %v21 = vld [vmem:[%s0 + $0x18] sm:$0xf]
  %v22 = vld [vmem:[%s0 + $0x1c] sm:$0xf]
  %v23 = vld [vmem:[%s0 + $0x20] sm:$0xf]
  %v24 = vld [vmem:[%s0 + $0x24] sm:$0xf]
  %v25 = vld [vmem:[%s0 + $0x28] sm:$0xf]
  %v26 = vld [vmem:[%s0 + $0x2c] sm:$0xf]
  %v27 = vld [vmem:[%s0 + $0x30] sm:$0xf]
  %v28 = vld [vmem:[%s0 + $0x34] sm:$0xf]
  %v29 = vld [vmem:[%s0 + $0x38] sm:$0xf]
  %v30 = vld [vmem:[%s0 + $0x3c] sm:$0xf]
  %v31 = vld [vmem:[%s0 + $0x40] sm:$0xf]
  %v32 = vld [vmem:[%s0 + $0x44] sm:$0xf]
  %v33 = vld [vmem:[%s0 + $0x48] sm:$0xf]
  %v34 = vld [vmem:[%s0 + $0x4c] sm:$0xf]
  %v35 = vld [vmem:[%s0 + $0x50] sm:$0xf]
  %v36 = vld [vmem:[%s0 + $0x54] sm:$0xf]
  %v37 = vld [vmem:[%s0 + $0x58] sm:$0xf]
  %v38 = vld [vmem:[%s0 + $0x5c] sm:$0xf]
  %v39 = vld [vmem:[%s0 + $0x60] sm:$0xf]
  %v40 = vld [vmem:[%s0 + $0x64] sm:$0xf]
  %v41 = vld [vmem:[%s0 + $0x68] sm:$0xf]
  %v42 = vld [vmem:[%s0 + $0x6c] sm:$0xf]
  %v43 = vld [vmem:[%s0 + $0x70] sm:$0xf]
  %v44 = vld [vmem:[%s0 + $0x74] sm:$0xf]
  %v45 = vld [vmem:[%s0 + $0x78] sm:$0xf]
  %v46 = vld [vmem:[%s0 + $0x7c] sm:$0xf]
  %v47 = vld [vmem:[%s0 + $0x80] sm:$0xf]
  %v48 = vld [vmem:[%s0 + $0x84] sm:$0xf]
  %v49 = vld [vmem:[%s0 + $0x88] sm:$0xf]
  %v50 = vld [vmem:[%s0 + $0x8c] sm:$0xf]
  %v51 = vld [vmem:[%s0 + $0x90] sm:$0xf]
  %v52 = vld [vmem:[%s0 + $0x94] sm:$0xf]
  %v53 = vld [vmem:[%s0 + $0x98] sm:$0xf]
  %v54 = vld [vmem:[%s0 + $0x9c] sm:$0xf]
  %v55 = vld [vmem:[%s0 + $0xa0] sm:$0xf]
  %v56 = vld [vmem:[%s0 + $0xa4] sm:$0xf]
  %v57 = vld [vmem:[%s0 + $0xa8] sm:$0xf]
  %v58 = vld [vmem:[%s0 + $0xac] sm:$0xf]
  %v59 = vld [vmem:[%s1] sm:$0xff]
  %v60 = vld [vmem:[%s1 + $0x8] sm:$0xff]
  %v61 = vld [vmem:[%s2] sm:$0x3]
  %v63 = vlaneseq
  %v64 = vshrl.u32 %v63, 7
  %v65 = vsub.s32 0, %v64
  %v66 = vrot.slane %v61, %v65
  %v67 = vlaneseq
  %v68 = vshrl.u32 %v67, 7
  %v69 = vsub.s32 1, %v68
  %v70 = vrot.slane %v61, %v69
  %v117 = vunpack.c.l.b16 %v15
  %v118 = vunpack.c.l.b16 %v16
  %v119 = vunpack.c.l.b16 %v17
  %v120 = vunpack.c.l.b16 %v18
  %v121 = vunpack.c.l.b16 %v19
  %v122 = vunpack.c.l.b16 %v20
  %v123 = vunpack.c.l.b16 %v21
  %v124 = vunpack.c.l.b16 %v22
  %v125 = vunpack.c.l.b16 %v23
  %v126 = vunpack.c.l.b16 %v24
  %v127 = vunpack.c.l.b16 %v25
  %v128 = vunpack.c.l.b16 %v26
  %v129 = vunpack.c.l.b16 %v27
  %v130 = vunpack.c.l.b16 %v28
  %v131 = vunpack.c.l.b16 %v29
  %v132 = vunpack.c.l.b16 %v30
  %v133 = vunpack.c.l.b16 %v31
  %v134 = vunpack.c.l.b16 %v32
  %v135 = vunpack.c.l.b16 %v33
  %v136 = vunpack.c.l.b16 %v34
  %v137 = vunpack.c.l.b16 %v35
  %v138 = vunpack.c.l.b16 %v36
  %v139 = vunpack.c.l.b16 %v37
  %v140 = vunpack.c.l.b16 %v38
  %v141 = vunpack.c.l.b16 %v39
  %v142 = vunpack.c.l.b16 %v40
  %v143 = vunpack.c.l.b16 %v41
  %v144 = vunpack.c.l.b16 %v42
  %v145 = vunpack.c.l.b16 %v43
  %v146 = vunpack.c.l.b16 %v44
  %v147 = vunpack.c.l.b16 %v45
  %v148 = vunpack.c.l.b16 %v46
  %v149 = vunpack.c.l.b16 %v47
  %v150 = vunpack.c.l.b16 %v48
  %v151 = vunpack.c.l.b16 %v49
  %v152 = vunpack.c.l.b16 %v50
  %v153 = vunpack.c.l.b16 %v51
  %v154 = vunpack.c.l.b16 %v52
  %v155 = vunpack.c.l.b16 %v53
  %v156 = vunpack.c.l.b16 %v54
  %v157 = vunpack.c.l.b16 %v55
  %v158 = vunpack.c.l.b16 %v56
  %v159 = vunpack.c.l.b16 %v57
  %v160 = vunpack.c.l.b16 %v58
  %v161 = vpack.c.b16 %v118, %v117
  %v162 = vpack.c.b16 %v120, %v119
  %v163 = vpack.c.b16 %v122, %v121
  %v164 = vpack.c.b16 %v124, %v123
  %v165 = vpack.c.b16 %v126, %v125
  %v166 = vpack.c.b16 %v128, %v127
  %v167 = vpack.c.b16 %v130, %v129
  %v168 = vpack.c.b16 %v132, %v131
  %v169 = vpack.c.b16 %v134, %v133
  %v170 = vpack.c.b16 %v136, %v135
  %v171 = vpack.c.b16 %v138, %v137
  %v172 = vpack.c.b16 %v140, %v139
  %v173 = vpack.c.b16 %v142, %v141
  %v174 = vpack.c.b16 %v144, %v143
  %v175 = vpack.c.b16 %v146, %v145
  %v176 = vpack.c.b16 %v148, %v147
  %v177 = vpack.c.b16 %v150, %v149
  %v178 = vpack.c.b16 %v152, %v151
  %v179 = vpack.c.b16 %v154, %v153
  %v180 = vpack.c.b16 %v156, %v155
  %v181 = vpack.c.b16 %v158, %v157
  %v182 = vpack.c.b16 %v160, %v159
  %v185 = vunpack.c.l.b16 %v59
  %v186 = vunpack.c.h.b16 %v59
  %v187 = vunpack.c.l.b16 %v60
  %v188 = vunpack.c.h.b16 %v60
  %v189 = vpack.c.b16 %v187, %v185
  %v190 = vpack.c.b16 %v188, %v186
  %vm193 = vcmask 130048
  %v195 = vsel %vm193, %v161, 0
  %v198 = vsel %vm193, %v162, 0
  %v201 = vsel %vm193, %v163, 0
  %v204 = vsel %vm193, %v164, 0
  %v207 = vsel %vm193, %v165, 0
  %v210 = vsel %vm193, %v166, 0
  %v213 = vsel %vm193, %v167, 0
  %v216 = vsel %vm193, %v168, 0
  %v219 = vsel %vm193, %v169, 0
  %v222 = vsel %vm193, %v170, 0
  %v225 = vsel %vm193, %v171, 0
  %v228 = vsel %vm193, %v172, 0
  %v231 = vsel %vm193, %v173, 0
  %v234 = vsel %vm193, %v174, 0
  %v237 = vsel %vm193, %v175, 0
  %v240 = vsel %vm193, %v176, 0
  %v243 = vsel %vm193, %v177, 0
  %v246 = vsel %vm193, %v178, 0
  %v249 = vsel %vm193, %v179, 0
  %v252 = vsel %vm193, %v180, 0
  %v255 = vsel %vm193, %v181, 0
  %v258 = vsel %vm193, %v182, 0
  %260 = vmatprep.subr.bf16.mxu0 %v190
  %261 = vmatpush1.bf16.msra.mxu0 %v189
  %262 = vmatprep.subr.bf16.mxu0 0
  %263 = vmatpush1.bf16.msra.mxu0 0
  %264 = vmatprep.subr.bf16.mxu0 0
  %265 = vmatpush1.bf16.msra.mxu0 0
  %266 = vmatprep.subr.bf16.mxu0 0
  %267 = vmatpush1.bf16.msra.mxu0 0
  %268 = vmatprep.subr.bf16.mxu0 0
  %269 = vmatpush1.bf16.msra.mxu0 0
  %270 = vmatprep.subr.bf16.mxu0 0
  %271 = vmatpush1.bf16.msra.mxu0 0
  %272 = vmatprep.subr.bf16.mxu0 0
  %273 = vmatpush1.bf16.msra.mxu0 0
  %274 = vmatprep.subr.bf16.mxu0 0
  %275 = vmatpush1.bf16.msra.mxu0 0
  %276 = vmatprep.subr.bf16.mxu0 0
  %277 = vmatpush1.bf16.msra.mxu0 0
  %278 = vmatprep.subr.bf16.mxu0 0
  %279 = vmatpush1.bf16.msra.mxu0 0
  %280 = vmatprep.subr.bf16.mxu0 0
  %281 = vmatpush1.bf16.msra.mxu0 0
  %282 = vmatprep.subr.bf16.mxu0 0
  %283 = vmatpush1.bf16.msra.mxu0 0
  %284 = vmatprep.subr.bf16.mxu0 0
  %285 = vmatpush1.bf16.msra.mxu0 0
  %286 = vmatprep.subr.bf16.mxu0 0
  %287 = vmatpush1.bf16.msra.mxu0 0
  %288 = vmatprep.subr.bf16.mxu0 0
  %289 = vmatpush1.bf16.msra.mxu0 0
  %290 = vmatprep.subr.bf16.mxu0 0
  %291 = vmatpush1.bf16.msra.mxu0 0
  %292 = vmatprep.mubr.bf16.mxu0 0
  %293 = vmatmul.mubr.bf16.gmra.mrb[0].mxu0 %v195
  %v294 = vpop.f32.mrb[0].mxu0
  %v295 = vadd.f32 %v66, %v294
  %v296 = vpop.f32.mrb[0].mxu0
  %v297 = vadd.f32 %v70, %v296
  %v298 = vpop.f32.mrb[0].mxu0
  %v299 = vadd.f32 %v66, %v298
  %v300 = vpop.f32.mrb[0].mxu0
  %v301 = vadd.f32 %v70, %v300
  %302 = vmatprep.mubr.bf16.mxu0 0
  %303 = vmatmul.mubr.bf16.gmra.mrb[0].mxu0 %v198
  %v304 = vpop.f32.mrb[0].mxu0
  %v305 = vadd.f32 %v66, %v304
  %v306 = vpop.f32.mrb[0].mxu0
  %v307 = vadd.f32 %v70, %v306
  %v308 = vpop.f32.mrb[0].mxu0
  %v309 = vadd.f32 %v66, %v308
  %v310 = vpop.f32.mrb[0].mxu0
  %v311 = vadd.f32 %v70, %v310
  %312 = vmatprep.mubr.bf16.mxu0 0
  %313 = vmatmul.mubr.bf16.gmra.mrb[0].mxu0 %v201
  %v314 = vpop.f32.mrb[0].mxu0
  %v315 = vadd.f32 %v66, %v314
  %v316 = vpop.f32.mrb[0].mxu0
  %v317 = vadd.f32 %v70, %v316
  %v318 = vpop.f32.mrb[0].mxu0
  %v319 = vadd.f32 %v66, %v318
  %v320 = vpop.f32.mrb[0].mxu0
  %v321 = vadd.f32 %v70, %v320
  %322 = vmatprep.mubr.bf16.mxu0 0
  %323 = vmatmul.mubr.bf16.gmra.mrb[0].mxu0 %v204
  %v324 = vpop.f32.mrb[0].mxu0
  %v325 = vadd.f32 %v66, %v324
  %v326 = vpop.f32.mrb[0].mxu0
  %v327 = vadd.f32 %v70, %v326
  %v328 = vpop.f32.mrb[0].mxu0
  %v329 = vadd.f32 %v66, %v328
  %v330 = vpop.f32.mrb[0].mxu0
  %v331 = vadd.f32 %v70, %v330
  %332 = vmatprep.mubr.bf16.mxu0 0
  %333 = vmatmul.mubr.bf16.gmra.mrb[0].mxu0 %v207
  %v334 = vpop.f32.mrb[0].mxu0
  %v335 = vadd.f32 %v66, %v334
  %v336 = vpop.f32.mrb[0].mxu0
  %v337 = vadd.f32 %v70, %v336
  %v338 = vpop.f32.mrb[0].mxu0
  %v339 = vadd.f32 %v66, %v338
  %v340 = vpop.f32.mrb[0].mxu0
  %v341 = vadd.f32 %v70, %v340
  %342 = vmatprep.mubr.bf16.mxu0 0
  %343 = vmatmul.mubr.bf16.gmra.mrb[0].mxu0 %v210
  %v344 = vpop.f32.mrb[0].mxu0
  %v345 = vadd.f32 %v66, %v344
  %v346 = vpop.f32.mrb[0].mxu0
  %v347 = vadd.f32 %v70, %v346
  %v348 = vpop.f32.mrb[0].mxu0
  %v349 = vadd.f32 %v66, %v348
  %v350 = vpop.f32.mrb[0].mxu0
  %v351 = vadd.f32 %v70, %v350
  %352 = vmatprep.mubr.bf16.mxu0 0
  %353 = vmatmul.mubr.bf16.gmra.mrb[0].mxu0 %v213
  %v354 = vpop.f32.mrb[0].mxu0
  %v355 = vadd.f32 %v66, %v354
  %v356 = vpop.f32.mrb[0].mxu0
  %v357 = vadd.f32 %v70, %v356
  %v358 = vpop.f32.mrb[0].mxu0
  %v359 = vadd.f32 %v66, %v358
  %v360 = vpop.f32.mrb[0].mxu0
  %v361 = vadd.f32 %v70, %v360
  %362 = vmatprep.mubr.bf16.mxu0 0
  %363 = vmatmul.mubr.bf16.gmra.mrb[0].mxu0 %v216
  %v364 = vpop.f32.mrb[0].mxu0
  %v365 = vadd.f32 %v66, %v364
  %v366 = vpop.f32.mrb[0].mxu0
  %v367 = vadd.f32 %v70, %v366
  %v368 = vpop.f32.mrb[0].mxu0
  %v369 = vadd.f32 %v66, %v368
  %v370 = vpop.f32.mrb[0].mxu0
  %v371 = vadd.f32 %v70, %v370
  %372 = vmatprep.mubr.bf16.mxu0 0
  %373 = vmatmul.mubr.bf16.gmra.mrb[0].mxu0 %v219
  %v374 = vpop.f32.mrb[0].mxu0
  %v375 = vadd.f32 %v66, %v374
  %v376 = vpop.f32.mrb[0].mxu0
  %v377 = vadd.f32 %v70, %v376
  %v378 = vpop.f32.mrb[0].mxu0
  %v379 = vadd.f32 %v66, %v378
  %v380 = vpop.f32.mrb[0].mxu0
  %v381 = vadd.f32 %v70, %v380
  %382 = vmatprep.mubr.bf16.mxu0 0
  %383 = vmatmul.mubr.bf16.gmra.mrb[0].mxu0 %v222
  %v384 = vpop.f32.mrb[0].mxu0
  %v385 = vadd.f32 %v66, %v384
  %v386 = vpop.f32.mrb[0].mxu0
  %v387 = vadd.f32 %v70, %v386
  %v388 = vpop.f32.mrb[0].mxu0
  %v389 = vadd.f32 %v66, %v388
  %v390 = vpop.f32.mrb[0].mxu0
  %v391 = vadd.f32 %v70, %v390
  %392 = vmatprep.mubr.bf16.mxu0 0
  %393 = vmatmul.mubr.bf16.gmra.mrb[0].mxu0 %v225
  %v394 = vpop.f32.mrb[0].mxu0
  %v395 = vadd.f32 %v66, %v394
  %v396 = vpop.f32.mrb[0].mxu0
  %v397 = vadd.f32 %v70, %v396
  %v398 = vpop.f32.mrb[0].mxu0
  %v399 = vadd.f32 %v66, %v398
  %v400 = vpop.f32.mrb[0].mxu0
  %v401 = vadd.f32 %v70, %v400
  %402 = vmatprep.mubr.bf16.mxu0 0
  %403 = vmatmul.mubr.bf16.gmra.mrb[0].mxu0 %v228
  %v404 = vpop.f32.mrb[0].mxu0
  %v405 = vadd.f32 %v66, %v404
  %v406 = vpop.f32.mrb[0].mxu0
  %v407 = vadd.f32 %v70, %v406
  %v408 = vpop.f32.mrb[0].mxu0
  %v409 = vadd.f32 %v66, %v408
  %v410 = vpop.f32.mrb[0].mxu0
  %v411 = vadd.f32 %v70, %v410
  %412 = vmatprep.mubr.bf16.mxu0 0
  %413 = vmatmul.mubr.bf16.gmra.mrb[0].mxu0 %v231
  %v414 = vpop.f32.mrb[0].mxu0
  %v415 = vadd.f32 %v66, %v414
  %v416 = vpop.f32.mrb[0].mxu0
  %v417 = vadd.f32 %v70, %v416
  %v418 = vpop.f32.mrb[0].mxu0
  %v419 = vadd.f32 %v66, %v418
  %v420 = vpop.f32.mrb[0].mxu0
  %v421 = vadd.f32 %v70, %v420
  %422 = vmatprep.mubr.bf16.mxu0 0
  %423 = vmatmul.mubr.bf16.gmra.mrb[0].mxu0 %v234
  %v424 = vpop.f32.mrb[0].mxu0
  %v425 = vadd.f32 %v66, %v424
  %v426 = vpop.f32.mrb[0].mxu0
  %v427 = vadd.f32 %v70, %v426
  %v428 = vpop.f32.mrb[0].mxu0
  %v429 = vadd.f32 %v66, %v428
  %v430 = vpop.f32.mrb[0].mxu0
  %v431 = vadd.f32 %v70, %v430
  %432 = vmatprep.mubr.bf16.mxu0 0
  %433 = vmatmul.mubr.bf16.gmra.mrb[0].mxu0 %v237
  %v434 = vpop.f32.mrb[0].mxu0
  %v435 = vadd.f32 %v66, %v434
  %v436 = vpop.f32.mrb[0].mxu0
  %v437 = vadd.f32 %v70, %v436
  %v438 = vpop.f32.mrb[0].mxu0
  %v439 = vadd.f32 %v66, %v438
  %v440 = vpop.f32.mrb[0].mxu0
  %v441 = vadd.f32 %v70, %v440
  %442 = vmatprep.mubr.bf16.mxu0 0
  %443 = vmatmul.mubr.bf16.gmra.mrb[0].mxu0 %v240
  %v444 = vpop.f32.mrb[0].mxu0
  %v445 = vadd.f32 %v66, %v444
  %v446 = vpop.f32.mrb[0].mxu0
  %v447 = vadd.f32 %v70, %v446
  %v448 = vpop.f32.mrb[0].mxu0
  %v449 = vadd.f32 %v66, %v448
  %v450 = vpop.f32.mrb[0].mxu0
  %v451 = vadd.f32 %v70, %v450
  %452 = vmatprep.mubr.bf16.mxu0 0
  %453 = vmatmul.mubr.bf16.gmra.mrb[0].mxu0 %v243
  %v454 = vpop.f32.mrb[0].mxu0
  %v455 = vadd.f32 %v66, %v454
  %v456 = vpop.f32.mrb[0].mxu0
  %v457 = vadd.f32 %v70, %v456
  %v458 = vpop.f32.mrb[0].mxu0
  %v459 = vadd.f32 %v66, %v458
  %v460 = vpop.f32.mrb[0].mxu0
  %v461 = vadd.f32 %v70, %v460
  %462 = vmatprep.mubr.bf16.mxu0 0
  %463 = vmatmul.mubr.bf16.gmra.mrb[0].mxu0 %v246
  %v464 = vpop.f32.mrb[0].mxu0
  %v465 = vadd.f32 %v66, %v464
  %v466 = vpop.f32.mrb[0].mxu0
  %v467 = vadd.f32 %v70, %v466
  %v468 = vpop.f32.mrb[0].mxu0
  %v469 = vadd.f32 %v66, %v468
  %v470 = vpop.f32.mrb[0].mxu0
  %v471 = vadd.f32 %v70, %v470
  %472 = vmatprep.mubr.bf16.mxu0 0
  %473 = vmatmul.mubr.bf16.gmra.mrb[0].mxu0 %v249
  %v474 = vpop.f32.mrb[0].mxu0
  %v475 = vadd.f32 %v66, %v474
  %v476 = vpop.f32.mrb[0].mxu0
  %v477 = vadd.f32 %v70, %v476
  %v478 = vpop.f32.mrb[0].mxu0
  %v479 = vadd.f32 %v66, %v478
  %v480 = vpop.f32.mrb[0].mxu0
  %v481 = vadd.f32 %v70, %v480
  %482 = vmatprep.mubr.bf16.mxu0 0
  %483 = vmatmul.mubr.bf16.gmra.mrb[0].mxu0 %v252
  %v484 = vpop.f32.mrb[0].mxu0
  %v485 = vadd.f32 %v66, %v484
  %v486 = vpop.f32.mrb[0].mxu0
  %v487 = vadd.f32 %v70, %v486
  %v488 = vpop.f32.mrb[0].mxu0
  %v489 = vadd.f32 %v66, %v488
  %v490 = vpop.f32.mrb[0].mxu0
  %v491 = vadd.f32 %v70, %v490
  %492 = vmatprep.mubr.bf16.mxu0 0
  %493 = vmatmul.mubr.bf16.gmra.mrb[0].mxu0 %v255
  %v494 = vpop.f32.mrb[0].mxu0
  %v495 = vadd.f32 %v66, %v494
  %v496 = vpop.f32.mrb[0].mxu0
  %v497 = vadd.f32 %v70, %v496
  %v498 = vpop.f32.mrb[0].mxu0
  %v499 = vadd.f32 %v66, %v498
  %v500 = vpop.f32.mrb[0].mxu0
  %v501 = vadd.f32 %v70, %v500
  %502 = vmatprep.mubr.bf16.mxu0 0
  %503 = vmatmul.mubr.bf16.gmra.mrb[0].mxu0 %v258
  %v504 = vpop.f32.mrb[0].mxu0
  %v505 = vadd.f32 %v66, %v504
  %v506 = vpop.f32.mrb[0].mxu0
  %v507 = vadd.f32 %v70, %v506
  %v508 = vpop.f32.mrb[0].mxu0
  %v509 = vadd.f32 %v66, %v508
  %v510 = vpop.f32.mrb[0].mxu0
  %v511 = vadd.f32 %v70, %v510
  %512 = vdwg.mxu0
  %v513 = vmax.f32 %v295, 0.0
  %v514 = vmax.f32 %v297, 0.0
  %v515 = vmax.f32 %v299, 0.0
  %v516 = vmax.f32 %v301, 0.0
  %v517 = vmax.f32 %v305, 0.0
  %v518 = vmax.f32 %v307, 0.0
  %v519 = vmax.f32 %v309, 0.0
  %v520 = vmax.f32 %v311, 0.0
  %v521 = vmax.f32 %v315, 0.0
  %v522 = vmax.f32 %v317, 0.0
  %v523 = vmax.f32 %v319, 0.0
  %v524 = vmax.f32 %v321, 0.0
  %v525 = vmax.f32 %v325, 0.0
  %v526 = vmax.f32 %v327, 0.0
  %v527 = vmax.f32 %v329, 0.0
  %v528 = vmax.f32 %v331, 0.0
  %v529 = vmax.f32 %v335, 0.0
  %v530 = vmax.f32 %v337, 0.0
  %v531 = vmax.f32 %v339, 0.0
  %v532 = vmax.f32 %v341, 0.0
  %v533 = vmax.f32 %v345, 0.0
  %v534 = vmax.f32 %v347, 0.0
  %v535 = vmax.f32 %v349, 0.0
  %v536 = vmax.f32 %v351, 0.0
  %v537 = vmax.f32 %v355, 0.0
  %v538 = vmax.f32 %v357, 0.0
  %v539 = vmax.f32 %v359, 0.0
  %v540 = vmax.f32 %v361, 0.0
  %v541 = vmax.f32 %v365, 0.0
  %v542 = vmax.f32 %v367, 0.0
  %v543 = vmax.f32 %v369, 0.0
  %v544 = vmax.f32 %v371, 0.0
  %v545 = vmax.f32 %v375, 0.0
  %v546 = vmax.f32 %v377, 0.0
  %v547 = vmax.f32 %v379, 0.0
  %v548 = vmax.f32 %v381, 0.0
  %v549 = vmax.f32 %v385, 0.0
  %v550 = vmax.f32 %v387, 0.0
  %v551 = vmax.f32 %v389, 0.0
  %v552 = vmax.f32 %v391, 0.0
  %v553 = vmax.f32 %v395, 0.0
  %v554 = vmax.f32 %v397, 0.0
  %v555 = vmax.f32 %v399, 0.0
  %v556 = vmax.f32 %v401, 0.0
  %v557 = vmax.f32 %v405, 0.0
  %v558 = vmax.f32 %v407, 0.0
  %v559 = vmax.f32 %v409, 0.0
  %v560 = vmax.f32 %v411, 0.0
  %v561 = vmax.f32 %v415, 0.0
  %v562 = vmax.f32 %v417, 0.0
  %v563 = vmax.f32 %v419, 0.0
  %v564 = vmax.f32 %v421, 0.0
  %v565 = vmax.f32 %v425, 0.0
  %v566 = vmax.f32 %v427, 0.0
  %v567 = vmax.f32 %v429, 0.0
  %v568 = vmax.f32 %v431, 0.0
  %v569 = vmax.f32 %v435, 0.0
  %v570 = vmax.f32 %v437, 0.0
  %v571 = vmax.f32 %v439, 0.0
  %v572 = vmax.f32 %v441, 0.0
  %v573 = vmax.f32 %v445, 0.0
  %v574 = vmax.f32 %v447, 0.0
  %v575 = vmax.f32 %v449, 0.0
  %v576 = vmax.f32 %v451, 0.0
  %v577 = vmax.f32 %v455, 0.0
  %v578 = vmax.f32 %v457, 0.0
  %v579 = vmax.f32 %v459, 0.0
  %v580 = vmax.f32 %v461, 0.0
  %v581 = vmax.f32 %v465, 0.0
  %v582 = vmax.f32 %v467, 0.0
  %v583 = vmax.f32 %v469, 0.0
  %v584 = vmax.f32 %v471, 0.0
  %v585 = vmax.f32 %v475, 0.0
  %v586 = vmax.f32 %v477, 0.0
  %v587 = vmax.f32 %v479, 0.0
  %v588 = vmax.f32 %v481, 0.0
  %v589 = vmax.f32 %v485, 0.0
  %v590 = vmax.f32 %v487, 0.0
  %v591 = vmax.f32 %v489, 0.0
  %v592 = vmax.f32 %v491, 0.0
  %v593 = vmax.f32 %v495, 0.0
  %v594 = vmax.f32 %v497, 0.0
  %v595 = vmax.f32 %v499, 0.0
  %v596 = vmax.f32 %v501, 0.0
  %v597 = vmax.f32 %v505, 0.0
  %v598 = vmax.f32 %v507, 0.0
  %v599 = vmax.f32 %v509, 0.0
  %v600 = vmax.f32 %v511, 0.0
  %v601 = vpack.c.bf16 %v515, %v513
  %v602 = vpack.c.bf16 %v516, %v514
  %v603 = vpack.c.bf16 %v519, %v517
  %v604 = vpack.c.bf16 %v520, %v518
  %v605 = vpack.c.bf16 %v523, %v521
  %v606 = vpack.c.bf16 %v524, %v522
  %v607 = vpack.c.bf16 %v527, %v525
  %v608 = vpack.c.bf16 %v528, %v526
  %v609 = vpack.c.bf16 %v531, %v529
  %v610 = vpack.c.bf16 %v532, %v530
  %v611 = vpack.c.bf16 %v535, %v533
  %v612 = vpack.c.bf16 %v536, %v534
  %v613 = vpack.c.bf16 %v539, %v537
  %v614 = vpack.c.bf16 %v540, %v538
  %v615 = vpack.c.bf16 %v543, %v541
  %v616 = vpack.c.bf16 %v544, %v542
  %v617 = vpack.c.bf16 %v547, %v545
  %v618 = vpack.c.bf16 %v548, %v546
  %v619 = vpack.c.bf16 %v551, %v549
  %v620 = vpack.c.bf16 %v552, %v550
  %v621 = vpack.c.bf16 %v555, %v553
  %v622 = vpack.c.bf16 %v556, %v554
  %v623 = vpack.c.bf16 %v559, %v557
  %v624 = vpack.c.bf16 %v560, %v558
  %v625 = vpack.c.bf16 %v563, %v561
  %v626 = vpack.c.bf16 %v564, %v562
  %v627 = vpack.c.bf16 %v567, %v565
  %v628 = vpack.c.bf16 %v568, %v566
  %v629 = vpack.c.bf16 %v571, %v569
  %v630 = vpack.c.bf16 %v572, %v570
  %v631 = vpack.c.bf16 %v575, %v573
  %v632 = vpack.c.bf16 %v576, %v574
  %v633 = vpack.c.bf16 %v579, %v577
  %v634 = vpack.c.bf16 %v580, %v578
  %v635 = vpack.c.bf16 %v583, %v581
  %v636 = vpack.c.bf16 %v584, %v582
  %v637 = vpack.c.bf16 %v587, %v585
  %v638 = vpack.c.bf16 %v588, %v586
  %v639 = vpack.c.bf16 %v591, %v589
  %v640 = vpack.c.bf16 %v592, %v590
  %v641 = vpack.c.bf16 %v595, %v593
  %v642 = vpack.c.bf16 %v596, %v594
  %v643 = vpack.c.bf16 %v599, %v597
  %v644 = vpack.c.bf16 %v600, %v598
  %v689 = vunpack.c.l.b16 %v601
  %v690 = vunpack.c.l.b16 %v602
  %v691 = vunpack.c.h.b16 %v601
  %v692 = vunpack.c.h.b16 %v602
  %v693 = vunpack.c.l.b16 %v603
  %v694 = vunpack.c.l.b16 %v604
  %v695 = vunpack.c.h.b16 %v603
  %v696 = vunpack.c.h.b16 %v604
  %v697 = vunpack.c.l.b16 %v605
  %v698 = vunpack.c.l.b16 %v606
  %v699 = vunpack.c.h.b16 %v605
  %v700 = vunpack.c.h.b16 %v606
  %v701 = vunpack.c.l.b16 %v607
  %v702 = vunpack.c.l.b16 %v608
  %v703 = vunpack.c.h.b16 %v607
  %v704 = vunpack.c.h.b16 %v608
  %v705 = vunpack.c.l.b16 %v609
  %v706 = vunpack.c.l.b16 %v610
  %v707 = vunpack.c.h.b16 %v609
  %v708 = vunpack.c.h.b16 %v610
  %v709 = vunpack.c.l.b16 %v611
  %v710 = vunpack.c.l.b16 %v612
  %v711 = vunpack.c.h.b16 %v611
  %v712 = vunpack.c.h.b16 %v612
  %v713 = vunpack.c.l.b16 %v613
  %v714 = vunpack.c.l.b16 %v614
  %v715 = vunpack.c.h.b16 %v613
  %v716 = vunpack.c.h.b16 %v614
  %v717 = vunpack.c.l.b16 %v615
  %v718 = vunpack.c.l.b16 %v616
  %v719 = vunpack.c.h.b16 %v615
  %v720 = vunpack.c.h.b16 %v616
  %v721 = vunpack.c.l.b16 %v617
  %v722 = vunpack.c.l.b16 %v618
  %v723 = vunpack.c.h.b16 %v617
  %v724 = vunpack.c.h.b16 %v618
  %v725 = vunpack.c.l.b16 %v619
  %v726 = vunpack.c.l.b16 %v620
  %v727 = vunpack.c.h.b16 %v619
  %v728 = vunpack.c.h.b16 %v620
  %v729 = vunpack.c.l.b16 %v621
  %v730 = vunpack.c.l.b16 %v622
  %v731 = vunpack.c.h.b16 %v621
  %v732 = vunpack.c.h.b16 %v622
  %v733 = vunpack.c.l.b16 %v623
  %v734 = vunpack.c.l.b16 %v624
  %v735 = vunpack.c.h.b16 %v623
  %v736 = vunpack.c.h.b16 %v624
  %v737 = vunpack.c.l.b16 %v625
  %v738 = vunpack.c.l.b16 %v626
  %v739 = vunpack.c.h.b16 %v625
  %v740 = vunpack.c.h.b16 %v626
  %v741 = vunpack.c.l.b16 %v627
  %v742 = vunpack.c.l.b16 %v628
  %v743 = vunpack.c.h.b16 %v627
  %v744 = vunpack.c.h.b16 %v628
  %v745 = vunpack.c.l.b16 %v629
  %v746 = vunpack.c.l.b16 %v630
  %v747 = vunpack.c.h.b16 %v629
  %v748 = vunpack.c.h.b16 %v630
  %v749 = vunpack.c.l.b16 %v631
  %v750 = vunpack.c.l.b16 %v632
  %v751 = vunpack.c.h.b16 %v631
  %v752 = vunpack.c.h.b16 %v632
  %v753 = vunpack.c.l.b16 %v633
  %v754 = vunpack.c.l.b16 %v634
  %v755 = vunpack.c.h.b16 %v633
  %v756 = vunpack.c.h.b16 %v634
  %v757 = vunpack.c.l.b16 %v635
  %v758 = vunpack.c.l.b16 %v636
  %v759 = vunpack.c.h.b16 %v635
  %v760 = vunpack.c.h.b16 %v636
  %v761 = vunpack.c.l.b16 %v637
  %v762 = vunpack.c.l.b16 %v638
  %v763 = vunpack.c.h.b16 %v637
  %v764 = vunpack.c.h.b16 %v638
  %v765 = vunpack.c.l.b16 %v639
  %v766 = vunpack.c.l.b16 %v640
  %v767 = vunpack.c.h.b16 %v639
  %v768 = vunpack.c.h.b16 %v640
  %v769 = vunpack.c.l.b16 %v641
  %v770 = vunpack.c.l.b16 %v642
  %v771 = vunpack.c.h.b16 %v641
  %v772 = vunpack.c.h.b16 %v642
  %v773 = vunpack.c.l.b16 %v643
  %v774 = vunpack.c.l.b16 %v644
  %v775 = vunpack.c.h.b16 %v643
  %v776 = vunpack.c.h.b16 %v644
  %v777 = vpack.c.b16 %v690, %v689
  %v778 = vpack.c.b16 %v692, %v691
  %v779 = vpack.c.b16 %v694, %v693
  %v780 = vpack.c.b16 %v696, %v695
  %v781 = vpack.c.b16 %v698, %v697
  %v782 = vpack.c.b16 %v700, %v699
  %v783 = vpack.c.b16 %v702, %v701
  %v784 = vpack.c.b16 %v704, %v703
  %v785 = vpack.c.b16 %v706, %v705
  %v786 = vpack.c.b16 %v708, %v707
  %v787 = vpack.c.b16 %v710, %v709
  %v788 = vpack.c.b16 %v712, %v711
  %v789 = vpack.c.b16 %v714, %v713
  %v790 = vpack.c.b16 %v716, %v715
  %v791 = vpack.c.b16 %v718, %v717
  %v792 = vpack.c.b16 %v720, %v719
  %v793 = vpack.c.b16 %v722, %v721
  %v794 = vpack.c.b16 %v724, %v723
  %v795 = vpack.c.b16 %v726, %v725
  %v796 = vpack.c.b16 %v728, %v727
  %v797 = vpack.c.b16 %v730, %v729
  %v798 = vpack.c.b16 %v732, %v731
  %v799 = vpack.c.b16 %v734, %v733
  %v800 = vpack.c.b16 %v736, %v735
  %v801 = vpack.c.b16 %v738, %v737
  %v802 = vpack.c.b16 %v740, %v739
  %v803 = vpack.c.b16 %v742, %v741
  %v804 = vpack.c.b16 %v744, %v743
  %v805 = vpack.c.b16 %v746, %v745
  %v806 = vpack.c.b16 %v748, %v747
  %v807 = vpack.c.b16 %v750, %v749
  %v808 = vpack.c.b16 %v752, %v751
  %v809 = vpack.c.b16 %v754, %v753
  %v810 = vpack.c.b16 %v756, %v755
  %v811 = vpack.c.b16 %v758, %v757
  %v812 = vpack.c.b16 %v760, %v759
  %v813 = vpack.c.b16 %v762, %v761
  %v814 = vpack.c.b16 %v764, %v763
  %v815 = vpack.c.b16 %v766, %v765
  %v816 = vpack.c.b16 %v768, %v767
  %v817 = vpack.c.b16 %v770, %v769
  %v818 = vpack.c.b16 %v772, %v771
  %v819 = vpack.c.b16 %v774, %v773
  %v820 = vpack.c.b16 %v776, %v775
  %865 = vst [vmem:[%s3] sm:$0xff] %v777
  %866 = vst [vmem:[%s3 + $0x8] sm:$0xff] %v778
  %867 = vst [vmem:[%s3 + $0x10] sm:$0xff] %v779
  %868 = vst [vmem:[%s3 + $0x18] sm:$0xff] %v780
  %869 = vst [vmem:[%s3 + $0x20] sm:$0xff] %v781
  %870 = vst [vmem:[%s3 + $0x28] sm:$0xff] %v782
  %871 = vst [vmem:[%s3 + $0x30] sm:$0xff] %v783
  %872 = vst [vmem:[%s3 + $0x38] sm:$0xff] %v784
  %873 = vst [vmem:[%s3 + $0x40] sm:$0xff] %v785
  %874 = vst [vmem:[%s3 + $0x48] sm:$0xff] %v786
  %875 = vst [vmem:[%s3 + $0x50] sm:$0xff] %v787
  %876 = vst [vmem:[%s3 + $0x58] sm:$0xff] %v788
  %877 = vst [vmem:[%s3 + $0x60] sm:$0xff] %v789
  %878 = vst [vmem:[%s3 + $0x68] sm:$0xff] %v790
  %879 = vst [vmem:[%s3 + $0x70] sm:$0xff] %v791
  %880 = vst [vmem:[%s3 + $0x78] sm:$0xff] %v792
  %881 = vst [vmem:[%s3 + $0x80] sm:$0xff] %v793
  %882 = vst [vmem:[%s3 + $0x88] sm:$0xff] %v794
  %883 = vst [vmem:[%s3 + $0x90] sm:$0xff] %v795
  %884 = vst [vmem:[%s3 + $0x98] sm:$0xff] %v796
  %885 = vst [vmem:[%s3 + $0xa0] sm:$0xff] %v797
  %886 = vst [vmem:[%s3 + $0xa8] sm:$0xff] %v798
  %887 = vst [vmem:[%s3 + $0xb0] sm:$0xff] %v799
  %888 = vst [vmem:[%s3 + $0xb8] sm:$0xff] %v800
  %889 = vst [vmem:[%s3 + $0xc0] sm:$0xff] %v801
  %890 = vst [vmem:[%s3 + $0xc8] sm:$0xff] %v802
  %891 = vst [vmem:[%s3 + $0xd0] sm:$0xff] %v803
  %892 = vst [vmem:[%s3 + $0xd8] sm:$0xff] %v804
  %893 = vst [vmem:[%s3 + $0xe0] sm:$0xff] %v805
  %894 = vst [vmem:[%s3 + $0xe8] sm:$0xff] %v806
  %895 = vst [vmem:[%s3 + $0xf0] sm:$0xff] %v807
  %896 = vst [vmem:[%s3 + $0xf8] sm:$0xff] %v808
  %897 = vst [vmem:[%s3 + $0x100] sm:$0xff] %v809
  %898 = vst [vmem:[%s3 + $0x108] sm:$0xff] %v810
  %899 = vst [vmem:[%s3 + $0x110] sm:$0xff] %v811
  %900 = vst [vmem:[%s3 + $0x118] sm:$0xff] %v812
  %901 = vst [vmem:[%s3 + $0x120] sm:$0xff] %v813
  %902 = vst [vmem:[%s3 + $0x128] sm:$0xff] %v814
  %903 = vst [vmem:[%s3 + $0x130] sm:$0xff] %v815
  %904 = vst [vmem:[%s3 + $0x138] sm:$0xff] %v816
  %905 = vst [vmem:[%s3 + $0x140] sm:$0xff] %v817
  %906 = vst [vmem:[%s3 + $0x148] sm:$0xff] %v818
  %907 = vst [vmem:[%s3 + $0x150] sm:$0xff] %v819
  %908 = vst [vmem:[%s3 + $0x158] sm:$0xff] %v820
  // Predicated region
  $region14: #{simple_net_forward.3} parent=0 // pred_check
    _
  $region15: #{simple_net_forward.3} parent=0 // pred_check_branch
    %910 = sbr.rel (0) target = $region17
  $region16: #{simple_net_forward.3} parent=0 // pred_region
    _
  $region17: #{simple_net_forward.3} parent=0 // pred_fallthru
    _
  // Predicated region
  $region18: #{simple_net_forward.3} parent=0 // pred_check
    _
  $region19: #{simple_net_forward.3} parent=0 // pred_check_branch
    %912 = sbr.rel (0) target = $region21
  $region20: #{simple_net_forward.3} parent=0 // pred_region
    _
  $region21: #{simple_net_forward.3} parent=0 // pred_fallthru
    _

// kernel: simple_net_forward.4
$region0: #{simple_net_forward.4}
  #allocation0 [shape = 'u32[]', space=smem, size = 0x4, offset = 0x4, fixed_abs, tag = 'smem constant byte address 0x4 - core index']
  #allocation1 [shape = 'u32[144,128]{1,0:T(1,128)}', space=vmem, size = 0x12000, scoped, tag = 'internal scratch']
  %s0 = inlined_call_operand.vmem [shape: bf16[64,4096], index: 0, kind: input, shape index: {}]
  %s1 = inlined_call_operand.vmem [shape: bf16[4096,128], index: 1, kind: input, shape index: {}]
  %s2 = inlined_call_operand.vmem [shape: f32[1,128], index: 2, kind: input, shape index: {}]
  %s3 = inlined_call_operand.vmem [shape: bf16[64,128], index: 3, kind: output, shape index: {}]
  %s4 = sld [smem:[#allocation0]]
  $region22: #{simple_net_forward.4} parent=0
    _
  %s6 = ssub.s32 1, %s4
  %s7 = scalar_select 0, %s6, %s4
  // Predicated region
  $region2: #{simple_net_forward.4} parent=0 // pred_check
    _
  $region3: #{simple_net_forward.4} parent=0 // pred_check_branch
    %9 = sbr.rel (0) target = $region5
  $region4: #{simple_net_forward.4} parent=0 // pred_region
    _
  $region5: #{simple_net_forward.4} parent=0 // pred_fallthru
    _
  // Predicated region
  $region6: #{simple_net_forward.4} parent=0 // pred_check
    _
  $region7: #{simple_net_forward.4} parent=0 // pred_check_branch
    %11 = sbr.rel (0) target = $region9
  $region8: #{simple_net_forward.4} parent=0 // pred_region
    _
  $region9: #{simple_net_forward.4} parent=0 // pred_fallthru
    _
  // Predicated region
  $region10: #{simple_net_forward.4} parent=0 // pred_check
    _
  $region11: #{simple_net_forward.4} parent=0 // pred_check_branch
    %13 = sbr.rel (0) target = $region13
  $region12: #{simple_net_forward.4} parent=0 // pred_region
    _
  $region13: #{simple_net_forward.4} parent=0 // pred_fallthru
    _
  %v15 = vld [vmem:[%s0] sm:$0xff]
  %v16 = vld [vmem:[%s0 + $0x8] sm:$0xff]
  %v17 = vld [vmem:[%s0 + $0x10] sm:$0xff]
  %v18 = vld [vmem:[%s0 + $0x18] sm:$0xff]
  %v19 = vld [vmem:[%s0 + $0x20] sm:$0xff]
  %v20 = vld [vmem:[%s0 + $0x28] sm:$0xff]
  %v21 = vld [vmem:[%s0 + $0x30] sm:$0xff]
  %v22 = vld [vmem:[%s0 + $0x38] sm:$0xff]
  %v23 = vld [vmem:[%s0 + $0x40] sm:$0xff]
  %v24 = vld [vmem:[%s0 + $0x48] sm:$0xff]
  %v25 = vld [vmem:[%s0 + $0x50] sm:$0xff]
  %v26 = vld [vmem:[%s0 + $0x58] sm:$0xff]
  %v27 = vld [vmem:[%s0 + $0x60] sm:$0xff]
  %v28 = vld [vmem:[%s0 + $0x68] sm:$0xff]
  %v29 = vld [vmem:[%s0 + $0x70] sm:$0xff]
  %v30 = vld [vmem:[%s0 + $0x78] sm:$0xff]
  %v31 = vld [vmem:[%s0 + $0x80] sm:$0xff]
  %v32 = vld [vmem:[%s0 + $0x88] sm:$0xff]
  %v33 = vld [vmem:[%s0 + $0x90] sm:$0xff]
  %v34 = vld [vmem:[%s0 + $0x98] sm:$0xff]
  %v35 = vld [vmem:[%s0 + $0xa0] sm:$0xff]
  %v36 = vld [vmem:[%s0 + $0xa8] sm:$0xff]
  %v37 = vld [vmem:[%s0 + $0xb0] sm:$0xff]
  %v38 = vld [vmem:[%s0 + $0xb8] sm:$0xff]
  %v39 = vld [vmem:[%s0 + $0xc0] sm:$0xff]
  %v40 = vld [vmem:[%s0 + $0xc8] sm:$0xff]
  %v41 = vld [vmem:[%s0 + $0xd0] sm:$0xff]
  %v42 = vld [vmem:[%s0 + $0xd8] sm:$0xff]
  %v43 = vld [vmem:[%s0 + $0xe0] sm:$0xff]
  %v44 = vld [vmem:[%s0 + $0xe8] sm:$0xff]
  %v45 = vld [vmem:[%s0 + $0xf0] sm:$0xff]
  %v46 = vld [vmem:[%s0 + $0xf8] sm:$0xff]
  %v47 = vld [vmem:[%s0 + $0x100] sm:$0xff]
  %v48 = vld [vmem:[%s0 + $0x108] sm:$0xff]
  %v49 = vld [vmem:[%s0 + $0x110] sm:$0xff]
  %v50 = vld [vmem:[%s0 + $0x118] sm:$0xff]
  %v51 = vld [vmem:[%s0 + $0x120] sm:$0xff]
  %v52 = vld [vmem:[%s0 + $0x128] sm:$0xff]
  %v53 = vld [vmem:[%s0 + $0x130] sm:$0xff]
  %v54 = vld [vmem:[%s0 + $0x138] sm:$0xff]
  %v55 = vld [vmem:[%s0 + $0x140] sm:$0xff]
  %v56 = vld [vmem:[%s0 + $0x148] sm:$0xff]
  %v57 = vld [vmem:[%s0 + $0x150] sm:$0xff]
  %v58 = vld [vmem:[%s0 + $0x158] sm:$0xff]
  %v59 = vld [vmem:[%s0 + $0x160] sm:$0xff]
  %v60 = vld [vmem:[%s0 + $0x168] sm:$0xff]
  %v61 = vld [vmem:[%s0 + $0x170] sm:$0xff]
  %v62 = vld [vmem:[%s0 + $0x178] sm:$0xff]
  %v63 = vld [vmem:[%s0 + $0x180] sm:$0xff]
  %v64 = vld [vmem:[%s0 + $0x188] sm:$0xff]
  %v65 = vld [vmem:[%s0 + $0x190] sm:$0xff]
  %v66 = vld [vmem:[%s0 + $0x198] sm:$0xff]
  %v67 = vld [vmem:[%s0 + $0x1a0] sm:$0xff]
  %v68 = vld [vmem:[%s0 + $0x1a8] sm:$0xff]
  %v69 = vld [vmem:[%s0 + $0x1b0] sm:$0xff]
  %v70 = vld [vmem:[%s0 + $0x1b8] sm:$0xff]
  %v71 = vld [vmem:[%s0 + $0x1c0] sm:$0xff]
  %v72 = vld [vmem:[%s0 + $0x1c8] sm:$0xff]
  %v73 = vld [vmem:[%s0 + $0x1d0] sm:$0xff]
  %v74 = vld [vmem:[%s0 + $0x1d8] sm:$0xff]
  %v75 = vld [vmem:[%s0 + $0x1e0] sm:$0xff]
  %v76 = vld [vmem:[%s0 + $0x1e8] sm:$0xff]
  %v77 = vld [vmem:[%s0 + $0x1f0] sm:$0xff]
  %v78 = vld [vmem:[%s0 + $0x1f8] sm:$0xff]
  %v79 = vld [vmem:[%s0 + $0x200] sm:$0xff]
  %v80 = vld [vmem:[%s0 + $0x208] sm:$0xff]
  %v81 = vld [vmem:[%s0 + $0x210] sm:$0xff]
  %v82 = vld [vmem:[%s0 + $0x218] sm:$0xff]
  %v83 = vld [vmem:[%s0 + $0x220] sm:$0xff]
  %v84 = vld [vmem:[%s0 + $0x228] sm:$0xff]
  %v85 = vld [vmem:[%s0 + $0x230] sm:$0xff]
  %v86 = vld [vmem:[%s0 + $0x238] sm:$0xff]
  %v87 = vld [vmem:[%s0 + $0x240] sm:$0xff]
  %v88 = vld [vmem:[%s0 + $0x248] sm:$0xff]
  %v89 = vld [vmem:[%s0 + $0x250] sm:$0xff]
  %v90 = vld [vmem:[%s0 + $0x258] sm:$0xff]
  %v91 = vld [vmem:[%s0 + $0x260] sm:$0xff]
  %v92 = vld [vmem:[%s0 + $0x268] sm:$0xff]
  %v93 = vld [vmem:[%s0 + $0x270] sm:$0xff]
  %v94 = vld [vmem:[%s0 + $0x278] sm:$0xff]
  %v95 = vld [vmem:[%s0 + $0x280] sm:$0xff]
  %v96 = vld [vmem:[%s0 + $0x288] sm:$0xff]
  %v97 = vld [vmem:[%s0 + $0x290] sm:$0xff]
  %v98 = vld [vmem:[%s0 + $0x298] sm:$0xff]
  %v99 = vld [vmem:[%s0 + $0x2a0] sm:$0xff]
  %v100 = vld [vmem:[%s0 + $0x2a8] sm:$0xff]
  %v101 = vld [vmem:[%s0 + $0x2b0] sm:$0xff]
  %v102 = vld [vmem:[%s0 + $0x2b8] sm:$0xff]
  %v103 = vld [vmem:[%s0 + $0x2c0] sm:$0xff]
  %v104 = vld [vmem:[%s0 + $0x2c8] sm:$0xff]
  %v105 = vld [vmem:[%s0 + $0x2d0] sm:$0xff]
  %v106 = vld [vmem:[%s0 + $0x2d8] sm:$0xff]
  %v107 = vld [vmem:[%s0 + $0x2e0] sm:$0xff]
  %v108 = vld [vmem:[%s0 + $0x2e8] sm:$0xff]
  %v109 = vld [vmem:[%s0 + $0x2f0] sm:$0xff]
  %v110 = vld [vmem:[%s0 + $0x2f8] sm:$0xff]
  %v111 = vld [vmem:[%s0 + $0x300] sm:$0xff]
  %v112 = vld [vmem:[%s0 + $0x308] sm:$0xff]
  %v113 = vld [vmem:[%s0 + $0x310] sm:$0xff]
  %v114 = vld [vmem:[%s0 + $0x318] sm:$0xff]
  %v115 = vld [vmem:[%s0 + $0x320] sm:$0xff]
  %v116 = vld [vmem:[%s0 + $0x328] sm:$0xff]
  %v117 = vld [vmem:[%s0 + $0x330] sm:$0xff]
  %v118 = vld [vmem:[%s0 + $0x338] sm:$0xff]
  %v119 = vld [vmem:[%s0 + $0x340] sm:$0xff]
  %v120 = vld [vmem:[%s0 + $0x348] sm:$0xff]
  %v121 = vld [vmem:[%s0 + $0x350] sm:$0xff]
  %v122 = vld [vmem:[%s0 + $0x358] sm:$0xff]
  %v123 = vld [vmem:[%s0 + $0x360] sm:$0xff]
  %v124 = vld [vmem:[%s0 + $0x368] sm:$0xff]
  %v125 = vld [vmem:[%s0 + $0x370] sm:$0xff]
  %v126 = vld [vmem:[%s0 + $0x378] sm:$0xff]
  %v127 = vld [vmem:[%s0 + $0x380] sm:$0xff]
  %v128 = vld [vmem:[%s0 + $0x388] sm:$0xff]
  %v129 = vld [vmem:[%s0 + $0x390] sm:$0xff]
  %v130 = vld [vmem:[%s0 + $0x398] sm:$0xff]
  %v131 = vld [vmem:[%s0 + $0x3a0] sm:$0xff]
  %v132 = vld [vmem:[%s0 + $0x3a8] sm:$0xff]
  %v133 = vld [vmem:[%s0 + $0x3b0] sm:$0xff]
  %v134 = vld [vmem:[%s0 + $0x3b8] sm:$0xff]
  %v135 = vld [vmem:[%s0 + $0x3c0] sm:$0xff]
  %v136 = vld [vmem:[%s0 + $0x3c8] sm:$0xff]
  %v137 = vld [vmem:[%s0 + $0x3d0] sm:$0xff]
  %v138 = vld [vmem:[%s0 + $0x3d8] sm:$0xff]
  %v139 = vld [vmem:[%s0 + $0x3e0] sm:$0xff]
  %v140 = vld [vmem:[%s0 + $0x3e8] sm:$0xff]
  %v141 = vld [vmem:[%s0 + $0x3f0] sm:$0xff]
  %v142 = vld [vmem:[%s0 + $0x3f8] sm:$0xff]
  %v143 = vld [vmem:[%s1] sm:$0xf]
  %v144 = vld [vmem:[%s1 + $0x4] sm:$0xf]
  %v145 = vld [vmem:[%s1 + $0x8] sm:$0xf]
  %v146 = vld [vmem:[%s1 + $0xc] sm:$0xf]
  %v147 = vld [vmem:[%s1 + $0x10] sm:$0xf]
  %v148 = vld [vmem:[%s1 + $0x14] sm:$0xf]
  %v149 = vld [vmem:[%s1 + $0x18] sm:$0xf]
  %v150 = vld [vmem:[%s1 + $0x1c] sm:$0xf]
  %v151 = vld [vmem:[%s1 + $0x20] sm:$0xf]
  %v152 = vld [vmem:[%s1 + $0x24] sm:$0xf]
  %v153 = vld [vmem:[%s1 + $0x28] sm:$0xf]
  %v154 = vld [vmem:[%s1 + $0x2c] sm:$0xf]
  %v155 = vld [vmem:[%s1 + $0x30] sm:$0xf]
  %v156 = vld [vmem:[%s1 + $0x34] sm:$0xf]
  %v157 = vld [vmem:[%s1 + $0x38] sm:$0xf]
  %v158 = vld [vmem:[%s1 + $0x3c] sm:$0xf]
  %v159 = vld [vmem:[%s1 + $0x40] sm:$0xf]
  %v160 = vld [vmem:[%s1 + $0x44] sm:$0xf]
  %v161 = vld [vmem:[%s1 + $0x48] sm:$0xf]
  %v162 = vld [vmem:[%s1 + $0x4c] sm:$0xf]
  %v163 = vld [vmem:[%s1 + $0x50] sm:$0xf]
  %v164 = vld [vmem:[%s1 + $0x54] sm:$0xf]
  %v165 = vld [vmem:[%s1 + $0x58] sm:$0xf]
  %v166 = vld [vmem:[%s1 + $0x5c] sm:$0xf]
  %v167 = vld [vmem:[%s1 + $0x60] sm:$0xf]
  %v168 = vld [vmem:[%s1 + $0x64] sm:$0xf]
  %v169 = vld [vmem:[%s1 + $0x68] sm:$0xf]
  %v170 = vld [vmem:[%s1 + $0x6c] sm:$0xf]
  %v171 = vld [vmem:[%s1 + $0x70] sm:$0xf]
  %v172 = vld [vmem:[%s1 + $0x74] sm:$0xf]
  %v173 = vld [vmem:[%s1 + $0x78] sm:$0xf]
  %v174 = vld [vmem:[%s1 + $0x7c] sm:$0xf]
  %v175 = vld [vmem:[%s1 + $0x80] sm:$0xf]
  %v176 = vld [vmem:[%s1 + $0x84] sm:$0xf]
  %v177 = vld [vmem:[%s1 + $0x88] sm:$0xf]
  %v178 = vld [vmem:[%s1 + $0x8c] sm:$0xf]
  %v179 = vld [vmem:[%s1 + $0x90] sm:$0xf]
  %v180 = vld [vmem:[%s1 + $0x94] sm:$0xf]
  %v181 = vld [vmem:[%s1 + $0x98] sm:$0xf]
  %v182 = vld [vmem:[%s1 + $0x9c] sm:$0xf]
  %v183 = vld [vmem:[%s1 + $0xa0] sm:$0xf]
  %v184 = vld [vmem:[%s1 + $0xa4] sm:$0xf]
  %v185 = vld [vmem:[%s1 + $0xa8] sm:$0xf]
  %v186 = vld [vmem:[%s1 + $0xac] sm:$0xf]
  %v187 = vld [vmem:[%s1 + $0xb0] sm:$0xf]
  %v188 = vld [vmem:[%s1 + $0xb4] sm:$0xf]
  %v189 = vld [vmem:[%s1 + $0xb8] sm:$0xf]
  %v190 = vld [vmem:[%s1 + $0xbc] sm:$0xf]
  %v191 = vld [vmem:[%s1 + $0xc0] sm:$0xf]
  %v192 = vld [vmem:[%s1 + $0xc4] sm:$0xf]
  %v193 = vld [vmem:[%s1 + $0xc8] sm:$0xf]
  %v194 = vld [vmem:[%s1 + $0xcc] sm:$0xf]
  %v195 = vld [vmem:[%s1 + $0xd0] sm:$0xf]
  %v196 = vld [vmem:[%s1 + $0xd4] sm:$0xf]
  %v197 = vld [vmem:[%s1 + $0xd8] sm:$0xf]
  %v198 = vld [vmem:[%s1 + $0xdc] sm:$0xf]
  %v199 = vld [vmem:[%s1 + $0xe0] sm:$0xf]
  %v200 = vld [vmem:[%s1 + $0xe4] sm:$0xf]
  %v201 = vld [vmem:[%s1 + $0xe8] sm:$0xf]
  %v202 = vld [vmem:[%s1 + $0xec] sm:$0xf]
  %v203 = vld [vmem:[%s1 + $0xf0] sm:$0xf]
  %v204 = vld [vmem:[%s1 + $0xf4] sm:$0xf]
  %v205 = vld [vmem:[%s1 + $0xf8] sm:$0xf]
  %v206 = vld [vmem:[%s1 + $0xfc] sm:$0xf]
  %v207 = vld [vmem:[%s1 + $0x100] sm:$0xf]
  %v208 = vld [vmem:[%s1 + $0x104] sm:$0xf]
  %v209 = vld [vmem:[%s1 + $0x108] sm:$0xf]
  %v210 = vld [vmem:[%s1 + $0x10c] sm:$0xf]
  %v211 = vld [vmem:[%s1 + $0x110] sm:$0xf]
  %v212 = vld [vmem:[%s1 + $0x114] sm:$0xf]
  %v213 = vld [vmem:[%s1 + $0x118] sm:$0xf]
  %v214 = vld [vmem:[%s1 + $0x11c] sm:$0xf]
  %v215 = vld [vmem:[%s1 + $0x120] sm:$0xf]
  %v216 = vld [vmem:[%s1 + $0x124] sm:$0xf]
  %v217 = vld [vmem:[%s1 + $0x128] sm:$0xf]
  %v218 = vld [vmem:[%s1 + $0x12c] sm:$0xf]
  %v219 = vld [vmem:[%s1 + $0x130] sm:$0xf]
  %v220 = vld [vmem:[%s1 + $0x134] sm:$0xf]
  %v221 = vld [vmem:[%s1 + $0x138] sm:$0xf]
  %v222 = vld [vmem:[%s1 + $0x13c] sm:$0xf]
  %v223 = vld [vmem:[%s1 + $0x140] sm:$0xf]
  %v224 = vld [vmem:[%s1 + $0x144] sm:$0xf]
  %v225 = vld [vmem:[%s1 + $0x148] sm:$0xf]
  %v226 = vld [vmem:[%s1 + $0x14c] sm:$0xf]
  %v227 = vld [vmem:[%s1 + $0x150] sm:$0xf]
  %v228 = vld [vmem:[%s1 + $0x154] sm:$0xf]
  %v229 = vld [vmem:[%s1 + $0x158] sm:$0xf]
  %v230 = vld [vmem:[%s1 + $0x15c] sm:$0xf]
  %v231 = vld [vmem:[%s1 + $0x160] sm:$0xf]
  %v232 = vld [vmem:[%s1 + $0x164] sm:$0xf]
  %v233 = vld [vmem:[%s1 + $0x168] sm:$0xf]
  %v234 = vld [vmem:[%s1 + $0x16c] sm:$0xf]
  %v235 = vld [vmem:[%s1 + $0x170] sm:$0xf]
  %v236 = vld [vmem:[%s1 + $0x174] sm:$0xf]
  %v237 = vld [vmem:[%s1 + $0x178] sm:$0xf]
  %v238 = vld [vmem:[%s1 + $0x17c] sm:$0xf]
  %v239 = vld [vmem:[%s1 + $0x180] sm:$0xf]
  %v240 = vld [vmem:[%s1 + $0x184] sm:$0xf]
  %v241 = vld [vmem:[%s1 + $0x188] sm:$0xf]
  %v242 = vld [vmem:[%s1 + $0x18c] sm:$0xf]
  %v243 = vld [vmem:[%s1 + $0x190] sm:$0xf]
  %v244 = vld [vmem:[%s1 + $0x194] sm:$0xf]
  %v245 = vld [vmem:[%s1 + $0x198] sm:$0xf]
  %v246 = vld [vmem:[%s1 + $0x19c] sm:$0xf]
  %v247 = vld [vmem:[%s1 + $0x1a0] sm:$0xf]
  %v248 = vld [vmem:[%s1 + $0x1a4] sm:$0xf]
  %v249 = vld [vmem:[%s1 + $0x1a8] sm:$0xf]
  %v250 = vld [vmem:[%s1 + $0x1ac] sm:$0xf]
  %v251 = vld [vmem:[%s1 + $0x1b0] sm:$0xf]
  %v252 = vld [vmem:[%s1 + $0x1b4] sm:$0xf]
  %v253 = vld [vmem:[%s1 + $0x1b8] sm:$0xf]
  %v254 = vld [vmem:[%s1 + $0x1bc] sm:$0xf]
  %v255 = vld [vmem:[%s1 + $0x1c0] sm:$0xf]
  %v256 = vld [vmem:[%s1 + $0x1c4] sm:$0xf]
  %v257 = vld [vmem:[%s1 + $0x1c8] sm:$0xf]
  %v258 = vld [vmem:[%s1 + $0x1cc] sm:$0xf]
  %v259 = vld [vmem:[%s1 + $0x1d0] sm:$0xf]
  %v260 = vld [vmem:[%s1 + $0x1d4] sm:$0xf]
  %v261 = vld [vmem:[%s1 + $0x1d8] sm:$0xf]
  %v262 = vld [vmem:[%s1 + $0x1dc] sm:$0xf]
  %v263 = vld [vmem:[%s1 + $0x1e0] sm:$0xf]
  %v264 = vld [vmem:[%s1 + $0x1e4] sm:$0xf]
  %v265 = vld [vmem:[%s1 + $0x1e8] sm:$0xf]
  %v266 = vld [vmem:[%s1 + $0x1ec] sm:$0xf]
  %v267 = vld [vmem:[%s1 + $0x1f0] sm:$0xf]
  %v268 = vld [vmem:[%s1 + $0x1f4] sm:$0xf]
  %v269 = vld [vmem:[%s1 + $0x1f8] sm:$0xf]
  %v270 = vld [vmem:[%s1 + $0x1fc] sm:$0xf]
  %v271 = vld [vmem:[%s1 + $0x200] sm:$0xf]
  %v272 = vld [vmem:[%s1 + $0x204] sm:$0xf]
  %v273 = vld [vmem:[%s1 + $0x208] sm:$0xf]
  %v274 = vld [vmem:[%s1 + $0x20c] sm:$0xf]
  %v275 = vld [vmem:[%s1 + $0x210] sm:$0xf]
  %v276 = vld [vmem:[%s1 + $0x214] sm:$0xf]
  %v277 = vld [vmem:[%s1 + $0x218] sm:$0xf]
  %v278 = vld [vmem:[%s1 + $0x21c] sm:$0xf]
  %v279 = vld [vmem:[%s1 + $0x220] sm:$0xf]
  %v280 = vld [vmem:[%s1 + $0x224] sm:$0xf]
  %v281 = vld [vmem:[%s1 + $0x228] sm:$0xf]
  %v282 = vld [vmem:[%s1 + $0x22c] sm:$0xf]
  %v283 = vld [vmem:[%s1 + $0x230] sm:$0xf]
  %v284 = vld [vmem:[%s1 + $0x234] sm:$0xf]
  %v285 = vld [vmem:[%s1 + $0x238] sm:$0xf]
  %v286 = vld [vmem:[%s1 + $0x23c] sm:$0xf]
  %v287 = vld [vmem:[%s1 + $0x240] sm:$0xf]
  %v288 = vld [vmem:[%s1 + $0x244] sm:$0xf]
  %v289 = vld [vmem:[%s1 + $0x248] sm:$0xf]
  %v290 = vld [vmem:[%s1 + $0x24c] sm:$0xf]
  %v291 = vld [vmem:[%s1 + $0x250] sm:$0xf]
  %v292 = vld [vmem:[%s1 + $0x254] sm:$0xf]
  %v293 = vld [vmem:[%s1 + $0x258] sm:$0xf]
  %v294 = vld [vmem:[%s1 + $0x25c] sm:$0xf]
  %v295 = vld [vmem:[%s1 + $0x260] sm:$0xf]
  %v296 = vld [vmem:[%s1 + $0x264] sm:$0xf]
  %v297 = vld [vmem:[%s1 + $0x268] sm:$0xf]
  %v298 = vld [vmem:[%s1 + $0x26c] sm:$0xf]
  %v299 = vld [vmem:[%s1 + $0x270] sm:$0xf]
  %v300 = vld [vmem:[%s1 + $0x274] sm:$0xf]
  %v301 = vld [vmem:[%s1 + $0x278] sm:$0xf]
  %v302 = vld [vmem:[%s1 + $0x27c] sm:$0xf]
  %v303 = vld [vmem:[%s1 + $0x280] sm:$0xf]
  %v304 = vld [vmem:[%s1 + $0x284] sm:$0xf]
  %v305 = vld [vmem:[%s1 + $0x288] sm:$0xf]
  %v306 = vld [vmem:[%s1 + $0x28c] sm:$0xf]
  %v307 = vld [vmem:[%s1 + $0x290] sm:$0xf]
  %v308 = vld [vmem:[%s1 + $0x294] sm:$0xf]
  %v309 = vld [vmem:[%s1 + $0x298] sm:$0xf]
  %v310 = vld [vmem:[%s1 + $0x29c] sm:$0xf]
  %v311 = vld [vmem:[%s1 + $0x2a0] sm:$0xf]
  %v312 = vld [vmem:[%s1 + $0x2a4] sm:$0xf]
  %v313 = vld [vmem:[%s1 + $0x2a8] sm:$0xf]
  %v314 = vld [vmem:[%s1 + $0x2ac] sm:$0xf]
  %v315 = vld [vmem:[%s1 + $0x2b0] sm:$0xf]
  %v316 = vld [vmem:[%s1 + $0x2b4] sm:$0xf]
  %v317 = vld [vmem:[%s1 + $0x2b8] sm:$0xf]
  %v318 = vld [vmem:[%s1 + $0x2bc] sm:$0xf]
  %v319 = vld [vmem:[%s1 + $0x2c0] sm:$0xf]
  %v320 = vld [vmem:[%s1 + $0x2c4] sm:$0xf]
  %v321 = vld [vmem:[%s1 + $0x2c8] sm:$0xf]
  %v322 = vld [vmem:[%s1 + $0x2cc] sm:$0xf]
  %v323 = vld [vmem:[%s1 + $0x2d0] sm:$0xf]
  %v324 = vld [vmem:[%s1 + $0x2d4] sm:$0xf]
  %v325 = vld [vmem:[%s1 + $0x2d8] sm:$0xf]
  %v326 = vld [vmem:[%s1 + $0x2dc] sm:$0xf]
  %v327 = vld [vmem:[%s1 + $0x2e0] sm:$0xf]
  %v328 = vld [vmem:[%s1 + $0x2e4] sm:$0xf]
  %v329 = vld [vmem:[%s1 + $0x2e8] sm:$0xf]
  %v330 = vld [vmem:[%s1 + $0x2ec] sm:$0xf]
  %v331 = vld [vmem:[%s1 + $0x2f0] sm:$0xf]
  %v332 = vld [vmem:[%s1 + $0x2f4] sm:$0xf]
  %v333 = vld [vmem:[%s1 + $0x2f8] sm:$0xf]
  %v334 = vld [vmem:[%s1 + $0x2fc] sm:$0xf]
  %v335 = vld [vmem:[%s1 + $0x300] sm:$0xf]
  %v336 = vld [vmem:[%s1 + $0x304] sm:$0xf]
  %v337 = vld [vmem:[%s1 + $0x308] sm:$0xf]
  %v338 = vld [vmem:[%s1 + $0x30c] sm:$0xf]
  %v339 = vld [vmem:[%s1 + $0x310] sm:$0xf]
  %v340 = vld [vmem:[%s1 + $0x314] sm:$0xf]
  %v341 = vld [vmem:[%s1 + $0x318] sm:$0xf]
  %v342 = vld [vmem:[%s1 + $0x31c] sm:$0xf]
  %v343 = vld [vmem:[%s1 + $0x320] sm:$0xf]
  %v344 = vld [vmem:[%s1 + $0x324] sm:$0xf]
  %v345 = vld [vmem:[%s1 + $0x328] sm:$0xf]
  %v346 = vld [vmem:[%s1 + $0x32c] sm:$0xf]
  %v347 = vld [vmem:[%s1 + $0x330] sm:$0xf]
  %v348 = vld [vmem:[%s1 + $0x334] sm:$0xf]
  %v349 = vld [vmem:[%s1 + $0x338] sm:$0xf]
  %v350 = vld [vmem:[%s1 + $0x33c] sm:$0xf]
  %v351 = vld [vmem:[%s1 + $0x340] sm:$0xf]
  %v352 = vld [vmem:[%s1 + $0x344] sm:$0xf]
  %v353 = vld [vmem:[%s1 + $0x348] sm:$0xf]
  %v354 = vld [vmem:[%s1 + $0x34c] sm:$0xf]
  %v355 = vld [vmem:[%s1 + $0x350] sm:$0xf]
  %v356 = vld [vmem:[%s1 + $0x354] sm:$0xf]
  %v357 = vld [vmem:[%s1 + $0x358] sm:$0xf]
  %v358 = vld [vmem:[%s1 + $0x35c] sm:$0xf]
  %v359 = vld [vmem:[%s1 + $0x360] sm:$0xf]
  %v360 = vld [vmem:[%s1 + $0x364] sm:$0xf]
  %v361 = vld [vmem:[%s1 + $0x368] sm:$0xf]
  %v362 = vld [vmem:[%s1 + $0x36c] sm:$0xf]
  %v363 = vld [vmem:[%s1 + $0x370] sm:$0xf]
  %v364 = vld [vmem:[%s1 + $0x374] sm:$0xf]
  %v365 = vld [vmem:[%s1 + $0x378] sm:$0xf]
  %v366 = vld [vmem:[%s1 + $0x37c] sm:$0xf]
  %v367 = vld [vmem:[%s1 + $0x380] sm:$0xf]
  %v368 = vld [vmem:[%s1 + $0x384] sm:$0xf]
  %v369 = vld [vmem:[%s1 + $0x388] sm:$0xf]
  %v370 = vld [vmem:[%s1 + $0x38c] sm:$0xf]
  %v371 = vld [vmem:[%s1 + $0x390] sm:$0xf]
  %v372 = vld [vmem:[%s1 + $0x394] sm:$0xf]
  %v373 = vld [vmem:[%s1 + $0x398] sm:$0xf]
  %v374 = vld [vmem:[%s1 + $0x39c] sm:$0xf]
  %v375 = vld [vmem:[%s1 + $0x3a0] sm:$0xf]
  %v376 = vld [vmem:[%s1 + $0x3a4] sm:$0xf]
  %v377 = vld [vmem:[%s1 + $0x3a8] sm:$0xf]
  %v378 = vld [vmem:[%s1 + $0x3ac] sm:$0xf]
  %v379 = vld [vmem:[%s1 + $0x3b0] sm:$0xf]
  %v380 = vld [vmem:[%s1 + $0x3b4] sm:$0xf]
  %v381 = vld [vmem:[%s1 + $0x3b8] sm:$0xf]
  %v382 = vld [vmem:[%s1 + $0x3bc] sm:$0xf]
  %v383 = vld [vmem:[%s1 + $0x3c0] sm:$0xf]
  %v384 = vld [vmem:[%s1 + $0x3c4] sm:$0xf]
  %v385 = vld [vmem:[%s1 + $0x3c8] sm:$0xf]
  %v386 = vld [vmem:[%s1 + $0x3cc] sm:$0xf]
  %v387 = vld [vmem:[%s1 + $0x3d0] sm:$0xf]
  %v388 = vld [vmem:[%s1 + $0x3d4] sm:$0xf]
  %v389 = vld [vmem:[%s1 + $0x3d8] sm:$0xf]
  %v390 = vld [vmem:[%s1 + $0x3dc] sm:$0xf]
  %v391 = vld [vmem:[%s1 + $0x3e0] sm:$0xf]
  %v392 = vld [vmem:[%s1 + $0x3e4] sm:$0xf]
  %v393 = vld [vmem:[%s1 + $0x3e8] sm:$0xf]
  %v394 = vld [vmem:[%s1 + $0x3ec] sm:$0xf]
  %v395 = vld [vmem:[%s1 + $0x3f0] sm:$0xf]
  %v396 = vld [vmem:[%s1 + $0x3f4] sm:$0xf]
  %v397 = vld [vmem:[%s1 + $0x3f8] sm:$0xf]
  %v398 = vld [vmem:[%s1 + $0x3fc] sm:$0xf]
  %v399 = vld [vmem:[%s1 + $0x400] sm:$0xf]
  %v400 = vld [vmem:[%s1 + $0x404] sm:$0xf]
  %v401 = vld [vmem:[%s1 + $0x408] sm:$0xf]
  %v402 = vld [vmem:[%s1 + $0x40c] sm:$0xf]
  %v403 = vld [vmem:[%s1 + $0x410] sm:$0xf]
  %v404 = vld [vmem:[%s1 + $0x414] sm:$0xf]
  %v405 = vld [vmem:[%s1 + $0x418] sm:$0xf]
  %v406 = vld [vmem:[%s1 + $0x41c] sm:$0xf]
  %v407 = vld [vmem:[%s1 + $0x420] sm:$0xf]
  %v408 = vld [vmem:[%s1 + $0x424] sm:$0xf]
  %v409 = vld [vmem:[%s1 + $0x428] sm:$0xf]
  %v410 = vld [vmem:[%s1 + $0x42c] sm:$0xf]
  %v411 = vld [vmem:[%s1 + $0x430] sm:$0xf]
  %v412 = vld [vmem:[%s1 + $0x434] sm:$0xf]
  %v413 = vld [vmem:[%s1 + $0x438] sm:$0xf]
  %v414 = vld [vmem:[%s1 + $0x43c] sm:$0xf]
  %v415 = vld [vmem:[%s1 + $0x440] sm:$0xf]
  %v416 = vld [vmem:[%s1 + $0x444] sm:$0xf]
  %v417 = vld [vmem:[%s1 + $0x448] sm:$0xf]
  %v418 = vld [vmem:[%s1 + $0x44c] sm:$0xf]
  %v419 = vld [vmem:[%s1 + $0x450] sm:$0xf]
  %v420 = vld [vmem:[%s1 + $0x454] sm:$0xf]
  %v421 = vld [vmem:[%s1 + $0x458] sm:$0xf]
  %v422 = vld [vmem:[%s1 + $0x45c] sm:$0xf]
  %v423 = vld [vmem:[%s1 + $0x460] sm:$0xf]
  %v424 = vld [vmem:[%s1 + $0x464] sm:$0xf]
  %v425 = vld [vmem:[%s1 + $0x468] sm:$0xf]
  %v426 = vld [vmem:[%s1 + $0x46c] sm:$0xf]
  %v427 = vld [vmem:[%s1 + $0x470] sm:$0xf]
  %v428 = vld [vmem:[%s1 + $0x474] sm:$0xf]
  %v429 = vld [vmem:[%s1 + $0x478] sm:$0xf]
  %v430 = vld [vmem:[%s1 + $0x47c] sm:$0xf]
  %v431 = vld [vmem:[%s1 + $0x480] sm:$0xf]
  %v432 = vld [vmem:[%s1 + $0x484] sm:$0xf]
  %v433 = vld [vmem:[%s1 + $0x488] sm:$0xf]
  %v434 = vld [vmem:[%s1 + $0x48c] sm:$0xf]
  %v435 = vld [vmem:[%s1 + $0x490] sm:$0xf]
  %v436 = vld [vmem:[%s1 + $0x494] sm:$0xf]
  %v437 = vld [vmem:[%s1 + $0x498] sm:$0xf]
  %v438 = vld [vmem:[%s1 + $0x49c] sm:$0xf]
  %v439 = vld [vmem:[%s1 + $0x4a0] sm:$0xf]
  %v440 = vld [vmem:[%s1 + $0x4a4] sm:$0xf]
  %v441 = vld [vmem:[%s1 + $0x4a8] sm:$0xf]
  %v442 = vld [vmem:[%s1 + $0x4ac] sm:$0xf]
  %v443 = vld [vmem:[%s1 + $0x4b0] sm:$0xf]
  %v444 = vld [vmem:[%s1 + $0x4b4] sm:$0xf]
  %v445 = vld [vmem:[%s1 + $0x4b8] sm:$0xf]
  %v446 = vld [vmem:[%s1 + $0x4bc] sm:$0xf]
  %v447 = vld [vmem:[%s1 + $0x4c0] sm:$0xf]
  %v448 = vld [vmem:[%s1 + $0x4c4] sm:$0xf]
  %v449 = vld [vmem:[%s1 + $0x4c8] sm:$0xf]
  %v450 = vld [vmem:[%s1 + $0x4cc] sm:$0xf]
  %v451 = vld [vmem:[%s1 + $0x4d0] sm:$0xf]
  %v452 = vld [vmem:[%s1 + $0x4d4] sm:$0xf]
  %v453 = vld [vmem:[%s1 + $0x4d8] sm:$0xf]
  %v454 = vld [vmem:[%s1 + $0x4dc] sm:$0xf]
  %v455 = vld [vmem:[%s1 + $0x4e0] sm:$0xf]
  %v456 = vld [vmem:[%s1 + $0x4e4] sm:$0xf]
  %v457 = vld [vmem:[%s1 + $0x4e8] sm:$0xf]
  %v458 = vld [vmem:[%s1 + $0x4ec] sm:$0xf]
  %v459 = vld [vmem:[%s1 + $0x4f0] sm:$0xf]
  %v460 = vld [vmem:[%s1 + $0x4f4] sm:$0xf]
  %v461 = vld [vmem:[%s1 + $0x4f8] sm:$0xf]
  %v462 = vld [vmem:[%s1 + $0x4fc] sm:$0xf]
  %v463 = vld [vmem:[%s1 + $0x500] sm:$0xf]
  %v464 = vld [vmem:[%s1 + $0x504] sm:$0xf]
  %v465 = vld [vmem:[%s1 + $0x508] sm:$0xf]
  %v466 = vld [vmem:[%s1 + $0x50c] sm:$0xf]
  %v467 = vld [vmem:[%s1 + $0x510] sm:$0xf]
  %v468 = vld [vmem:[%s1 + $0x514] sm:$0xf]
  %v469 = vld [vmem:[%s1 + $0x518] sm:$0xf]
  %v470 = vld [vmem:[%s1 + $0x51c] sm:$0xf]
  %v471 = vld [vmem:[%s1 + $0x520] sm:$0xf]
  %v472 = vld [vmem:[%s1 + $0x524] sm:$0xf]
  %v473 = vld [vmem:[%s1 + $0x528] sm:$0xf]
  %v474 = vld [vmem:[%s1 + $0x52c] sm:$0xf]
  %v475 = vld [vmem:[%s1 + $0x530] sm:$0xf]
  %v476 = vld [vmem:[%s1 + $0x534] sm:$0xf]
  %v477 = vld [vmem:[%s1 + $0x538] sm:$0xf]
  %v478 = vld [vmem:[%s1 + $0x53c] sm:$0xf]
  %v479 = vld [vmem:[%s1 + $0x540] sm:$0xf]
  %v480 = vld [vmem:[%s1 + $0x544] sm:$0xf]
  %v481 = vld [vmem:[%s1 + $0x548] sm:$0xf]
  %v482 = vld [vmem:[%s1 + $0x54c] sm:$0xf]
  %v483 = vld [vmem:[%s1 + $0x550] sm:$0xf]
  %v484 = vld [vmem:[%s1 + $0x554] sm:$0xf]
  %v485 = vld [vmem:[%s1 + $0x558] sm:$0xf]
  %v486 = vld [vmem:[%s1 + $0x55c] sm:$0xf]
  %v487 = vld [vmem:[%s1 + $0x560] sm:$0xf]
  %v488 = vld [vmem:[%s1 + $0x564] sm:$0xf]
  %v489 = vld [vmem:[%s1 + $0x568] sm:$0xf]
  %v490 = vld [vmem:[%s1 + $0x56c] sm:$0xf]
  %v491 = vld [vmem:[%s1 + $0x570] sm:$0xf]
  %v492 = vld [vmem:[%s1 + $0x574] sm:$0xf]
  %v493 = vld [vmem:[%s1 + $0x578] sm:$0xf]
  %v494 = vld [vmem:[%s1 + $0x57c] sm:$0xf]
  %v495 = vld [vmem:[%s1 + $0x580] sm:$0xf]
  %v496 = vld [vmem:[%s1 + $0x584] sm:$0xf]
  %v497 = vld [vmem:[%s1 + $0x588] sm:$0xf]
  %v498 = vld [vmem:[%s1 + $0x58c] sm:$0xf]
  %v499 = vld [vmem:[%s1 + $0x590] sm:$0xf]
  %v500 = vld [vmem:[%s1 + $0x594] sm:$0xf]
  %v501 = vld [vmem:[%s1 + $0x598] sm:$0xf]
  %v502 = vld [vmem:[%s1 + $0x59c] sm:$0xf]
  %v503 = vld [vmem:[%s1 + $0x5a0] sm:$0xf]
  %v504 = vld [vmem:[%s1 + $0x5a4] sm:$0xf]
  %v505 = vld [vmem:[%s1 + $0x5a8] sm:$0xf]
  %v506 = vld [vmem:[%s1 + $0x5ac] sm:$0xf]
  %v507 = vld [vmem:[%s1 + $0x5b0] sm:$0xf]
  %v508 = vld [vmem:[%s1 + $0x5b4] sm:$0xf]
  %v509 = vld [vmem:[%s1 + $0x5b8] sm:$0xf]
  %v510 = vld [vmem:[%s1 + $0x5bc] sm:$0xf]
  %v511 = vld [vmem:[%s1 + $0x5c0] sm:$0xf]
  %v512 = vld [vmem:[%s1 + $0x5c4] sm:$0xf]
  %v513 = vld [vmem:[%s1 + $0x5c8] sm:$0xf]
  %v514 = vld [vmem:[%s1 + $0x5cc] sm:$0xf]
  %v515 = vld [vmem:[%s1 + $0x5d0] sm:$0xf]
  %v516 = vld [vmem:[%s1 + $0x5d4] sm:$0xf]
  %v517 = vld [vmem:[%s1 + $0x5d8] sm:$0xf]
  %v518 = vld [vmem:[%s1 + $0x5dc] sm:$0xf]
  %v519 = vld [vmem:[%s1 + $0x5e0] sm:$0xf]
  %v520 = vld [vmem:[%s1 + $0x5e4] sm:$0xf]
  %v521 = vld [vmem:[%s1 + $0x5e8] sm:$0xf]
  %v522 = vld [vmem:[%s1 + $0x5ec] sm:$0xf]
  %v523 = vld [vmem:[%s1 + $0x5f0] sm:$0xf]
  %v524 = vld [vmem:[%s1 + $0x5f4] sm:$0xf]
  %v525 = vld [vmem:[%s1 + $0x5f8] sm:$0xf]
  %v526 = vld [vmem:[%s1 + $0x5fc] sm:$0xf]
  %v527 = vld [vmem:[%s1 + $0x600] sm:$0xf]
  %v528 = vld [vmem:[%s1 + $0x604] sm:$0xf]
  %v529 = vld [vmem:[%s1 + $0x608] sm:$0xf]
  %v530 = vld [vmem:[%s1 + $0x60c] sm:$0xf]
  %v531 = vld [vmem:[%s1 + $0x610] sm:$0xf]
  %v532 = vld [vmem:[%s1 + $0x614] sm:$0xf]
  %v533 = vld [vmem:[%s1 + $0x618] sm:$0xf]
  %v534 = vld [vmem:[%s1 + $0x61c] sm:$0xf]
  %v535 = vld [vmem:[%s1 + $0x620] sm:$0xf]
  %v536 = vld [vmem:[%s1 + $0x624] sm:$0xf]
  %v537 = vld [vmem:[%s1 + $0x628] sm:$0xf]
  %v538 = vld [vmem:[%s1 + $0x62c] sm:$0xf]
  %v539 = vld [vmem:[%s1 + $0x630] sm:$0xf]
  %v540 = vld [vmem:[%s1 + $0x634] sm:$0xf]
  %v541 = vld [vmem:[%s1 + $0x638] sm:$0xf]
  %v542 = vld [vmem:[%s1 + $0x63c] sm:$0xf]
  %v543 = vld [vmem:[%s1 + $0x640] sm:$0xf]
  %v544 = vld [vmem:[%s1 + $0x644] sm:$0xf]
  %v545 = vld [vmem:[%s1 + $0x648] sm:$0xf]
  %v546 = vld [vmem:[%s1 + $0x64c] sm:$0xf]
  %v547 = vld [vmem:[%s1 + $0x650] sm:$0xf]
  %v548 = vld [vmem:[%s1 + $0x654] sm:$0xf]
  %v549 = vld [vmem:[%s1 + $0x658] sm:$0xf]
  %v550 = vld [vmem:[%s1 + $0x65c] sm:$0xf]
  %v551 = vld [vmem:[%s1 + $0x660] sm:$0xf]
  %v552 = vld [vmem:[%s1 + $0x664] sm:$0xf]
  %v553 = vld [vmem:[%s1 + $0x668] sm:$0xf]
  %v554 = vld [vmem:[%s1 + $0x66c] sm:$0xf]
  %v555 = vld [vmem:[%s1 + $0x670] sm:$0xf]
  %v556 = vld [vmem:[%s1 + $0x674] sm:$0xf]
  %v557 = vld [vmem:[%s1 + $0x678] sm:$0xf]
  %v558 = vld [vmem:[%s1 + $0x67c] sm:$0xf]
  %v559 = vld [vmem:[%s1 + $0x680] sm:$0xf]
  %v560 = vld [vmem:[%s1 + $0x684] sm:$0xf]
  %v561 = vld [vmem:[%s1 + $0x688] sm:$0xf]
  %v562 = vld [vmem:[%s1 + $0x68c] sm:$0xf]
  %v563 = vld [vmem:[%s1 + $0x690] sm:$0xf]
  %v564 = vld [vmem:[%s1 + $0x694] sm:$0xf]
  %v565 = vld [vmem:[%s1 + $0x698] sm:$0xf]
  %v566 = vld [vmem:[%s1 + $0x69c] sm:$0xf]
  %v567 = vld [vmem:[%s1 + $0x6a0] sm:$0xf]
  %v568 = vld [vmem:[%s1 + $0x6a4] sm:$0xf]
  %v569 = vld [vmem:[%s1 + $0x6a8] sm:$0xf]
  %v570 = vld [vmem:[%s1 + $0x6ac] sm:$0xf]
  %v571 = vld [vmem:[%s1 + $0x6b0] sm:$0xf]
  %v572 = vld [vmem:[%s1 + $0x6b4] sm:$0xf]
  %v573 = vld [vmem:[%s1 + $0x6b8] sm:$0xf]
  %v574 = vld [vmem:[%s1 + $0x6bc] sm:$0xf]
  %v575 = vld [vmem:[%s1 + $0x6c0] sm:$0xf]
  %v576 = vld [vmem:[%s1 + $0x6c4] sm:$0xf]
  %v577 = vld [vmem:[%s1 + $0x6c8] sm:$0xf]
  %v578 = vld [vmem:[%s1 + $0x6cc] sm:$0xf]
  %v579 = vld [vmem:[%s1 + $0x6d0] sm:$0xf]
  %v580 = vld [vmem:[%s1 + $0x6d4] sm:$0xf]
  %v581 = vld [vmem:[%s1 + $0x6d8] sm:$0xf]
  %v582 = vld [vmem:[%s1 + $0x6dc] sm:$0xf]
  %v583 = vld [vmem:[%s1 + $0x6e0] sm:$0xf]
  %v584 = vld [vmem:[%s1 + $0x6e4] sm:$0xf]
  %v585 = vld [vmem:[%s1 + $0x6e8] sm:$0xf]
  %v586 = vld [vmem:[%s1 + $0x6ec] sm:$0xf]
  %v587 = vld [vmem:[%s1 + $0x6f0] sm:$0xf]
  %v588 = vld [vmem:[%s1 + $0x6f4] sm:$0xf]
  %v589 = vld [vmem:[%s1 + $0x6f8] sm:$0xf]
  %v590 = vld [vmem:[%s1 + $0x6fc] sm:$0xf]
  %v591 = vld [vmem:[%s1 + $0x700] sm:$0xf]
  %v592 = vld [vmem:[%s1 + $0x704] sm:$0xf]
  %v593 = vld [vmem:[%s1 + $0x708] sm:$0xf]
  %v594 = vld [vmem:[%s1 + $0x70c] sm:$0xf]
  %v595 = vld [vmem:[%s1 + $0x710] sm:$0xf]
  %v596 = vld [vmem:[%s1 + $0x714] sm:$0xf]
  %v597 = vld [vmem:[%s1 + $0x718] sm:$0xf]
  %v598 = vld [vmem:[%s1 + $0x71c] sm:$0xf]
  %v599 = vld [vmem:[%s1 + $0x720] sm:$0xf]
  %v600 = vld [vmem:[%s1 + $0x724] sm:$0xf]
  %v601 = vld [vmem:[%s1 + $0x728] sm:$0xf]
  %v602 = vld [vmem:[%s1 + $0x72c] sm:$0xf]
  %v603 = vld [vmem:[%s1 + $0x730] sm:$0xf]
  %v604 = vld [vmem:[%s1 + $0x734] sm:$0xf]
  %v605 = vld [vmem:[%s1 + $0x738] sm:$0xf]
  %v606 = vld [vmem:[%s1 + $0x73c] sm:$0xf]
  %v607 = vld [vmem:[%s1 + $0x740] sm:$0xf]
  %v608 = vld [vmem:[%s1 + $0x744] sm:$0xf]
  %v609 = vld [vmem:[%s1 + $0x748] sm:$0xf]
  %v610 = vld [vmem:[%s1 + $0x74c] sm:$0xf]
  %v611 = vld [vmem:[%s1 + $0x750] sm:$0xf]
  %v612 = vld [vmem:[%s1 + $0x754] sm:$0xf]
  %v613 = vld [vmem:[%s1 + $0x758] sm:$0xf]
  %v614 = vld [vmem:[%s1 + $0x75c] sm:$0xf]
  %v615 = vld [vmem:[%s1 + $0x760] sm:$0xf]
  %v616 = vld [vmem:[%s1 + $0x764] sm:$0xf]
  %v617 = vld [vmem:[%s1 + $0x768] sm:$0xf]
  %v618 = vld [vmem:[%s1 + $0x76c] sm:$0xf]
  %v619 = vld [vmem:[%s1 + $0x770] sm:$0xf]
  %v620 = vld [vmem:[%s1 + $0x774] sm:$0xf]
  %v621 = vld [vmem:[%s1 + $0x778] sm:$0xf]
  %v622 = vld [vmem:[%s1 + $0x77c] sm:$0xf]
  %v623 = vld [vmem:[%s1 + $0x780] sm:$0xf]
  %v624 = vld [vmem:[%s1 + $0x784] sm:$0xf]
  %v625 = vld [vmem:[%s1 + $0x788] sm:$0xf]
  %v626 = vld [vmem:[%s1 + $0x78c] sm:$0xf]
  %v627 = vld [vmem:[%s1 + $0x790] sm:$0xf]
  %v628 = vld [vmem:[%s1 + $0x794] sm:$0xf]
  %v629 = vld [vmem:[%s1 + $0x798] sm:$0xf]
  %v630 = vld [vmem:[%s1 + $0x79c] sm:$0xf]
  %v631 = vld [vmem:[%s1 + $0x7a0] sm:$0xf]
  %v632 = vld [vmem:[%s1 + $0x7a4] sm:$0xf]
  %v633 = vld [vmem:[%s1 + $0x7a8] sm:$0xf]
  %v634 = vld [vmem:[%s1 + $0x7ac] sm:$0xf]
  %v635 = vld [vmem:[%s1 + $0x7b0] sm:$0xf]
  %v636 = vld [vmem:[%s1 + $0x7b4] sm:$0xf]
  %v637 = vld [vmem:[%s1 + $0x7b8] sm:$0xf]
  %v638 = vld [vmem:[%s1 + $0x7bc] sm:$0xf]
  %v639 = vld [vmem:[%s1 + $0x7c0] sm:$0xf]
  %v640 = vld [vmem:[%s1 + $0x7c4] sm:$0xf]
  %v641 = vld [vmem:[%s1 + $0x7c8] sm:$0xf]
  %v642 = vld [vmem:[%s1 + $0x7cc] sm:$0xf]
  %v643 = vld [vmem:[%s1 + $0x7d0] sm:$0xf]
  %v644 = vld [vmem:[%s1 + $0x7d4] sm:$0xf]
  %v645 = vld [vmem:[%s1 + $0x7d8] sm:$0xf]
  %v646 = vld [vmem:[%s1 + $0x7dc] sm:$0xf]
  %v647 = vld [vmem:[%s1 + $0x7e0] sm:$0xf]
  %v648 = vld [vmem:[%s1 + $0x7e4] sm:$0xf]
  %v649 = vld [vmem:[%s1 + $0x7e8] sm:$0xf]
  %v650 = vld [vmem:[%s1 + $0x7ec] sm:$0xf]
  %v651 = vld [vmem:[%s1 + $0x7f0] sm:$0xf]
  %v652 = vld [vmem:[%s1 + $0x7f4] sm:$0xf]
  %v653 = vld [vmem:[%s1 + $0x7f8] sm:$0xf]
  %v654 = vld [vmem:[%s1 + $0x7fc] sm:$0xf]
  %v655 = vld [vmem:[%s2] sm:$0x1]
  %v657 = vlaneseq
  %v658 = vshrl.u32 %v657, 7
  %v659 = vsub.s32 0, %v658
  %v660 = vrot.slane %v655, %v659
  %v790 = vunpack.c.l.b16 %v15
  %v791 = vunpack.c.h.b16 %v15
  %v792 = vunpack.c.l.b16 %v16
  %v793 = vunpack.c.h.b16 %v16
  %v794 = vunpack.c.l.b16 %v17
  %v795 = vunpack.c.h.b16 %v17
  %v796 = vunpack.c.l.b16 %v18
  %v797 = vunpack.c.h.b16 %v18
  %v798 = vunpack.c.l.b16 %v19
  %v799 = vunpack.c.h.b16 %v19
  %v800 = vunpack.c.l.b16 %v20
  %v801 = vunpack.c.h.b16 %v20
  %v802 = vunpack.c.l.b16 %v21
  %v803 = vunpack.c.h.b16 %v21
  %v804 = vunpack.c.l.b16 %v22
  %v805 = vunpack.c.h.b16 %v22
  %v806 = vunpack.c.l.b16 %v23
  %v807 = vunpack.c.h.b16 %v23
  %v808 = vunpack.c.l.b16 %v24
  %v809 = vunpack.c.h.b16 %v24
  %v810 = vunpack.c.l.b16 %v25
  %v811 = vunpack.c.h.b16 %v25
  %v812 = vunpack.c.l.b16 %v26
  %v813 = vunpack.c.h.b16 %v26
  %v814 = vunpack.c.l.b16 %v27
  %v815 = vunpack.c.h.b16 %v27
  %v816 = vunpack.c.l.b16 %v28
  %v817 = vunpack.c.h.b16 %v28
  %v818 = vunpack.c.l.b16 %v29
  %v819 = vunpack.c.h.b16 %v29
  %v820 = vunpack.c.l.b16 %v30
  %v821 = vunpack.c.h.b16 %v30
  %v822 = vunpack.c.l.b16 %v31
  %v823 = vunpack.c.h.b16 %v31
  %v824 = vunpack.c.l.b16 %v32
  %v825 = vunpack.c.h.b16 %v32
  %v826 = vunpack.c.l.b16 %v33
  %v827 = vunpack.c.h.b16 %v33
  %v828 = vunpack.c.l.b16 %v34
  %v829 = vunpack.c.h.b16 %v34
  %v830 = vunpack.c.l.b16 %v35
  %v831 = vunpack.c.h.b16 %v35
  %v832 = vunpack.c.l.b16 %v36
  %v833 = vunpack.c.h.b16 %v36
  %v834 = vunpack.c.l.b16 %v37
  %v835 = vunpack.c.h.b16 %v37
  %v836 = vunpack.c.l.b16 %v38
  %v837 = vunpack.c.h.b16 %v38
  %v838 = vunpack.c.l.b16 %v39
  %v839 = vunpack.c.h.b16 %v39
  %v840 = vunpack.c.l.b16 %v40
  %v841 = vunpack.c.h.b16 %v40
  %v842 = vunpack.c.l.b16 %v41
  %v843 = vunpack.c.h.b16 %v41
  %v844 = vunpack.c.l.b16 %v42
  %v845 = vunpack.c.h.b16 %v42
  %v846 = vunpack.c.l.b16 %v43
  %v847 = vunpack.c.h.b16 %v43
  %v848 = vunpack.c.l.b16 %v44
  %v849 = vunpack.c.h.b16 %v44
  %v850 = vunpack.c.l.b16 %v45
  %v851 = vunpack.c.h.b16 %v45
  %v852 = vunpack.c.l.b16 %v46
  %v853 = vunpack.c.h.b16 %v46
  %v854 = vunpack.c.l.b16 %v47
  %v855 = vunpack.c.h.b16 %v47
  %v856 = vunpack.c.l.b16 %v48
  %v857 = vunpack.c.h.b16 %v48
  %v858 = vunpack.c.l.b16 %v49
  %v859 = vunpack.c.h.b16 %v49
  %v860 = vunpack.c.l.b16 %v50
  %v861 = vunpack.c.h.b16 %v50
  %v862 = vunpack.c.l.b16 %v51
  %v863 = vunpack.c.h.b16 %v51
  %v864 = vunpack.c.l.b16 %v52
  %v865 = vunpack.c.h.b16 %v52
  %v866 = vunpack.c.l.b16 %v53
  %v867 = vunpack.c.h.b16 %v53
  %v868 = vunpack.c.l.b16 %v54
  %v869 = vunpack.c.h.b16 %v54
  %v870 = vunpack.c.l.b16 %v55
  %v871 = vunpack.c.h.b16 %v55
  %v872 = vunpack.c.l.b16 %v56
  %v873 = vunpack.c.h.b16 %v56
  %v874 = vunpack.c.l.b16 %v57
  %v875 = vunpack.c.h.b16 %v57
  %v876 = vunpack.c.l.b16 %v58
  %v877 = vunpack.c.h.b16 %v58
  %v878 = vunpack.c.l.b16 %v59
  %v879 = vunpack.c.h.b16 %v59
  %v880 = vunpack.c.l.b16 %v60
  %v881 = vunpack.c.h.b16 %v60
  %v882 = vunpack.c.l.b16 %v61
  %v883 = vunpack.c.h.b16 %v61
  %v884 = vunpack.c.l.b16 %v62
  %v885 = vunpack.c.h.b16 %v62
  %v886 = vunpack.c.l.b16 %v63
  %v887 = vunpack.c.h.b16 %v63
  %v888 = vunpack.c.l.b16 %v64
  %v889 = vunpack.c.h.b16 %v64
  %v890 = vunpack.c.l.b16 %v65
  %v891 = vunpack.c.h.b16 %v65
  %v892 = vunpack.c.l.b16 %v66
  %v893 = vunpack.c.h.b16 %v66
  %v894 = vunpack.c.l.b16 %v67
  %v895 = vunpack.c.h.b16 %v67
  %v896 = vunpack.c.l.b16 %v68
  %v897 = vunpack.c.h.b16 %v68
  %v898 = vunpack.c.l.b16 %v69
  %v899 = vunpack.c.h.b16 %v69
  %v900 = vunpack.c.l.b16 %v70
  %v901 = vunpack.c.h.b16 %v70
  %v902 = vunpack.c.l.b16 %v71
  %v903 = vunpack.c.h.b16 %v71
  %v904 = vunpack.c.l.b16 %v72
  %v905 = vunpack.c.h.b16 %v72
  %v906 = vunpack.c.l.b16 %v73
  %v907 = vunpack.c.h.b16 %v73
  %v908 = vunpack.c.l.b16 %v74
  %v909 = vunpack.c.h.b16 %v74
  %v910 = vunpack.c.l.b16 %v75
  %v911 = vunpack.c.h.b16 %v75
  %v912 = vunpack.c.l.b16 %v76
  %v913 = vunpack.c.h.b16 %v76
  %v914 = vunpack.c.l.b16 %v77
  %v915 = vunpack.c.h.b16 %v77
  %v916 = vunpack.c.l.b16 %v78
  %v917 = vunpack.c.h.b16 %v78
  %v918 = vunpack.c.l.b16 %v79
  %v919 = vunpack.c.h.b16 %v79
  %v920 = vunpack.c.l.b16 %v80
  %v921 = vunpack.c.h.b16 %v80
  %v922 = vunpack.c.l.b16 %v81
  %v923 = vunpack.c.h.b16 %v81
  %v924 = vunpack.c.l.b16 %v82
  %v925 = vunpack.c.h.b16 %v82
  %v926 = vunpack.c.l.b16 %v83
  %v927 = vunpack.c.h.b16 %v83
  %v928 = vunpack.c.l.b16 %v84
  %v929 = vunpack.c.h.b16 %v84
  %v930 = vunpack.c.l.b16 %v85
  %v931 = vunpack.c.h.b16 %v85
  %v932 = vunpack.c.l.b16 %v86
  %v933 = vunpack.c.h.b16 %v86
  %v934 = vunpack.c.l.b16 %v87
  %v935 = vunpack.c.h.b16 %v87
  %v936 = vunpack.c.l.b16 %v88
  %v937 = vunpack.c.h.b16 %v88
  %v938 = vunpack.c.l.b16 %v89
  %v939 = vunpack.c.h.b16 %v89
  %v940 = vunpack.c.l.b16 %v90
  %v941 = vunpack.c.h.b16 %v90
  %v942 = vunpack.c.l.b16 %v91
  %v943 = vunpack.c.h.b16 %v91
  %v944 = vunpack.c.l.b16 %v92
  %v945 = vunpack.c.h.b16 %v92
  %v946 = vunpack.c.l.b16 %v93
  %v947 = vunpack.c.h.b16 %v93
  %v948 = vunpack.c.l.b16 %v94
  %v949 = vunpack.c.h.b16 %v94
  %v950 = vunpack.c.l.b16 %v95
  %v951 = vunpack.c.h.b16 %v95
  %v952 = vunpack.c.l.b16 %v96
  %v953 = vunpack.c.h.b16 %v96
  %v954 = vunpack.c.l.b16 %v97
  %v955 = vunpack.c.h.b16 %v97
  %v956 = vunpack.c.l.b16 %v98
  %v957 = vunpack.c.h.b16 %v98
  %v958 = vunpack.c.l.b16 %v99
  %v959 = vunpack.c.h.b16 %v99
  %v960 = vunpack.c.l.b16 %v100
  %v961 = vunpack.c.h.b16 %v100
  %v962 = vunpack.c.l.b16 %v101
  %v963 = vunpack.c.h.b16 %v101
  %v964 = vunpack.c.l.b16 %v102
  %v965 = vunpack.c.h.b16 %v102
  %v966 = vunpack.c.l.b16 %v103
  %v967 = vunpack.c.h.b16 %v103
  %v968 = vunpack.c.l.b16 %v104
  %v969 = vunpack.c.h.b16 %v104
  %v970 = vunpack.c.l.b16 %v105
  %v971 = vunpack.c.h.b16 %v105
  %v972 = vunpack.c.l.b16 %v106
  %v973 = vunpack.c.h.b16 %v106
  %v974 = vunpack.c.l.b16 %v107
  %v975 = vunpack.c.h.b16 %v107
  %v976 = vunpack.c.l.b16 %v108
  %v977 = vunpack.c.h.b16 %v108
  %v978 = vunpack.c.l.b16 %v109
  %v979 = vunpack.c.h.b16 %v109
  %v980 = vunpack.c.l.b16 %v110
  %v981 = vunpack.c.h.b16 %v110
  %v982 = vunpack.c.l.b16 %v111
  %v983 = vunpack.c.h.b16 %v111
  %v984 = vunpack.c.l.b16 %v112
  %v985 = vunpack.c.h.b16 %v112
  %v986 = vunpack.c.l.b16 %v113
  %v987 = vunpack.c.h.b16 %v113
  %v988 = vunpack.c.l.b16 %v114
  %v989 = vunpack.c.h.b16 %v114
  %v990 = vunpack.c.l.b16 %v115
  %v991 = vunpack.c.h.b16 %v115
  %v992 = vunpack.c.l.b16 %v116
  %v993 = vunpack.c.h.b16 %v116
  %v994 = vunpack.c.l.b16 %v117
  %v995 = vunpack.c.h.b16 %v117
  %v996 = vunpack.c.l.b16 %v118
  %v997 = vunpack.c.h.b16 %v118
  %v998 = vunpack.c.l.b16 %v119
  %v999 = vunpack.c.h.b16 %v119
  %v1000 = vunpack.c.l.b16 %v120
  %v1001 = vunpack.c.h.b16 %v120
  %v1002 = vunpack.c.l.b16 %v121
  %v1003 = vunpack.c.h.b16 %v121
  %v1004 = vunpack.c.l.b16 %v122
  %v1005 = vunpack.c.h.b16 %v122
  %v1006 = vunpack.c.l.b16 %v123
  %v1007 = vunpack.c.h.b16 %v123
  %v1008 = vunpack.c.l.b16 %v124
  %v1009 = vunpack.c.h.b16 %v124
  %v1010 = vunpack.c.l.b16 %v125
  %v1011 = vunpack.c.h.b16 %v125
  %v1012 = vunpack.c.l.b16 %v126
  %v1013 = vunpack.c.h.b16 %v126
  %v1014 = vunpack.c.l.b16 %v127
  %v1015 = vunpack.c.h.b16 %v127
  %v1016 = vunpack.c.l.b16 %v128
  %v1017 = vunpack.c.h.b16 %v128
  %v1018 = vunpack.c.l.b16 %v129
  %v1019 = vunpack.c.h.b16 %v129
  %v1020 = vunpack.c.l.b16 %v130
  %v1021 = vunpack.c.h.b16 %v130
  %v1022 = vunpack.c.l.b16 %v131
  %v1023 = vunpack.c.h.b16 %v131
  %v1024 = vunpack.c.l.b16 %v132
  %v1025 = vunpack.c.h.b16 %v132
  %v1026 = vunpack.c.l.b16 %v133
  %v1027 = vunpack.c.h.b16 %v133
  %v1028 = vunpack.c.l.b16 %v134
  %v1029 = vunpack.c.h.b16 %v134
  %v1030 = vunpack.c.l.b16 %v135
  %v1031 = vunpack.c.h.b16 %v135
  %v1032 = vunpack.c.l.b16 %v136
  %v1033 = vunpack.c.h.b16 %v136
  %v1034 = vunpack.c.l.b16 %v137
  %v1035 = vunpack.c.h.b16 %v137
  %v1036 = vunpack.c.l.b16 %v138
  %v1037 = vunpack.c.h.b16 %v138
  %v1038 = vunpack.c.l.b16 %v139
  %v1039 = vunpack.c.h.b16 %v139
  %v1040 = vunpack.c.l.b16 %v140
  %v1041 = vunpack.c.h.b16 %v140
  %v1042 = vunpack.c.l.b16 %v141
  %v1043 = vunpack.c.h.b16 %v141
  %v1044 = vunpack.c.l.b16 %v142
  %v1045 = vunpack.c.h.b16 %v142
  %v1046 = vpack.c.b16 %v822, %v790
  %v1047 = vpack.c.b16 %v823, %v791
  %v1048 = vpack.c.b16 %v824, %v792
  %v1049 = vpack.c.b16 %v825, %v793
  %v1050 = vpack.c.b16 %v826, %v794
  %v1051 = vpack.c.b16 %v827, %v795
  %v1052 = vpack.c.b16 %v828, %v796
  %v1053 = vpack.c.b16 %v829, %v797
  %v1054 = vpack.c.b16 %v830, %v798
  %v1055 = vpack.c.b16 %v831, %v799
  %v1056 = vpack.c.b16 %v832, %v800
  %v1057 = vpack.c.b16 %v833, %v801
  %v1058 = vpack.c.b16 %v834, %v802
  %v1059 = vpack.c.b16 %v835, %v803
  %v1060 = vpack.c.b16 %v836, %v804
  %v1061 = vpack.c.b16 %v837, %v805
  %v1062 = vpack.c.b16 %v838, %v806
  %v1063 = vpack.c.b16 %v839, %v807
  %v1064 = vpack.c.b16 %v840, %v808
  %v1065 = vpack.c.b16 %v841, %v809
  %v1066 = vpack.c.b16 %v842, %v810
  %v1067 = vpack.c.b16 %v843, %v811
  %v1068 = vpack.c.b16 %v844, %v812
  %v1069 = vpack.c.b16 %v845, %v813
  %v1070 = vpack.c.b16 %v846, %v814
  %v1071 = vpack.c.b16 %v847, %v815
  %v1072 = vpack.c.b16 %v848, %v816
  %v1073 = vpack.c.b16 %v849, %v817
  %v1074 = vpack.c.b16 %v850, %v818
  %v1075 = vpack.c.b16 %v851, %v819
  %v1076 = vpack.c.b16 %v852, %v820
  %v1077 = vpack.c.b16 %v853, %v821
  %v1078 = vpack.c.b16 %v886, %v854
  %v1079 = vpack.c.b16 %v887, %v855
  %v1080 = vpack.c.b16 %v888, %v856
  %v1081 = vpack.c.b16 %v889, %v857
  %v1082 = vpack.c.b16 %v890, %v858
  %v1083 = vpack.c.b16 %v891, %v859
  %v1084 = vpack.c.b16 %v892, %v860
  %v1085 = vpack.c.b16 %v893, %v861
  %v1086 = vpack.c.b16 %v894, %v862
  %v1087 = vpack.c.b16 %v895, %v863
  %v1088 = vpack.c.b16 %v896, %v864
  %v1089 = vpack.c.b16 %v897, %v865
  %v1090 = vpack.c.b16 %v898, %v866
  %v1091 = vpack.c.b16 %v899, %v867
  %v1092 = vpack.c.b16 %v900, %v868
  %v1093 = vpack.c.b16 %v901, %v869
  %v1094 = vpack.c.b16 %v902, %v870
  %v1095 = vpack.c.b16 %v903, %v871
  %v1096 = vpack.c.b16 %v904, %v872
  %v1097 = vpack.c.b16 %v905, %v873
  %v1098 = vpack.c.b16 %v906, %v874
  %v1099 = vpack.c.b16 %v907, %v875
  %v1100 = vpack.c.b16 %v908, %v876
  %v1101 = vpack.c.b16 %v909, %v877
  %v1102 = vpack.c.b16 %v910, %v878
  %v1103 = vpack.c.b16 %v911, %v879
  %v1104 = vpack.c.b16 %v912, %v880
  %v1105 = vpack.c.b16 %v913, %v881
  %v1106 = vpack.c.b16 %v914, %v882
  %v1107 = vpack.c.b16 %v915, %v883
  %v1108 = vpack.c.b16 %v916, %v884
  %v1109 = vpack.c.b16 %v917, %v885
  %v1110 = vpack.c.b16 %v950, %v918
  %v1111 = vpack.c.b16 %v951, %v919
  %v1112 = vpack.c.b16 %v952, %v920
  %v1113 = vpack.c.b16 %v953, %v921
  %v1114 = vpack.c.b16 %v954, %v922
  %v1115 = vpack.c.b16 %v955, %v923
  %v1116 = vpack.c.b16 %v956, %v924
  %v1117 = vpack.c.b16 %v957, %v925
  %v1118 = vpack.c.b16 %v958, %v926
  %v1119 = vpack.c.b16 %v959, %v927
  %v1120 = vpack.c.b16 %v960, %v928
  %v1121 = vpack.c.b16 %v961, %v929
  %v1122 = vpack.c.b16 %v962, %v930
  %v1123 = vpack.c.b16 %v963, %v931
  %v1124 = vpack.c.b16 %v964, %v932
  %v1125 = vpack.c.b16 %v965, %v933
  %v1126 = vpack.c.b16 %v966, %v934
  %v1127 = vpack.c.b16 %v967, %v935
  %v1128 = vpack.c.b16 %v968, %v936
  %v1129 = vpack.c.b16 %v969, %v937
  %v1130 = vpack.c.b16 %v970, %v938
  %v1131 = vpack.c.b16 %v971, %v939
  %v1132 = vpack.c.b16 %v972, %v940
  %v1133 = vpack.c.b16 %v973, %v941
  %v1134 = vpack.c.b16 %v974, %v942
  %v1135 = vpack.c.b16 %v975, %v943
  %v1136 = vpack.c.b16 %v976, %v944
  %v1137 = vpack.c.b16 %v977, %v945
  %v1138 = vpack.c.b16 %v978, %v946
  %v1139 = vpack.c.b16 %v979, %v947
  %v1140 = vpack.c.b16 %v980, %v948
  %v1141 = vpack.c.b16 %v981, %v949
  %v1142 = vpack.c.b16 %v1014, %v982
  %v1143 = vpack.c.b16 %v1015, %v983
  %v1144 = vpack.c.b16 %v1016, %v984
  %v1145 = vpack.c.b16 %v1017, %v985
  %v1146 = vpack.c.b16 %v1018, %v986
  %v1147 = vpack.c.b16 %v1019, %v987
  %v1148 = vpack.c.b16 %v1020, %v988
  %v1149 = vpack.c.b16 %v1021, %v989
  %v1150 = vpack.c.b16 %v1022, %v990
  %v1151 = vpack.c.b16 %v1023, %v991
  %v1152 = vpack.c.b16 %v1024, %v992
  %v1153 = vpack.c.b16 %v1025, %v993
  %v1154 = vpack.c.b16 %v1026, %v994
  %v1155 = vpack.c.b16 %v1027, %v995
  %v1156 = vpack.c.b16 %v1028, %v996
  %v1157 = vpack.c.b16 %v1029, %v997
  %v1158 = vpack.c.b16 %v1030, %v998
  %v1159 = vpack.c.b16 %v1031, %v999
  %v1160 = vpack.c.b16 %v1032, %v1000
  %v1161 = vpack.c.b16 %v1033, %v1001
  %v1162 = vpack.c.b16 %v1034, %v1002
  %v1163 = vpack.c.b16 %v1035, %v1003
  %v1164 = vpack.c.b16 %v1036, %v1004
  %v1165 = vpack.c.b16 %v1037, %v1005
  %v1166 = vpack.c.b16 %v1038, %v1006
  %v1167 = vpack.c.b16 %v1039, %v1007
  %v1168 = vpack.c.b16 %v1040, %v1008
  %v1169 = vpack.c.b16 %v1041, %v1009
  %v1170 = vpack.c.b16 %v1042, %v1010
  %v1171 = vpack.c.b16 %v1043, %v1011
  %v1172 = vpack.c.b16 %v1044, %v1012
  %v1173 = vpack.c.b16 %v1045, %v1013
  %v1814 = vunpack.c.l.b16 %v143
  %v1815 = vunpack.c.l.b16 %v144
  %v1816 = vunpack.c.l.b16 %v145
  %v1817 = vunpack.c.l.b16 %v146
  %v1818 = vunpack.c.l.b16 %v147
  %v1819 = vunpack.c.l.b16 %v148
  %v1820 = vunpack.c.l.b16 %v149
  %v1821 = vunpack.c.l.b16 %v150
  %v1822 = vunpack.c.l.b16 %v151
  %v1823 = vunpack.c.l.b16 %v152
  %v1824 = vunpack.c.l.b16 %v153
  %v1825 = vunpack.c.l.b16 %v154
  %v1826 = vunpack.c.l.b16 %v155
  %v1827 = vunpack.c.l.b16 %v156
  %v1828 = vunpack.c.l.b16 %v157
  %v1829 = vunpack.c.l.b16 %v158
  %v1830 = vunpack.c.l.b16 %v159
  %v1831 = vunpack.c.l.b16 %v160
  %v1832 = vunpack.c.l.b16 %v161
  %v1833 = vunpack.c.l.b16 %v162
  %v1834 = vunpack.c.l.b16 %v163
  %v1835 = vunpack.c.l.b16 %v164
  %v1836 = vunpack.c.l.b16 %v165
  %v1837 = vunpack.c.l.b16 %v166
  %v1838 = vunpack.c.l.b16 %v167
  %v1839 = vunpack.c.l.b16 %v168
  %v1840 = vunpack.c.l.b16 %v169
  %v1841 = vunpack.c.l.b16 %v170
  %v1842 = vunpack.c.l.b16 %v171
  %v1843 = vunpack.c.l.b16 %v172
  %v1844 = vunpack.c.l.b16 %v173
  %v1845 = vunpack.c.l.b16 %v174
  %v1846 = vunpack.c.l.b16 %v175
  %v1847 = vunpack.c.l.b16 %v176
  %v1848 = vunpack.c.l.b16 %v177
  %v1849 = vunpack.c.l.b16 %v178
  %v1850 = vunpack.c.l.b16 %v179
  %v1851 = vunpack.c.l.b16 %v180
  %v1852 = vunpack.c.l.b16 %v181
  %v1853 = vunpack.c.l.b16 %v182
  %v1854 = vunpack.c.l.b16 %v183
  %v1855 = vunpack.c.l.b16 %v184
  %v1856 = vunpack.c.l.b16 %v185
  %v1857 = vunpack.c.l.b16 %v186
  %v1858 = vunpack.c.l.b16 %v187
  %v1859 = vunpack.c.l.b16 %v188
  %v1860 = vunpack.c.l.b16 %v189
  %v1861 = vunpack.c.l.b16 %v190
  %v1862 = vunpack.c.l.b16 %v191
  %v1863 = vunpack.c.l.b16 %v192
  %v1864 = vunpack.c.l.b16 %v193
  %v1865 = vunpack.c.l.b16 %v194
  %v1866 = vunpack.c.l.b16 %v195
  %v1867 = vunpack.c.l.b16 %v196
  %v1868 = vunpack.c.l.b16 %v197
  %v1869 = vunpack.c.l.b16 %v198
  %v1870 = vunpack.c.l.b16 %v199
  %v1871 = vunpack.c.l.b16 %v200
  %v1872 = vunpack.c.l.b16 %v201
  %v1873 = vunpack.c.l.b16 %v202
  %v1874 = vunpack.c.l.b16 %v203
  %v1875 = vunpack.c.l.b16 %v204
  %v1876 = vunpack.c.l.b16 %v205
  %v1877 = vunpack.c.l.b16 %v206
  %v1878 = vunpack.c.l.b16 %v207
  %v1879 = vunpack.c.l.b16 %v208
  %v1880 = vunpack.c.l.b16 %v209
  %v1881 = vunpack.c.l.b16 %v210
  %v1882 = vunpack.c.l.b16 %v211
  %v1883 = vunpack.c.l.b16 %v212
  %v1884 = vunpack.c.l.b16 %v213
  %v1885 = vunpack.c.l.b16 %v214
  %v1886 = vunpack.c.l.b16 %v215
  %v1887 = vunpack.c.l.b16 %v216
  %v1888 = vunpack.c.l.b16 %v217
  %v1889 = vunpack.c.l.b16 %v218
  %v1890 = vunpack.c.l.b16 %v219
  %v1891 = vunpack.c.l.b16 %v220
  %v1892 = vunpack.c.l.b16 %v221
  %v1893 = vunpack.c.l.b16 %v222
  %v1894 = vunpack.c.l.b16 %v223
  %v1895 = vunpack.c.l.b16 %v224
  %v1896 = vunpack.c.l.b16 %v225
  %v1897 = vunpack.c.l.b16 %v226
  %v1898 = vunpack.c.l.b16 %v227
  %v1899 = vunpack.c.l.b16 %v228
  %v1900 = vunpack.c.l.b16 %v229
  %v1901 = vunpack.c.l.b16 %v230
  %v1902 = vunpack.c.l.b16 %v231
  %v1903 = vunpack.c.l.b16 %v232
  %v1904 = vunpack.c.l.b16 %v233
  %v1905 = vunpack.c.l.b16 %v234
  %v1906 = vunpack.c.l.b16 %v235
  %v1907 = vunpack.c.l.b16 %v236
  %v1908 = vunpack.c.l.b16 %v237
  %v1909 = vunpack.c.l.b16 %v238
  %v1910 = vunpack.c.l.b16 %v239
  %v1911 = vunpack.c.l.b16 %v240
  %v1912 = vunpack.c.l.b16 %v241
  %v1913 = vunpack.c.l.b16 %v242
  %v1914 = vunpack.c.l.b16 %v243
  %v1915 = vunpack.c.l.b16 %v244
  %v1916 = vunpack.c.l.b16 %v245
  %v1917 = vunpack.c.l.b16 %v246
  %v1918 = vunpack.c.l.b16 %v247
  %v1919 = vunpack.c.l.b16 %v248
  %v1920 = vunpack.c.l.b16 %v249
  %v1921 = vunpack.c.l.b16 %v250
  %v1922 = vunpack.c.l.b16 %v251
  %v1923 = vunpack.c.l.b16 %v252
  %v1924 = vunpack.c.l.b16 %v253
  %v1925 = vunpack.c.l.b16 %v254
  %v1926 = vunpack.c.l.b16 %v255
  %v1927 = vunpack.c.l.b16 %v256
  %v1928 = vunpack.c.l.b16 %v257
  %v1929 = vunpack.c.l.b16 %v258
  %v1930 = vunpack.c.l.b16 %v259
  %v1931 = vunpack.c.l.b16 %v260
  %v1932 = vunpack.c.l.b16 %v261
  %v1933 = vunpack.c.l.b16 %v262
  %v1934 = vunpack.c.l.b16 %v263
  %v1935 = vunpack.c.l.b16 %v264
  %v1936 = vunpack.c.l.b16 %v265
  %v1937 = vunpack.c.l.b16 %v266
  %v1938 = vunpack.c.l.b16 %v267
  %v1939 = vunpack.c.l.b16 %v268
  %v1940 = vunpack.c.l.b16 %v269
  %v1941 = vunpack.c.l.b16 %v270
  %v1942 = vunpack.c.l.b16 %v271
  %v1943 = vunpack.c.l.b16 %v272
  %v1944 = vunpack.c.l.b16 %v273
  %v1945 = vunpack.c.l.b16 %v274
  %v1946 = vunpack.c.l.b16 %v275
  %v1947 = vunpack.c.l.b16 %v276
  %v1948 = vunpack.c.l.b16 %v277
  %v1949 = vunpack.c.l.b16 %v278
  %v1950 = vunpack.c.l.b16 %v279
  %v1951 = vunpack.c.l.b16 %v280
  %v1952 = vunpack.c.l.b16 %v281
  %v1953 = vunpack.c.l.b16 %v282
  %v1954 = vunpack.c.l.b16 %v283
  %v1955 = vunpack.c.l.b16 %v284
  %v1956 = vunpack.c.l.b16 %v285
  %v1957 = vunpack.c.l.b16 %v286
  %v1958 = vunpack.c.l.b16 %v287
  %v1959 = vunpack.c.l.b16 %v288
  %v1960 = vunpack.c.l.b16 %v289
  %v1961 = vunpack.c.l.b16 %v290
  %v1962 = vunpack.c.l.b16 %v291
  %v1963 = vunpack.c.l.b16 %v292
  %v1964 = vunpack.c.l.b16 %v293
  %v1965 = vunpack.c.l.b16 %v294
  %v1966 = vunpack.c.l.b16 %v295
  %v1967 = vunpack.c.l.b16 %v296
  %v1968 = vunpack.c.l.b16 %v297
  %v1969 = vunpack.c.l.b16 %v298
  %v1970 = vunpack.c.l.b16 %v299
  %v1971 = vunpack.c.l.b16 %v300
  %v1972 = vunpack.c.l.b16 %v301
  %v1973 = vunpack.c.l.b16 %v302
  %v1974 = vunpack.c.l.b16 %v303
  %v1975 = vunpack.c.l.b16 %v304
  %v1976 = vunpack.c.l.b16 %v305
  %v1977 = vunpack.c.l.b16 %v306
  %v1978 = vunpack.c.l.b16 %v307
  %v1979 = vunpack.c.l.b16 %v308
  %v1980 = vunpack.c.l.b16 %v309
  %v1981 = vunpack.c.l.b16 %v310
  %v1982 = vunpack.c.l.b16 %v311
  %v1983 = vunpack.c.l.b16 %v312
  %v1984 = vunpack.c.l.b16 %v313
  %v1985 = vunpack.c.l.b16 %v314
  %v1986 = vunpack.c.l.b16 %v315
  %v1987 = vunpack.c.l.b16 %v316
  %v1988 = vunpack.c.l.b16 %v317
  %v1989 = vunpack.c.l.b16 %v318
  %v1990 = vunpack.c.l.b16 %v319
  %v1991 = vunpack.c.l.b16 %v320
  %v1992 = vunpack.c.l.b16 %v321
  %v1993 = vunpack.c.l.b16 %v322
  %v1994 = vunpack.c.l.b16 %v323
  %v1995 = vunpack.c.l.b16 %v324
  %v1996 = vunpack.c.l.b16 %v325
  %v1997 = vunpack.c.l.b16 %v326
  %v1998 = vunpack.c.l.b16 %v327
  %v1999 = vunpack.c.l.b16 %v328
  %v2000 = vunpack.c.l.b16 %v329
  %v2001 = vunpack.c.l.b16 %v330
  %v2002 = vunpack.c.l.b16 %v331
  %v2003 = vunpack.c.l.b16 %v332
  %v2004 = vunpack.c.l.b16 %v333
  %v2005 = vunpack.c.l.b16 %v334
  %v2006 = vunpack.c.l.b16 %v335
  %v2007 = vunpack.c.l.b16 %v336
  %v2008 = vunpack.c.l.b16 %v337
  %v2009 = vunpack.c.l.b16 %v338
  %v2010 = vunpack.c.l.b16 %v339
  %v2011 = vunpack.c.l.b16 %v340
  %v2012 = vunpack.c.l.b16 %v341
  %v2013 = vunpack.c.l.b16 %v342
  %v2014 = vunpack.c.l.b16 %v343
  %v2015 = vunpack.c.l.b16 %v344
  %v2016 = vunpack.c.l.b16 %v345
  %v2017 = vunpack.c.l.b16 %v346
  %v2018 = vunpack.c.l.b16 %v347
  %v2019 = vunpack.c.l.b16 %v348
  %v2020 = vunpack.c.l.b16 %v349
  %v2021 = vunpack.c.l.b16 %v350
  %v2022 = vunpack.c.l.b16 %v351
  %v2023 = vunpack.c.l.b16 %v352
  %v2024 = vunpack.c.l.b16 %v353
  %v2025 = vunpack.c.l.b16 %v354
  %v2026 = vunpack.c.l.b16 %v355
  %v2027 = vunpack.c.l.b16 %v356
  %v2028 = vunpack.c.l.b16 %v357
  %v2029 = vunpack.c.l.b16 %v358
  %v2030 = vunpack.c.l.b16 %v359
  %v2031 = vunpack.c.l.b16 %v360
  %v2032 = vunpack.c.l.b16 %v361
  %v2033 = vunpack.c.l.b16 %v362
  %v2034 = vunpack.c.l.b16 %v363
  %v2035 = vunpack.c.l.b16 %v364
  %v2036 = vunpack.c.l.b16 %v365
  %v2037 = vunpack.c.l.b16 %v366
  %v2038 = vunpack.c.l.b16 %v367
  %v2039 = vunpack.c.l.b16 %v368
  %v2040 = vunpack.c.l.b16 %v369
  %v2041 = vunpack.c.l.b16 %v370
  %v2042 = vunpack.c.l.b16 %v371
  %v2043 = vunpack.c.l.b16 %v372
  %v2044 = vunpack.c.l.b16 %v373
  %v2045 = vunpack.c.l.b16 %v374
  %v2046 = vunpack.c.l.b16 %v375
  %v2047 = vunpack.c.l.b16 %v376
  %v2048 = vunpack.c.l.b16 %v377
  %v2049 = vunpack.c.l.b16 %v378
  %v2050 = vunpack.c.l.b16 %v379
  %v2051 = vunpack.c.l.b16 %v380
  %v2052 = vunpack.c.l.b16 %v381
  %v2053 = vunpack.c.l.b16 %v382
  %v2054 = vunpack.c.l.b16 %v383
  %v2055 = vunpack.c.l.b16 %v384
  %v2056 = vunpack.c.l.b16 %v385
  %v2057 = vunpack.c.l.b16 %v386
  %v2058 = vunpack.c.l.b16 %v387
  %v2059 = vunpack.c.l.b16 %v388
  %v2060 = vunpack.c.l.b16 %v389
  %v2061 = vunpack.c.l.b16 %v390
  %v2062 = vunpack.c.l.b16 %v391
  %v2063 = vunpack.c.l.b16 %v392
  %v2064 = vunpack.c.l.b16 %v393
  %v2065 = vunpack.c.l.b16 %v394
  %v2066 = vunpack.c.l.b16 %v395
  %v2067 = vunpack.c.l.b16 %v396
  %v2068 = vunpack.c.l.b16 %v397
  %v2069 = vunpack.c.l.b16 %v398
  %v2070 = vunpack.c.l.b16 %v399
  %v2071 = vunpack.c.l.b16 %v400
  %v2072 = vunpack.c.l.b16 %v401
  %v2073 = vunpack.c.l.b16 %v402
  %v2074 = vunpack.c.l.b16 %v403
  %v2075 = vunpack.c.l.b16 %v404
  %v2076 = vunpack.c.l.b16 %v405
  %v2077 = vunpack.c.l.b16 %v406
  %v2078 = vunpack.c.l.b16 %v407
  %v2079 = vunpack.c.l.b16 %v408
  %v2080 = vunpack.c.l.b16 %v409
  %v2081 = vunpack.c.l.b16 %v410
  %v2082 = vunpack.c.l.b16 %v411
  %v2083 = vunpack.c.l.b16 %v412
  %v2084 = vunpack.c.l.b16 %v413
  %v2085 = vunpack.c.l.b16 %v414
  %v2086 = vunpack.c.l.b16 %v415
  %v2087 = vunpack.c.l.b16 %v416
  %v2088 = vunpack.c.l.b16 %v417
  %v2089 = vunpack.c.l.b16 %v418
  %v2090 = vunpack.c.l.b16 %v419
  %v2091 = vunpack.c.l.b16 %v420
  %v2092 = vunpack.c.l.b16 %v421
  %v2093 = vunpack.c.l.b16 %v422
  %v2094 = vunpack.c.l.b16 %v423
  %v2095 = vunpack.c.l.b16 %v424
  %v2096 = vunpack.c.l.b16 %v425
  %v2097 = vunpack.c.l.b16 %v426
  %v2098 = vunpack.c.l.b16 %v427
  %v2099 = vunpack.c.l.b16 %v428
  %v2100 = vunpack.c.l.b16 %v429
  %v2101 = vunpack.c.l.b16 %v430
  %v2102 = vunpack.c.l.b16 %v431
  %v2103 = vunpack.c.l.b16 %v432
  %v2104 = vunpack.c.l.b16 %v433
  %v2105 = vunpack.c.l.b16 %v434
  %v2106 = vunpack.c.l.b16 %v435
  %v2107 = vunpack.c.l.b16 %v436
  %v2108 = vunpack.c.l.b16 %v437
  %v2109 = vunpack.c.l.b16 %v438
  %v2110 = vunpack.c.l.b16 %v439
  %v2111 = vunpack.c.l.b16 %v440
  %v2112 = vunpack.c.l.b16 %v441
  %v2113 = vunpack.c.l.b16 %v442
  %v2114 = vunpack.c.l.b16 %v443
  %v2115 = vunpack.c.l.b16 %v444
  %v2116 = vunpack.c.l.b16 %v445
  %v2117 = vunpack.c.l.b16 %v446
  %v2118 = vunpack.c.l.b16 %v447
  %v2119 = vunpack.c.l.b16 %v448
  %v2120 = vunpack.c.l.b16 %v449
  %v2121 = vunpack.c.l.b16 %v450
  %v2122 = vunpack.c.l.b16 %v451
  %v2123 = vunpack.c.l.b16 %v452
  %v2124 = vunpack.c.l.b16 %v453
  %v2125 = vunpack.c.l.b16 %v454
  %v2126 = vunpack.c.l.b16 %v455
  %v2127 = vunpack.c.l.b16 %v456
  %v2128 = vunpack.c.l.b16 %v457
  %v2129 = vunpack.c.l.b16 %v458
  %v2130 = vunpack.c.l.b16 %v459
  %v2131 = vunpack.c.l.b16 %v460
  %v2132 = vunpack.c.l.b16 %v461
  %v2133 = vunpack.c.l.b16 %v462
  %v2134 = vunpack.c.l.b16 %v463
  %v2135 = vunpack.c.l.b16 %v464
  %v2136 = vunpack.c.l.b16 %v465
  %v2137 = vunpack.c.l.b16 %v466
  %v2138 = vunpack.c.l.b16 %v467
  %v2139 = vunpack.c.l.b16 %v468
  %v2140 = vunpack.c.l.b16 %v469
  %v2141 = vunpack.c.l.b16 %v470
  %v2142 = vunpack.c.l.b16 %v471
  %v2143 = vunpack.c.l.b16 %v472
  %v2144 = vunpack.c.l.b16 %v473
  %v2145 = vunpack.c.l.b16 %v474
  %v2146 = vunpack.c.l.b16 %v475
  %v2147 = vunpack.c.l.b16 %v476
  %v2148 = vunpack.c.l.b16 %v477
  %v2149 = vunpack.c.l.b16 %v478
  %v2150 = vunpack.c.l.b16 %v479
  %v2151 = vunpack.c.l.b16 %v480
  %v2152 = vunpack.c.l.b16 %v481
  %v2153 = vunpack.c.l.b16 %v482
  %v2154 = vunpack.c.l.b16 %v483
  %v2155 = vunpack.c.l.b16 %v484
  %v2156 = vunpack.c.l.b16 %v485
  %v2157 = vunpack.c.l.b16 %v486
  %v2158 = vunpack.c.l.b16 %v487
  %v2159 = vunpack.c.l.b16 %v488
  %v2160 = vunpack.c.l.b16 %v489
  %v2161 = vunpack.c.l.b16 %v490
  %v2162 = vunpack.c.l.b16 %v491
  %v2163 = vunpack.c.l.b16 %v492
  %v2164 = vunpack.c.l.b16 %v493
  %v2165 = vunpack.c.l.b16 %v494
  %v2166 = vunpack.c.l.b16 %v495
  %v2167 = vunpack.c.l.b16 %v496
  %v2168 = vunpack.c.l.b16 %v497
  %v2169 = vunpack.c.l.b16 %v498
  %v2170 = vunpack.c.l.b16 %v499
  %v2171 = vunpack.c.l.b16 %v500
  %v2172 = vunpack.c.l.b16 %v501
  %v2173 = vunpack.c.l.b16 %v502
  %v2174 = vunpack.c.l.b16 %v503
  %v2175 = vunpack.c.l.b16 %v504
  %v2176 = vunpack.c.l.b16 %v505
  %v2177 = vunpack.c.l.b16 %v506
  %v2178 = vunpack.c.l.b16 %v507
  %v2179 = vunpack.c.l.b16 %v508
  %v2180 = vunpack.c.l.b16 %v509
  %v2181 = vunpack.c.l.b16 %v510
  %v2182 = vunpack.c.l.b16 %v511
  %v2183 = vunpack.c.l.b16 %v512
  %v2184 = vunpack.c.l.b16 %v513
  %v2185 = vunpack.c.l.b16 %v514
  %v2186 = vunpack.c.l.b16 %v515
  %v2187 = vunpack.c.l.b16 %v516
  %v2188 = vunpack.c.l.b16 %v517
  %v2189 = vunpack.c.l.b16 %v518
  %v2190 = vunpack.c.l.b16 %v519
  %v2191 = vunpack.c.l.b16 %v520
  %v2192 = vunpack.c.l.b16 %v521
  %v2193 = vunpack.c.l.b16 %v522
  %v2194 = vunpack.c.l.b16 %v523
  %v2195 = vunpack.c.l.b16 %v524
  %v2196 = vunpack.c.l.b16 %v525
  %v2197 = vunpack.c.l.b16 %v526
  %v2198 = vunpack.c.l.b16 %v527
  %v2199 = vunpack.c.l.b16 %v528
  %v2200 = vunpack.c.l.b16 %v529
  %v2201 = vunpack.c.l.b16 %v530
  %v2202 = vunpack.c.l.b16 %v531
  %v2203 = vunpack.c.l.b16 %v532
  %v2204 = vunpack.c.l.b16 %v533
  %v2205 = vunpack.c.l.b16 %v534
  %v2206 = vunpack.c.l.b16 %v535
  %v2207 = vunpack.c.l.b16 %v536
  %v2208 = vunpack.c.l.b16 %v537
  %v2209 = vunpack.c.l.b16 %v538
  %v2210 = vunpack.c.l.b16 %v539
  %v2211 = vunpack.c.l.b16 %v540
  %v2212 = vunpack.c.l.b16 %v541
  %v2213 = vunpack.c.l.b16 %v542
  %v2214 = vunpack.c.l.b16 %v543
  %v2215 = vunpack.c.l.b16 %v544
  %v2216 = vunpack.c.l.b16 %v545
  %v2217 = vunpack.c.l.b16 %v546
  %v2218 = vunpack.c.l.b16 %v547
  %v2219 = vunpack.c.l.b16 %v548
  %v2220 = vunpack.c.l.b16 %v549
  %v2221 = vunpack.c.l.b16 %v550
  %v2222 = vunpack.c.l.b16 %v551
  %v2223 = vunpack.c.l.b16 %v552
  %v2224 = vunpack.c.l.b16 %v553
  %v2225 = vunpack.c.l.b16 %v554
  %v2226 = vunpack.c.l.b16 %v555
  %v2227 = vunpack.c.l.b16 %v556
  %v2228 = vunpack.c.l.b16 %v557
  %v2229 = vunpack.c.l.b16 %v558
  %v2230 = vunpack.c.l.b16 %v559
  %v2231 = vunpack.c.l.b16 %v560
  %v2232 = vunpack.c.l.b16 %v561
  %v2233 = vunpack.c.l.b16 %v562
  %v2234 = vunpack.c.l.b16 %v563
  %v2235 = vunpack.c.l.b16 %v564
  %v2236 = vunpack.c.l.b16 %v565
  %v2237 = vunpack.c.l.b16 %v566
  %v2238 = vunpack.c.l.b16 %v567
  %v2239 = vunpack.c.l.b16 %v568
  %v2240 = vunpack.c.l.b16 %v569
  %v2241 = vunpack.c.l.b16 %v570
  %v2242 = vunpack.c.l.b16 %v571
  %v2243 = vunpack.c.l.b16 %v572
  %v2244 = vunpack.c.l.b16 %v573
  %v2245 = vunpack.c.l.b16 %v574
  %v2246 = vunpack.c.l.b16 %v575
  %v2247 = vunpack.c.l.b16 %v576
  %v2248 = vunpack.c.l.b16 %v577
  %v2249 = vunpack.c.l.b16 %v578
  %v2250 = vunpack.c.l.b16 %v579
  %v2251 = vunpack.c.l.b16 %v580
  %v2252 = vunpack.c.l.b16 %v581
  %v2253 = vunpack.c.l.b16 %v582
  %v2254 = vunpack.c.l.b16 %v583
  %v2255 = vunpack.c.l.b16 %v584
  %v2256 = vunpack.c.l.b16 %v585
  %v2257 = vunpack.c.l.b16 %v586
  %v2258 = vunpack.c.l.b16 %v587
  %v2259 = vunpack.c.l.b16 %v588
  %v2260 = vunpack.c.l.b16 %v589
  %v2261 = vunpack.c.l.b16 %v590
  %v2262 = vunpack.c.l.b16 %v591
  %v2263 = vunpack.c.l.b16 %v592
  %v2264 = vunpack.c.l.b16 %v593
  %v2265 = vunpack.c.l.b16 %v594
  %v2266 = vunpack.c.l.b16 %v595
  %v2267 = vunpack.c.l.b16 %v596
  %v2268 = vunpack.c.l.b16 %v597
  %v2269 = vunpack.c.l.b16 %v598
  %v2270 = vunpack.c.l.b16 %v599
  %v2271 = vunpack.c.l.b16 %v600
  %v2272 = vunpack.c.l.b16 %v601
  %v2273 = vunpack.c.l.b16 %v602
  %v2274 = vunpack.c.l.b16 %v603
  %v2275 = vunpack.c.l.b16 %v604
  %v2276 = vunpack.c.l.b16 %v605
  %v2277 = vunpack.c.l.b16 %v606
  %v2278 = vunpack.c.l.b16 %v607
  %v2279 = vunpack.c.l.b16 %v608
  %v2280 = vunpack.c.l.b16 %v609
  %v2281 = vunpack.c.l.b16 %v610
  %v2282 = vunpack.c.l.b16 %v611
  %v2283 = vunpack.c.l.b16 %v612
  %v2284 = vunpack.c.l.b16 %v613
  %v2285 = vunpack.c.l.b16 %v614
  %v2286 = vunpack.c.l.b16 %v615
  %v2287 = vunpack.c.l.b16 %v616
  %v2288 = vunpack.c.l.b16 %v617
  %v2289 = vunpack.c.l.b16 %v618
  %v2290 = vunpack.c.l.b16 %v619
  %v2291 = vunpack.c.l.b16 %v620
  %v2292 = vunpack.c.l.b16 %v621
  %v2293 = vunpack.c.l.b16 %v622
  %v2294 = vunpack.c.l.b16 %v623
  %v2295 = vunpack.c.l.b16 %v624
  %v2296 = vunpack.c.l.b16 %v625
  %v2297 = vunpack.c.l.b16 %v626
  %v2298 = vunpack.c.l.b16 %v627
  %v2299 = vunpack.c.l.b16 %v628
  %v2300 = vunpack.c.l.b16 %v629
  %v2301 = vunpack.c.l.b16 %v630
  %v2302 = vunpack.c.l.b16 %v631
  %v2303 = vunpack.c.l.b16 %v632
  %v2304 = vunpack.c.l.b16 %v633
  %v2305 = vunpack.c.l.b16 %v634
  %v2306 = vunpack.c.l.b16 %v635
  %v2307 = vunpack.c.l.b16 %v636
  %v2308 = vunpack.c.l.b16 %v637
  %v2309 = vunpack.c.l.b16 %v638
  %v2310 = vunpack.c.l.b16 %v639
  %v2311 = vunpack.c.l.b16 %v640
  %v2312 = vunpack.c.l.b16 %v641
  %v2313 = vunpack.c.l.b16 %v642
  %v2314 = vunpack.c.l.b16 %v643
  %v2315 = vunpack.c.l.b16 %v644
  %v2316 = vunpack.c.l.b16 %v645
  %v2317 = vunpack.c.l.b16 %v646
  %v2318 = vunpack.c.l.b16 %v647
  %v2319 = vunpack.c.l.b16 %v648
  %v2320 = vunpack.c.l.b16 %v649
  %v2321 = vunpack.c.l.b16 %v650
  %v2322 = vunpack.c.l.b16 %v651
  %v2323 = vunpack.c.l.b16 %v652
  %v2324 = vunpack.c.l.b16 %v653
  %v2325 = vunpack.c.l.b16 %v654
  %v2326 = vpack.c.b16 %v1815, %v1814
  %v2327 = vpack.c.b16 %v1817, %v1816
  %v2328 = vpack.c.b16 %v1819, %v1818
  %v2329 = vpack.c.b16 %v1821, %v1820
  %v2330 = vpack.c.b16 %v1823, %v1822
  %v2331 = vpack.c.b16 %v1825, %v1824
  %v2332 = vpack.c.b16 %v1827, %v1826
  %v2333 = vpack.c.b16 %v1829, %v1828
  %v2334 = vpack.c.b16 %v1831, %v1830
  %v2335 = vpack.c.b16 %v1833, %v1832
  %v2336 = vpack.c.b16 %v1835, %v1834
  %v2337 = vpack.c.b16 %v1837, %v1836
  %v2338 = vpack.c.b16 %v1839, %v1838
  %v2339 = vpack.c.b16 %v1841, %v1840
  %v2340 = vpack.c.b16 %v1843, %v1842
  %v2341 = vpack.c.b16 %v1845, %v1844
  %v2342 = vpack.c.b16 %v1847, %v1846
  %v2343 = vpack.c.b16 %v1849, %v1848
  %v2344 = vpack.c.b16 %v1851, %v1850
  %v2345 = vpack.c.b16 %v1853, %v1852
  %v2346 = vpack.c.b16 %v1855, %v1854
  %v2347 = vpack.c.b16 %v1857, %v1856
  %v2348 = vpack.c.b16 %v1859, %v1858
  %v2349 = vpack.c.b16 %v1861, %v1860
  %v2350 = vpack.c.b16 %v1863, %v1862
  %v2351 = vpack.c.b16 %v1865, %v1864
  %v2352 = vpack.c.b16 %v1867, %v1866
  %v2353 = vpack.c.b16 %v1869, %v1868
  %v2354 = vpack.c.b16 %v1871, %v1870
  %v2355 = vpack.c.b16 %v1873, %v1872
  %v2356 = vpack.c.b16 %v1875, %v1874
  %v2357 = vpack.c.b16 %v1877, %v1876
  %v2358 = vpack.c.b16 %v1879, %v1878
  %v2359 = vpack.c.b16 %v1881, %v1880
  %v2360 = vpack.c.b16 %v1883, %v1882
  %v2361 = vpack.c.b16 %v1885, %v1884
  %v2362 = vpack.c.b16 %v1887, %v1886
  %v2363 = vpack.c.b16 %v1889, %v1888
  %v2364 = vpack.c.b16 %v1891, %v1890
  %v2365 = vpack.c.b16 %v1893, %v1892
  %v2366 = vpack.c.b16 %v1895, %v1894
  %v2367 = vpack.c.b16 %v1897, %v1896
  %v2368 = vpack.c.b16 %v1899, %v1898
  %v2369 = vpack.c.b16 %v1901, %v1900
  %v2370 = vpack.c.b16 %v1903, %v1902
  %v2371 = vpack.c.b16 %v1905, %v1904
  %v2372 = vpack.c.b16 %v1907, %v1906
  %v2373 = vpack.c.b16 %v1909, %v1908
  %v2374 = vpack.c.b16 %v1911, %v1910
  %v2375 = vpack.c.b16 %v1913, %v1912
  %v2376 = vpack.c.b16 %v1915, %v1914
  %v2377 = vpack.c.b16 %v1917, %v1916
  %v2378 = vpack.c.b16 %v1919, %v1918
  %v2379 = vpack.c.b16 %v1921, %v1920
  %v2380 = vpack.c.b16 %v1923, %v1922
  %v2381 = vpack.c.b16 %v1925, %v1924
  %v2382 = vpack.c.b16 %v1927, %v1926
  %v2383 = vpack.c.b16 %v1929, %v1928
  %v2384 = vpack.c.b16 %v1931, %v1930
  %v2385 = vpack.c.b16 %v1933, %v1932
  %v2386 = vpack.c.b16 %v1935, %v1934
  %v2387 = vpack.c.b16 %v1937, %v1936
  %v2388 = vpack.c.b16 %v1939, %v1938
  %v2389 = vpack.c.b16 %v1941, %v1940
  %v2390 = vpack.c.b16 %v1943, %v1942
  %v2391 = vpack.c.b16 %v1945, %v1944
  %v2392 = vpack.c.b16 %v1947, %v1946
  %v2393 = vpack.c.b16 %v1949, %v1948
  %v2394 = vpack.c.b16 %v1951, %v1950
  %v2395 = vpack.c.b16 %v1953, %v1952
  %v2396 = vpack.c.b16 %v1955, %v1954
  %v2397 = vpack.c.b16 %v1957, %v1956
  %v2398 = vpack.c.b16 %v1959, %v1958
  %v2399 = vpack.c.b16 %v1961, %v1960
  %v2400 = vpack.c.b16 %v1963, %v1962
  %v2401 = vpack.c.b16 %v1965, %v1964
  %v2402 = vpack.c.b16 %v1967, %v1966
  %v2403 = vpack.c.b16 %v1969, %v1968
  %v2404 = vpack.c.b16 %v1971, %v1970
  %v2405 = vpack.c.b16 %v1973, %v1972
  %v2406 = vpack.c.b16 %v1975, %v1974
  %v2407 = vpack.c.b16 %v1977, %v1976
  %v2408 = vpack.c.b16 %v1979, %v1978
  %v2409 = vpack.c.b16 %v1981, %v1980
  %v2410 = vpack.c.b16 %v1983, %v1982
  %v2411 = vpack.c.b16 %v1985, %v1984
  %v2412 = vpack.c.b16 %v1987, %v1986
  %v2413 = vpack.c.b16 %v1989, %v1988
  %v2414 = vpack.c.b16 %v1991, %v1990
  %v2415 = vpack.c.b16 %v1993, %v1992
  %v2416 = vpack.c.b16 %v1995, %v1994
  %v2417 = vpack.c.b16 %v1997, %v1996
  %v2418 = vpack.c.b16 %v1999, %v1998
  %v2419 = vpack.c.b16 %v2001, %v2000
  %v2420 = vpack.c.b16 %v2003, %v2002
  %v2421 = vpack.c.b16 %v2005, %v2004
  %v2422 = vpack.c.b16 %v2007, %v2006
  %v2423 = vpack.c.b16 %v2009, %v2008
  %v2424 = vpack.c.b16 %v2011, %v2010
  %v2425 = vpack.c.b16 %v2013, %v2012
  %v2426 = vpack.c.b16 %v2015, %v2014
  %v2427 = vpack.c.b16 %v2017, %v2016
  %v2428 = vpack.c.b16 %v2019, %v2018
  %v2429 = vpack.c.b16 %v2021, %v2020
  %v2430 = vpack.c.b16 %v2023, %v2022
  %v2431 = vpack.c.b16 %v2025, %v2024
  %v2432 = vpack.c.b16 %v2027, %v2026
  %v2433 = vpack.c.b16 %v2029, %v2028
  %v2434 = vpack.c.b16 %v2031, %v2030
  %v2435 = vpack.c.b16 %v2033, %v2032
  %v2436 = vpack.c.b16 %v2035, %v2034
  %v2437 = vpack.c.b16 %v2037, %v2036
  %v2438 = vpack.c.b16 %v2039, %v2038
  %v2439 = vpack.c.b16 %v2041, %v2040
  %v2440 = vpack.c.b16 %v2043, %v2042
  %v2441 = vpack.c.b16 %v2045, %v2044
  %v2442 = vpack.c.b16 %v2047, %v2046
  %v2443 = vpack.c.b16 %v2049, %v2048
  %v2444 = vpack.c.b16 %v2051, %v2050
  %v2445 = vpack.c.b16 %v2053, %v2052
  %v2446 = vpack.c.b16 %v2055, %v2054
  %v2447 = vpack.c.b16 %v2057, %v2056
  %v2448 = vpack.c.b16 %v2059, %v2058
  %v2449 = vpack.c.b16 %v2061, %v2060
  %v2450 = vpack.c.b16 %v2063, %v2062
  %v2451 = vpack.c.b16 %v2065, %v2064
  %v2452 = vpack.c.b16 %v2067, %v2066
  %v2453 = vpack.c.b16 %v2069, %v2068
  %v2454 = vpack.c.b16 %v2071, %v2070
  %v2455 = vpack.c.b16 %v2073, %v2072
  %v2456 = vpack.c.b16 %v2075, %v2074
  %v2457 = vpack.c.b16 %v2077, %v2076
  %v2458 = vpack.c.b16 %v2079, %v2078
  %v2459 = vpack.c.b16 %v2081, %v2080
  %v2460 = vpack.c.b16 %v2083, %v2082
  %v2461 = vpack.c.b16 %v2085, %v2084
  %v2462 = vpack.c.b16 %v2087, %v2086
  %v2463 = vpack.c.b16 %v2089, %v2088
  %v2464 = vpack.c.b16 %v2091, %v2090
  %v2465 = vpack.c.b16 %v2093, %v2092
  %v2466 = vpack.c.b16 %v2095, %v2094
  %v2467 = vpack.c.b16 %v2097, %v2096
  %v2468 = vpack.c.b16 %v2099, %v2098
  %v2469 = vpack.c.b16 %v2101, %v2100
  %v2470 = vpack.c.b16 %v2103, %v2102
  %v2471 = vpack.c.b16 %v2105, %v2104
  %v2472 = vpack.c.b16 %v2107, %v2106
  %v2473 = vpack.c.b16 %v2109, %v2108
  %v2474 = vpack.c.b16 %v2111, %v2110
  %v2475 = vpack.c.b16 %v2113, %v2112
  %v2476 = vpack.c.b16 %v2115, %v2114
  %v2477 = vpack.c.b16 %v2117, %v2116
  %v2478 = vpack.c.b16 %v2119, %v2118
  %v2479 = vpack.c.b16 %v2121, %v2120
  %v2480 = vpack.c.b16 %v2123, %v2122
  %v2481 = vpack.c.b16 %v2125, %v2124
  %v2482 = vpack.c.b16 %v2127, %v2126
  %v2483 = vpack.c.b16 %v2129, %v2128
  %v2484 = vpack.c.b16 %v2131, %v2130
  %v2485 = vpack.c.b16 %v2133, %v2132
  %v2486 = vpack.c.b16 %v2135, %v2134
  %v2487 = vpack.c.b16 %v2137, %v2136
  %v2488 = vpack.c.b16 %v2139, %v2138
  %v2489 = vpack.c.b16 %v2141, %v2140
  %v2490 = vpack.c.b16 %v2143, %v2142
  %v2491 = vpack.c.b16 %v2145, %v2144
  %v2492 = vpack.c.b16 %v2147, %v2146
  %v2493 = vpack.c.b16 %v2149, %v2148
  %v2494 = vpack.c.b16 %v2151, %v2150
  %v2495 = vpack.c.b16 %v2153, %v2152
  %v2496 = vpack.c.b16 %v2155, %v2154
  %v2497 = vpack.c.b16 %v2157, %v2156
  %v2498 = vpack.c.b16 %v2159, %v2158
  %v2499 = vpack.c.b16 %v2161, %v2160
  %v2500 = vpack.c.b16 %v2163, %v2162
  %v2501 = vpack.c.b16 %v2165, %v2164
  %v2502 = vpack.c.b16 %v2167, %v2166
  %v2503 = vpack.c.b16 %v2169, %v2168
  %v2504 = vpack.c.b16 %v2171, %v2170
  %v2505 = vpack.c.b16 %v2173, %v2172
  %v2506 = vpack.c.b16 %v2175, %v2174
  %v2507 = vpack.c.b16 %v2177, %v2176
  %v2508 = vpack.c.b16 %v2179, %v2178
  %v2509 = vpack.c.b16 %v2181, %v2180
  %v2510 = vpack.c.b16 %v2183, %v2182
  %v2511 = vpack.c.b16 %v2185, %v2184
  %v2512 = vpack.c.b16 %v2187, %v2186
  %v2513 = vpack.c.b16 %v2189, %v2188
  %v2514 = vpack.c.b16 %v2191, %v2190
  %v2515 = vpack.c.b16 %v2193, %v2192
  %v2516 = vpack.c.b16 %v2195, %v2194
  %v2517 = vpack.c.b16 %v2197, %v2196
  %v2518 = vpack.c.b16 %v2199, %v2198
  %v2519 = vpack.c.b16 %v2201, %v2200
  %v2520 = vpack.c.b16 %v2203, %v2202
  %v2521 = vpack.c.b16 %v2205, %v2204
  %v2522 = vpack.c.b16 %v2207, %v2206
  %v2523 = vpack.c.b16 %v2209, %v2208
  %v2524 = vpack.c.b16 %v2211, %v2210
  %v2525 = vpack.c.b16 %v2213, %v2212
  %v2526 = vpack.c.b16 %v2215, %v2214
  %v2527 = vpack.c.b16 %v2217, %v2216
  %v2528 = vpack.c.b16 %v2219, %v2218
  %v2529 = vpack.c.b16 %v2221, %v2220
  %v2530 = vpack.c.b16 %v2223, %v2222
  %v2531 = vpack.c.b16 %v2225, %v2224
  %v2532 = vpack.c.b16 %v2227, %v2226
  %v2533 = vpack.c.b16 %v2229, %v2228
  %v2534 = vpack.c.b16 %v2231, %v2230
  %v2535 = vpack.c.b16 %v2233, %v2232
  %v2536 = vpack.c.b16 %v2235, %v2234
  %v2537 = vpack.c.b16 %v2237, %v2236
  %v2538 = vpack.c.b16 %v2239, %v2238
  %v2539 = vpack.c.b16 %v2241, %v2240
  %v2540 = vpack.c.b16 %v2243, %v2242
  %v2541 = vpack.c.b16 %v2245, %v2244
  %v2542 = vpack.c.b16 %v2247, %v2246
  %v2543 = vpack.c.b16 %v2249, %v2248
  %v2544 = vpack.c.b16 %v2251, %v2250
  %v2545 = vpack.c.b16 %v2253, %v2252
  %v2546 = vpack.c.b16 %v2255, %v2254
  %v2547 = vpack.c.b16 %v2257, %v2256
  %v2548 = vpack.c.b16 %v2259, %v2258
  %v2549 = vpack.c.b16 %v2261, %v2260
  %v2550 = vpack.c.b16 %v2263, %v2262
  %v2551 = vpack.c.b16 %v2265, %v2264
  %v2552 = vpack.c.b16 %v2267, %v2266
  %v2553 = vpack.c.b16 %v2269, %v2268
  %v2554 = vpack.c.b16 %v2271, %v2270
  %v2555 = vpack.c.b16 %v2273, %v2272
  %v2556 = vpack.c.b16 %v2275, %v2274
  %v2557 = vpack.c.b16 %v2277, %v2276
  %v2558 = vpack.c.b16 %v2279, %v2278
  %v2559 = vpack.c.b16 %v2281, %v2280
  %v2560 = vpack.c.b16 %v2283, %v2282
  %v2561 = vpack.c.b16 %v2285, %v2284
  %v2562 = vpack.c.b16 %v2287, %v2286
  %v2563 = vpack.c.b16 %v2289, %v2288
  %v2564 = vpack.c.b16 %v2291, %v2290
  %v2565 = vpack.c.b16 %v2293, %v2292
  %v2566 = vpack.c.b16 %v2295, %v2294
  %v2567 = vpack.c.b16 %v2297, %v2296
  %v2568 = vpack.c.b16 %v2299, %v2298
  %v2569 = vpack.c.b16 %v2301, %v2300
  %v2570 = vpack.c.b16 %v2303, %v2302
  %v2571 = vpack.c.b16 %v2305, %v2304
  %v2572 = vpack.c.b16 %v2307, %v2306
  %v2573 = vpack.c.b16 %v2309, %v2308
  %v2574 = vpack.c.b16 %v2311, %v2310
  %v2575 = vpack.c.b16 %v2313, %v2312
  %v2576 = vpack.c.b16 %v2315, %v2314
  %v2577 = vpack.c.b16 %v2317, %v2316
  %v2578 = vpack.c.b16 %v2319, %v2318
  %v2579 = vpack.c.b16 %v2321, %v2320
  %v2580 = vpack.c.b16 %v2323, %v2322
  %v2581 = vpack.c.b16 %v2325, %v2324
  %2838 = vmatprep.subr.bf16.mxu0 0
  %2839 = vmatpush1.bf16.msra.mxu0 %v2326
  %2840 = vmatprep.subr.bf16.mxu0 0
  %2841 = vmatpush1.bf16.msra.mxu0 %v2327
  %2842 = vmatprep.subr.bf16.mxu0 0
  %2843 = vmatpush1.bf16.msra.mxu0 %v2328
  %2844 = vmatprep.subr.bf16.mxu0 0
  %2845 = vmatpush1.bf16.msra.mxu0 %v2329
  %2846 = vmatprep.subr.bf16.mxu0 0
  %2847 = vmatpush1.bf16.msra.mxu0 %v2330
  %2848 = vmatprep.subr.bf16.mxu0 0
  %2849 = vmatpush1.bf16.msra.mxu0 %v2331
  %2850 = vmatprep.subr.bf16.mxu0 0
  %2851 = vmatpush1.bf16.msra.mxu0 %v2332
  %2852 = vmatprep.subr.bf16.mxu0 0
  %2853 = vmatpush1.bf16.msra.mxu0 %v2333
  %2854 = vmatprep.subr.bf16.mxu0 0
  %2855 = vmatpush1.bf16.msra.mxu0 %v2334
  %2856 = vmatprep.subr.bf16.mxu0 0
  %2857 = vmatpush1.bf16.msra.mxu0 %v2335
  %2858 = vmatprep.subr.bf16.mxu0 0
  %2859 = vmatpush1.bf16.msra.mxu0 %v2336
  %2860 = vmatprep.subr.bf16.mxu0 0
  %2861 = vmatpush1.bf16.msra.mxu0 %v2337
  %2862 = vmatprep.subr.bf16.mxu0 0
  %2863 = vmatpush1.bf16.msra.mxu0 %v2338
  %2864 = vmatprep.subr.bf16.mxu0 0
  %2865 = vmatpush1.bf16.msra.mxu0 %v2339
  %2866 = vmatprep.subr.bf16.mxu0 0
  %2867 = vmatpush1.bf16.msra.mxu0 %v2340
  %2868 = vmatprep.subr.bf16.mxu0 0
  %2869 = vmatpush1.bf16.msra.mxu0 %v2341
  %2870 = vmatprep.mubr.bf16.mxu0 %v1047
  %2871 = vmatmul.mubr.bf16.gmra.mrb[0].mxu0 %v1046
  %v2872 = vpop.f32.mrb[0].mxu0
  %v2873 = vadd.f32 %v660, %v2872
  %v2874 = vpop.f32.mrb[0].mxu0
  %v2875 = vpop.f32.mrb[0].mxu0
  %v2876 = vadd.f32 %v660, %v2875
  %v2877 = vpop.f32.mrb[0].mxu0
  %2878 = vmatprep.mubr.bf16.mxu0 %v1079
  %2879 = vmatmul.mubr.bf16.gmra.mrb[0].mxu0 %v1078
  %v2880 = vpop.f32.mrb[0].mxu0
  %v2881 = vadd.f32 %v660, %v2880
  %v2882 = vpop.f32.mrb[0].mxu0
  %v2883 = vpop.f32.mrb[0].mxu0
  %v2884 = vadd.f32 %v660, %v2883
  %v2885 = vpop.f32.mrb[0].mxu0
  %2886 = vmatprep.mubr.bf16.mxu0 %v1111
  %2887 = vmatmul.mubr.bf16.gmra.mrb[0].mxu0 %v1110
  %v2888 = vpop.f32.mrb[0].mxu0
  %v2889 = vadd.f32 %v660, %v2888
  %v2890 = vpop.f32.mrb[0].mxu0
  %v2891 = vpop.f32.mrb[0].mxu0
  %v2892 = vadd.f32 %v660, %v2891
  %v2893 = vpop.f32.mrb[0].mxu0
  %2894 = vmatprep.mubr.bf16.mxu0 %v1143
  %2895 = vmatmul.mubr.bf16.gmra.mrb[0].mxu0 %v1142
  %v2896 = vpop.f32.mrb[0].mxu0
  %v2897 = vadd.f32 %v660, %v2896
  %v2898 = vpop.f32.mrb[0].mxu0
  %v2899 = vpop.f32.mrb[0].mxu0
  %v2900 = vadd.f32 %v660, %v2899
  %v2901 = vpop.f32.mrb[0].mxu0
  %2902 = vdwg.mxu0
  %2903 = vmatprep.subr.bf16.mxu0 0
  %2904 = vmatpush1.bf16.msra.mxu0 %v2342
  %2905 = vmatprep.subr.bf16.mxu0 0
  %2906 = vmatpush1.bf16.msra.mxu0 %v2343
  %2907 = vmatprep.subr.bf16.mxu0 0
  %2908 = vmatpush1.bf16.msra.mxu0 %v2344
  %2909 = vmatprep.subr.bf16.mxu0 0
  %2910 = vmatpush1.bf16.msra.mxu0 %v2345
  %2911 = vmatprep.subr.bf16.mxu0 0
  %2912 = vmatpush1.bf16.msra.mxu0 %v2346
  %2913 = vmatprep.subr.bf16.mxu0 0
  %2914 = vmatpush1.bf16.msra.mxu0 %v2347
  %2915 = vmatprep.subr.bf16.mxu0 0
  %2916 = vmatpush1.bf16.msra.mxu0 %v2348
  %2917 = vmatprep.subr.bf16.mxu0 0
  %2918 = vmatpush1.bf16.msra.mxu0 %v2349
  %2919 = vmatprep.subr.bf16.mxu0 0
  %2920 = vmatpush1.bf16.msra.mxu0 %v2350
  %2921 = vmatprep.subr.bf16.mxu0 0
  %2922 = vmatpush1.bf16.msra.mxu0 %v2351
  %2923 = vmatprep.subr.bf16.mxu0 0
  %2924 = vmatpush1.bf16.msra.mxu0 %v2352
  %2925 = vmatprep.subr.bf16.mxu0 0
  %2926 = vmatpush1.bf16.msra.mxu0 %v2353
  %2927 = vmatprep.subr.bf16.mxu0 0
  %2928 = vmatpush1.bf16.msra.mxu0 %v2354
  %2929 = vmatprep.subr.bf16.mxu0 0
  %2930 = vmatpush1.bf16.msra.mxu0 %v2355
  %2931 = vmatprep.subr.bf16.mxu0 0
  %2932 = vmatpush1.bf16.msra.mxu0 %v2356
  %2933 = vmatprep.subr.bf16.mxu0 0
  %2934 = vmatpush1.bf16.msra.mxu0 %v2357
  %2935 = vmatprep.mubr.bf16.mxu0 %v1049
  %2936 = vmatmul.mubr.bf16.gmra.mrb[0].mxu0 %v1048
  %v2937 = vpop.f32.mrb[0].mxu0
  %v2938 = vadd.f32 %v2873, %v2937
  %v2939 = vpop.f32.mrb[0].mxu0
  %v2940 = vpop.f32.mrb[0].mxu0
  %v2941 = vadd.f32 %v2876, %v2940
  %v2942 = vpop.f32.mrb[0].mxu0
  %2943 = vmatprep.mubr.bf16.mxu0 %v1081
  %2944 = vmatmul.mubr.bf16.gmra.mrb[0].mxu0 %v1080
  %v2945 = vpop.f32.mrb[0].mxu0
  %v2946 = vadd.f32 %v2881, %v2945
  %v2947 = vpop.f32.mrb[0].mxu0
  %v2948 = vpop.f32.mrb[0].mxu0
  %v2949 = vadd.f32 %v2884, %v2948
  %v2950 = vpop.f32.mrb[0].mxu0
  %2951 = vmatprep.mubr.bf16.mxu0 %v1113
  %2952 = vmatmul.mubr.bf16.gmra.mrb[0].mxu0 %v1112
  %v2953 = vpop.f32.mrb[0].mxu0
  %v2954 = vadd.f32 %v2889, %v2953
  %v2955 = vpop.f32.mrb[0].mxu0
  %v2956 = vpop.f32.mrb[0].mxu0
  %v2957 = vadd.f32 %v2892, %v2956
  %v2958 = vpop.f32.mrb[0].mxu0
  %2959 = vmatprep.mubr.bf16.mxu0 %v1145
  %2960 = vmatmul.mubr.bf16.gmra.mrb[0].mxu0 %v1144
  %v2961 = vpop.f32.mrb[0].mxu0
  %v2962 = vadd.f32 %v2897, %v2961
  %v2963 = vpop.f32.mrb[0].mxu0
  %v2964 = vpop.f32.mrb[0].mxu0
  %v2965 = vadd.f32 %v2900, %v2964
  %v2966 = vpop.f32.mrb[0].mxu0
  %2967 = vdwg.mxu0
  %2968 = vmatprep.subr.bf16.mxu0 0
  %2969 = vmatpush1.bf16.msra.mxu0 %v2358
  %2970 = vmatprep.subr.bf16.mxu0 0
  %2971 = vmatpush1.bf16.msra.mxu0 %v2359
  %2972 = vmatprep.subr.bf16.mxu0 0
  %2973 = vmatpush1.bf16.msra.mxu0 %v2360
  %2974 = vmatprep.subr.bf16.mxu0 0
  %2975 = vmatpush1.bf16.msra.mxu0 %v2361
  %2976 = vmatprep.subr.bf16.mxu0 0
  %2977 = vmatpush1.bf16.msra.mxu0 %v2362
  %2978 = vmatprep.subr.bf16.mxu0 0
  %2979 = vmatpush1.bf16.msra.mxu0 %v2363
  %2980 = vmatprep.subr.bf16.mxu0 0
  %2981 = vmatpush1.bf16.msra.mxu0 %v2364
  %2982 = vmatprep.subr.bf16.mxu0 0
  %2983 = vmatpush1.bf16.msra.mxu0 %v2365
  %2984 = vmatprep.subr.bf16.mxu0 0
  %2985 = vmatpush1.bf16.msra.mxu0 %v2366
  %2986 = vmatprep.subr.bf16.mxu0 0
  %2987 = vmatpush1.bf16.msra.mxu0 %v2367
  %2988 = vmatprep.subr.bf16.mxu0 0
  %2989 = vmatpush1.bf16.msra.mxu0 %v2368
  %2990 = vmatprep.subr.bf16.mxu0 0
  %2991 = vmatpush1.bf16.msra.mxu0 %v2369
  %2992 = vmatprep.subr.bf16.mxu0 0
  %2993 = vmatpush1.bf16.msra.mxu0 %v2370
  %2994 = vmatprep.subr.bf16.mxu0 0
  %2995 = vmatpush1.bf16.msra.mxu0 %v2371
  %2996 = vmatprep.subr.bf16.mxu0 0
  %2997 = vmatpush1.bf16.msra.mxu0 %v2372
  %2998 = vmatprep.subr.bf16.mxu0 0
  %2999 = vmatpush1.bf16.msra.mxu0 %v2373
  %3000 = vmatprep.mubr.bf16.mxu0 %v1051
  %3001 = vmatmul.mubr.bf16.gmra.mrb[0].mxu0 %v1050
  %v3002 = vpop.f32.mrb[0].mxu0
  %v3003 = vadd.f32 %v2938, %v3002
  %v3004 = vpop.f32.mrb[0].mxu0
  %v3005 = vpop.f32.mrb[0].mxu0
  %v3006 = vadd.f32 %v2941, %v3005
  %v3007 = vpop.f32.mrb[0].mxu0
  %3008 = vmatprep.mubr.bf16.mxu0 %v1083
  %3009 = vmatmul.mubr.bf16.gmra.mrb[0].mxu0 %v1082
  %v3010 = vpop.f32.mrb[0].mxu0
  %v3011 = vadd.f32 %v2946, %v3010
  %v3012 = vpop.f32.mrb[0].mxu0
  %v3013 = vpop.f32.mrb[0].mxu0
  %v3014 = vadd.f32 %v2949, %v3013
  %v3015 = vpop.f32.mrb[0].mxu0
  %3016 = vmatprep.mubr.bf16.mxu0 %v1115
  %3017 = vmatmul.mubr.bf16.gmra.mrb[0].mxu0 %v1114
  %v3018 = vpop.f32.mrb[0].mxu0
  %v3019 = vadd.f32 %v2954, %v3018
  %v3020 = vpop.f32.mrb[0].mxu0
  %v3021 = vpop.f32.mrb[0].mxu0
  %v3022 = vadd.f32 %v2957, %v3021
  %v3023 = vpop.f32.mrb[0].mxu0
  %3024 = vmatprep.mubr.bf16.mxu0 %v1147
  %3025 = vmatmul.mubr.bf16.gmra.mrb[0].mxu0 %v1146
  %v3026 = vpop.f32.mrb[0].mxu0
  %v3027 = vadd.f32 %v2962, %v3026
  %v3028 = vpop.f32.mrb[0].mxu0
  %v3029 = vpop.f32.mrb[0].mxu0
  %v3030 = vadd.f32 %v2965, %v3029
  %v3031 = vpop.f32.mrb[0].mxu0
  %3032 = vdwg.mxu0
  %3033 = vmatprep.subr.bf16.mxu0 0
  %3034 = vmatpush1.bf16.msra.mxu0 %v2374
  %3035 = vmatprep.subr.bf16.mxu0 0
  %3036 = vmatpush1.bf16.msra.mxu0 %v2375
  %3037 = vmatprep.subr.bf16.mxu0 0
  %3038 = vmatpush1.bf16.msra.mxu0 %v2376
  %3039 = vmatprep.subr.bf16.mxu0 0
  %3040 = vmatpush1.bf16.msra.mxu0 %v2377
  %3041 = vmatprep.subr.bf16.mxu0 0
  %3042 = vmatpush1.bf16.msra.mxu0 %v2378
  %3043 = vmatprep.subr.bf16.mxu0 0
  %3044 = vmatpush1.bf16.msra.mxu0 %v2379
  %3045 = vmatprep.subr.bf16.mxu0 0
  %3046 = vmatpush1.bf16.msra.mxu0 %v2380
  %3047 = vmatprep.subr.bf16.mxu0 0
  %3048 = vmatpush1.bf16.msra.mxu0 %v2381
  %3049 = vmatprep.subr.bf16.mxu0 0
  %3050 = vmatpush1.bf16.msra.mxu0 %v2382
  %3051 = vmatprep.subr.bf16.mxu0 0
  %3052 = vmatpush1.bf16.msra.mxu0 %v2383
  %3053 = vmatprep.subr.bf16.mxu0 0
  %3054 = vmatpush1.bf16.msra.mxu0 %v2384
  %3055 = vmatprep.subr.bf16.mxu0 0
  %3056 = vmatpush1.bf16.msra.mxu0 %v2385
  %3057 = vmatprep.subr.bf16.mxu0 0
  %3058 = vmatpush1.bf16.msra.mxu0 %v2386
  %3059 = vmatprep.subr.bf16.mxu0 0
  %3060 = vmatpush1.bf16.msra.mxu0 %v2387
  %3061 = vmatprep.subr.bf16.mxu0 0
  %3062 = vmatpush1.bf16.msra.mxu0 %v2388
  %3063 = vmatprep.subr.bf16.mxu0 0
  %3064 = vmatpush1.bf16.msra.mxu0 %v2389
  %3065 = vmatprep.mubr.bf16.mxu0 %v1053
  %3066 = vmatmul.mubr.bf16.gmra.mrb[0].mxu0 %v1052
  %v3067 = vpop.f32.mrb[0].mxu0
  %v3068 = vadd.f32 %v3003, %v3067
  %v3069 = vpop.f32.mrb[0].mxu0
  %v3070 = vpop.f32.mrb[0].mxu0
  %v3071 = vadd.f32 %v3006, %v3070
  %v3072 = vpop.f32.mrb[0].mxu0
  %3073 = vmatprep.mubr.bf16.mxu0 %v1085
  %3074 = vmatmul.mubr.bf16.gmra.mrb[0].mxu0 %v1084
  %v3075 = vpop.f32.mrb[0].mxu0
  %v3076 = vadd.f32 %v3011, %v3075
  %v3077 = vpop.f32.mrb[0].mxu0
  %v3078 = vpop.f32.mrb[0].mxu0
  %v3079 = vadd.f32 %v3014, %v3078
  %v3080 = vpop.f32.mrb[0].mxu0
  %3081 = vmatprep.mubr.bf16.mxu0 %v1117
  %3082 = vmatmul.mubr.bf16.gmra.mrb[0].mxu0 %v1116
  %v3083 = vpop.f32.mrb[0].mxu0
  %v3084 = vadd.f32 %v3019, %v3083
  %v3085 = vpop.f32.mrb[0].mxu0
  %v3086 = vpop.f32.mrb[0].mxu0
  %v3087 = vadd.f32 %v3022, %v3086
  %v3088 = vpop.f32.mrb[0].mxu0
  %3089 = vmatprep.mubr.bf16.mxu0 %v1149
  %3090 = vmatmul.mubr.bf16.gmra.mrb[0].mxu0 %v1148
  %v3091 = vpop.f32.mrb[0].mxu0
  %v3092 = vadd.f32 %v3027, %v3091
  %v3093 = vpop.f32.mrb[0].mxu0
  %v3094 = vpop.f32.mrb[0].mxu0
  %v3095 = vadd.f32 %v3030, %v3094
  %v3096 = vpop.f32.mrb[0].mxu0
  %3097 = vdwg.mxu0
  %3098 = vmatprep.subr.bf16.mxu0 0
  %3099 = vmatpush1.bf16.msra.mxu0 %v2390
  %3100 = vmatprep.subr.bf16.mxu0 0
  %3101 = vmatpush1.bf16.msra.mxu0 %v2391
  %3102 = vmatprep.subr.bf16.mxu0 0
  %3103 = vmatpush1.bf16.msra.mxu0 %v2392
  %3104 = vmatprep.subr.bf16.mxu0 0
  %3105 = vmatpush1.bf16.msra.mxu0 %v2393
  %3106 = vmatprep.subr.bf16.mxu0 0
  %3107 = vmatpush1.bf16.msra.mxu0 %v2394
  %3108 = vmatprep.subr.bf16.mxu0 0
  %3109 = vmatpush1.bf16.msra.mxu0 %v2395
  %3110 = vmatprep.subr.bf16.mxu0 0
  %3111 = vmatpush1.bf16.msra.mxu0 %v2396
  %3112 = vmatprep.subr.bf16.mxu0 0
  %3113 = vmatpush1.bf16.msra.mxu0 %v2397
  %3114 = vmatprep.subr.bf16.mxu0 0
  %3115 = vmatpush1.bf16.msra.mxu0 %v2398
  %3116 = vmatprep.subr.bf16.mxu0 0
  %3117 = vmatpush1.bf16.msra.mxu0 %v2399
  %3118 = vmatprep.subr.bf16.mxu0 0
  %3119 = vmatpush1.bf16.msra.mxu0 %v2400
  %3120 = vmatprep.subr.bf16.mxu0 0
  %3121 = vmatpush1.bf16.msra.mxu0 %v2401
  %3122 = vmatprep.subr.bf16.mxu0 0
  %3123 = vmatpush1.bf16.msra.mxu0 %v2402
  %3124 = vmatprep.subr.bf16.mxu0 0
  %3125 = vmatpush1.bf16.msra.mxu0 %v2403
  %3126 = vmatprep.subr.bf16.mxu0 0
  %3127 = vmatpush1.bf16.msra.mxu0 %v2404
  %3128 = vmatprep.subr.bf16.mxu0 0
  %3129 = vmatpush1.bf16.msra.mxu0 %v2405
  %3130 = vmatprep.mubr.bf16.mxu0 %v1055
  %3131 = vmatmul.mubr.bf16.gmra.mrb[0].mxu0 %v1054
  %v3132 = vpop.f32.mrb[0].mxu0
  %v3133 = vadd.f32 %v3068, %v3132
  %v3134 = vpop.f32.mrb[0].mxu0
  %v3135 = vpop.f32.mrb[0].mxu0
  %v3136 = vadd.f32 %v3071, %v3135
  %v3137 = vpop.f32.mrb[0].mxu0
  %3138 = vmatprep.mubr.bf16.mxu0 %v1087
  %3139 = vmatmul.mubr.bf16.gmra.mrb[0].mxu0 %v1086
  %v3140 = vpop.f32.mrb[0].mxu0
  %v3141 = vadd.f32 %v3076, %v3140
  %v3142 = vpop.f32.mrb[0].mxu0
  %v3143 = vpop.f32.mrb[0].mxu0
  %v3144 = vadd.f32 %v3079, %v3143
  %v3145 = vpop.f32.mrb[0].mxu0
  %3146 = vmatprep.mubr.bf16.mxu0 %v1119
  %3147 = vmatmul.mubr.bf16.gmra.mrb[0].mxu0 %v1118
  %v3148 = vpop.f32.mrb[0].mxu0
  %v3149 = vadd.f32 %v3084, %v3148
  %v3150 = vpop.f32.mrb[0].mxu0
  %v3151 = vpop.f32.mrb[0].mxu0
  %v3152 = vadd.f32 %v3087, %v3151
  %v3153 = vpop.f32.mrb[0].mxu0
  %3154 = vmatprep.mubr.bf16.mxu0 %v1151
  %3155 = vmatmul.mubr.bf16.gmra.mrb[0].mxu0 %v1150
  %v3156 = vpop.f32.mrb[0].mxu0
  %v3157 = vadd.f32 %v3092, %v3156
  %v3158 = vpop.f32.mrb[0].mxu0
  %v3159 = vpop.f32.mrb[0].mxu0
  %v3160 = vadd.f32 %v3095, %v3159
  %v3161 = vpop.f32.mrb[0].mxu0
  %3162 = vdwg.mxu0
  %3163 = vmatprep.subr.bf16.mxu0 0
  %3164 = vmatpush1.bf16.msra.mxu0 %v2406
  %3165 = vmatprep.subr.bf16.mxu0 0
  %3166 = vmatpush1.bf16.msra.mxu0 %v2407
  %3167 = vmatprep.subr.bf16.mxu0 0
  %3168 = vmatpush1.bf16.msra.mxu0 %v2408
  %3169 = vmatprep.subr.bf16.mxu0 0
  %3170 = vmatpush1.bf16.msra.mxu0 %v2409
  %3171 = vmatprep.subr.bf16.mxu0 0
  %3172 = vmatpush1.bf16.msra.mxu0 %v2410
  %3173 = vmatprep.subr.bf16.mxu0 0
  %3174 = vmatpush1.bf16.msra.mxu0 %v2411
  %3175 = vmatprep.subr.bf16.mxu0 0
  %3176 = vmatpush1.bf16.msra.mxu0 %v2412
  %3177 = vmatprep.subr.bf16.mxu0 0
  %3178 = vmatpush1.bf16.msra.mxu0 %v2413
  %3179 = vmatprep.subr.bf16.mxu0 0
  %3180 = vmatpush1.bf16.msra.mxu0 %v2414
  %3181 = vmatprep.subr.bf16.mxu0 0
  %3182 = vmatpush1.bf16.msra.mxu0 %v2415
  %3183 = vmatprep.subr.bf16.mxu0 0
  %3184 = vmatpush1.bf16.msra.mxu0 %v2416
  %3185 = vmatprep.subr.bf16.mxu0 0
  %3186 = vmatpush1.bf16.msra.mxu0 %v2417
  %3187 = vmatprep.subr.bf16.mxu0 0
  %3188 = vmatpush1.bf16.msra.mxu0 %v2418
  %3189 = vmatprep.subr.bf16.mxu0 0
  %3190 = vmatpush1.bf16.msra.mxu0 %v2419
  %3191 = vmatprep.subr.bf16.mxu0 0
  %3192 = vmatpush1.bf16.msra.mxu0 %v2420
  %3193 = vmatprep.subr.bf16.mxu0 0
  %3194 = vmatpush1.bf16.msra.mxu0 %v2421
  %3195 = vmatprep.mubr.bf16.mxu0 %v1057
  %3196 = vmatmul.mubr.bf16.gmra.mrb[0].mxu0 %v1056
  %v3197 = vpop.f32.mrb[0].mxu0
  %v3198 = vadd.f32 %v3133, %v3197
  %v3199 = vpop.f32.mrb[0].mxu0
  %v3200 = vpop.f32.mrb[0].mxu0
  %v3201 = vadd.f32 %v3136, %v3200
  %v3202 = vpop.f32.mrb[0].mxu0
  %3203 = vmatprep.mubr.bf16.mxu0 %v1089
  %3204 = vmatmul.mubr.bf16.gmra.mrb[0].mxu0 %v1088
  %v3205 = vpop.f32.mrb[0].mxu0
  %v3206 = vadd.f32 %v3141, %v3205
  %v3207 = vpop.f32.mrb[0].mxu0
  %v3208 = vpop.f32.mrb[0].mxu0
  %v3209 = vadd.f32 %v3144, %v3208
  %v3210 = vpop.f32.mrb[0].mxu0
  %3211 = vmatprep.mubr.bf16.mxu0 %v1121
  %3212 = vmatmul.mubr.bf16.gmra.mrb[0].mxu0 %v1120
  %v3213 = vpop.f32.mrb[0].mxu0
  %v3214 = vadd.f32 %v3149, %v3213
  %v3215 = vpop.f32.mrb[0].mxu0
  %v3216 = vpop.f32.mrb[0].mxu0
  %v3217 = vadd.f32 %v3152, %v3216
  %v3218 = vpop.f32.mrb[0].mxu0
  %3219 = vmatprep.mubr.bf16.mxu0 %v1153
  %3220 = vmatmul.mubr.bf16.gmra.mrb[0].mxu0 %v1152
  %v3221 = vpop.f32.mrb[0].mxu0
  %v3222 = vadd.f32 %v3157, %v3221
  %v3223 = vpop.f32.mrb[0].mxu0
  %v3224 = vpop.f32.mrb[0].mxu0
  %v3225 = vadd.f32 %v3160, %v3224
  %v3226 = vpop.f32.mrb[0].mxu0
  %3227 = vdwg.mxu0
  %3228 = vmatprep.subr.bf16.mxu0 0
  %3229 = vmatpush1.bf16.msra.mxu0 %v2422
  %3230 = vmatprep.subr.bf16.mxu0 0
  %3231 = vmatpush1.bf16.msra.mxu0 %v2423
  %3232 = vmatprep.subr.bf16.mxu0 0
  %3233 = vmatpush1.bf16.msra.mxu0 %v2424
  %3234 = vmatprep.subr.bf16.mxu0 0
  %3235 = vmatpush1.bf16.msra.mxu0 %v2425
  %3236 = vmatprep.subr.bf16.mxu0 0
  %3237 = vmatpush1.bf16.msra.mxu0 %v2426
  %3238 = vmatprep.subr.bf16.mxu0 0
  %3239 = vmatpush1.bf16.msra.mxu0 %v2427
  %3240 = vmatprep.subr.bf16.mxu0 0
  %3241 = vmatpush1.bf16.msra.mxu0 %v2428
  %3242 = vmatprep.subr.bf16.mxu0 0
  %3243 = vmatpush1.bf16.msra.mxu0 %v2429
  %3244 = vmatprep.subr.bf16.mxu0 0
  %3245 = vmatpush1.bf16.msra.mxu0 %v2430
  %3246 = vmatprep.subr.bf16.mxu0 0
  %3247 = vmatpush1.bf16.msra.mxu0 %v2431
  %3248 = vmatprep.subr.bf16.mxu0 0
  %3249 = vmatpush1.bf16.msra.mxu0 %v2432
  %3250 = vmatprep.subr.bf16.mxu0 0
  %3251 = vmatpush1.bf16.msra.mxu0 %v2433
  %3252 = vmatprep.subr.bf16.mxu0 0
  %3253 = vmatpush1.bf16.msra.mxu0 %v2434
  %3254 = vmatprep.subr.bf16.mxu0 0
  %3255 = vmatpush1.bf16.msra.mxu0 %v2435
  %3256 = vmatprep.subr.bf16.mxu0 0
  %3257 = vmatpush1.bf16.msra.mxu0 %v2436
  %3258 = vmatprep.subr.bf16.mxu0 0
  %3259 = vmatpush1.bf16.msra.mxu0 %v2437
  %3260 = vmatprep.mubr.bf16.mxu0 %v1059
  %3261 = vmatmul.mubr.bf16.gmra.mrb[0].mxu0 %v1058
  %v3262 = vpop.f32.mrb[0].mxu0
  %v3263 = vadd.f32 %v3198, %v3262
  %v3264 = vpop.f32.mrb[0].mxu0
  %v3265 = vpop.f32.mrb[0].mxu0
  %v3266 = vadd.f32 %v3201, %v3265
  %v3267 = vpop.f32.mrb[0].mxu0
  %3268 = vmatprep.mubr.bf16.mxu0 %v1091
  %3269 = vmatmul.mubr.bf16.gmra.mrb[0].mxu0 %v1090
  %v3270 = vpop.f32.mrb[0].mxu0
  %v3271 = vadd.f32 %v3206, %v3270
  %v3272 = vpop.f32.mrb[0].mxu0
  %v3273 = vpop.f32.mrb[0].mxu0
  %v3274 = vadd.f32 %v3209, %v3273
  %v3275 = vpop.f32.mrb[0].mxu0
  %3276 = vmatprep.mubr.bf16.mxu0 %v1123
  %3277 = vmatmul.mubr.bf16.gmra.mrb[0].mxu0 %v1122
  %v3278 = vpop.f32.mrb[0].mxu0
  %v3279 = vadd.f32 %v3214, %v3278
  %v3280 = vpop.f32.mrb[0].mxu0
  %v3281 = vpop.f32.mrb[0].mxu0
  %v3282 = vadd.f32 %v3217, %v3281
  %v3283 = vpop.f32.mrb[0].mxu0
  %3284 = vmatprep.mubr.bf16.mxu0 %v1155
  %3285 = vmatmul.mubr.bf16.gmra.mrb[0].mxu0 %v1154
  %v3286 = vpop.f32.mrb[0].mxu0
  %v3287 = vadd.f32 %v3222, %v3286
  %v3288 = vpop.f32.mrb[0].mxu0
  %v3289 = vpop.f32.mrb[0].mxu0
  %v3290 = vadd.f32 %v3225, %v3289
  %v3291 = vpop.f32.mrb[0].mxu0
  %3292 = vdwg.mxu0
  %3293 = vmatprep.subr.bf16.mxu0 0
  %3294 = vmatpush1.bf16.msra.mxu0 %v2438
  %3295 = vmatprep.subr.bf16.mxu0 0
  %3296 = vmatpush1.bf16.msra.mxu0 %v2439
  %3297 = vmatprep.subr.bf16.mxu0 0
  %3298 = vmatpush1.bf16.msra.mxu0 %v2440
  %3299 = vmatprep.subr.bf16.mxu0 0
  %3300 = vmatpush1.bf16.msra.mxu0 %v2441
  %3301 = vmatprep.subr.bf16.mxu0 0
  %3302 = vmatpush1.bf16.msra.mxu0 %v2442
  %3303 = vmatprep.subr.bf16.mxu0 0
  %3304 = vmatpush1.bf16.msra.mxu0 %v2443
  %3305 = vmatprep.subr.bf16.mxu0 0
  %3306 = vmatpush1.bf16.msra.mxu0 %v2444
  %3307 = vmatprep.subr.bf16.mxu0 0
  %3308 = vmatpush1.bf16.msra.mxu0 %v2445
  %3309 = vmatprep.subr.bf16.mxu0 0
  %3310 = vmatpush1.bf16.msra.mxu0 %v2446
  %3311 = vmatprep.subr.bf16.mxu0 0
  %3312 = vmatpush1.bf16.msra.mxu0 %v2447
  %3313 = vmatprep.subr.bf16.mxu0 0
  %3314 = vmatpush1.bf16.msra.mxu0 %v2448
  %3315 = vmatprep.subr.bf16.mxu0 0
  %3316 = vmatpush1.bf16.msra.mxu0 %v2449
  %3317 = vmatprep.subr.bf16.mxu0 0
  %3318 = vmatpush1.bf16.msra.mxu0 %v2450
  %3319 = vmatprep.subr.bf16.mxu0 0
  %3320 = vmatpush1.bf16.msra.mxu0 %v2451
  %3321 = vmatprep.subr.bf16.mxu0 0
  %3322 = vmatpush1.bf16.msra.mxu0 %v2452
  %3323 = vmatprep.subr.bf16.mxu0 0
  %3324 = vmatpush1.bf16.msra.mxu0 %v2453
  %3325 = vmatprep.mubr.bf16.mxu0 %v1061
  %3326 = vmatmul.mubr.bf16.gmra.mrb[0].mxu0 %v1060
  %v3327 = vpop.f32.mrb[0].mxu0
  %v3328 = vadd.f32 %v3263, %v3327
  %v3329 = vpop.f32.mrb[0].mxu0
  %v3330 = vpop.f32.mrb[0].mxu0
  %v3331 = vadd.f32 %v3266, %v3330
  %v3332 = vpop.f32.mrb[0].mxu0
  %3333 = vmatprep.mubr.bf16.mxu0 %v1093
  %3334 = vmatmul.mubr.bf16.gmra.mrb[0].mxu0 %v1092
  %v3335 = vpop.f32.mrb[0].mxu0
  %v3336 = vadd.f32 %v3271, %v3335
  %v3337 = vpop.f32.mrb[0].mxu0
  %v3338 = vpop.f32.mrb[0].mxu0
  %v3339 = vadd.f32 %v3274, %v3338
  %v3340 = vpop.f32.mrb[0].mxu0
  %3341 = vmatprep.mubr.bf16.mxu0 %v1125
  %3342 = vmatmul.mubr.bf16.gmra.mrb[0].mxu0 %v1124
  %v3343 = vpop.f32.mrb[0].mxu0
  %v3344 = vadd.f32 %v3279, %v3343
  %v3345 = vpop.f32.mrb[0].mxu0
  %v3346 = vpop.f32.mrb[0].mxu0
  %v3347 = vadd.f32 %v3282, %v3346
  %v3348 = vpop.f32.mrb[0].mxu0
  %3349 = vmatprep.mubr.bf16.mxu0 %v1157
  %3350 = vmatmul.mubr.bf16.gmra.mrb[0].mxu0 %v1156
  %v3351 = vpop.f32.mrb[0].mxu0
  %v3352 = vadd.f32 %v3287, %v3351
  %v3353 = vpop.f32.mrb[0].mxu0
  %v3354 = vpop.f32.mrb[0].mxu0
  %v3355 = vadd.f32 %v3290, %v3354
  %v3356 = vpop.f32.mrb[0].mxu0
  %3357 = vdwg.mxu0
  %3358 = vmatprep.subr.bf16.mxu0 0
  %3359 = vmatpush1.bf16.msra.mxu0 %v2454
  %3360 = vmatprep.subr.bf16.mxu0 0
  %3361 = vmatpush1.bf16.msra.mxu0 %v2455
  %3362 = vmatprep.subr.bf16.mxu0 0
  %3363 = vmatpush1.bf16.msra.mxu0 %v2456
  %3364 = vmatprep.subr.bf16.mxu0 0
  %3365 = vmatpush1.bf16.msra.mxu0 %v2457
  %3366 = vmatprep.subr.bf16.mxu0 0
  %3367 = vmatpush1.bf16.msra.mxu0 %v2458
  %3368 = vmatprep.subr.bf16.mxu0 0
  %3369 = vmatpush1.bf16.msra.mxu0 %v2459
  %3370 = vmatprep.subr.bf16.mxu0 0
  %3371 = vmatpush1.bf16.msra.mxu0 %v2460
  %3372 = vmatprep.subr.bf16.mxu0 0
  %3373 = vmatpush1.bf16.msra.mxu0 %v2461
  %3374 = vmatprep.subr.bf16.mxu0 0
  %3375 = vmatpush1.bf16.msra.mxu0 %v2462
  %3376 = vmatprep.subr.bf16.mxu0 0
  %3377 = vmatpush1.bf16.msra.mxu0 %v2463
  %3378 = vmatprep.subr.bf16.mxu0 0
  %3379 = vmatpush1.bf16.msra.mxu0 %v2464
  %3380 = vmatprep.subr.bf16.mxu0 0
  %3381 = vmatpush1.bf16.msra.mxu0 %v2465
  %3382 = vmatprep.subr.bf16.mxu0 0
  %3383 = vmatpush1.bf16.msra.mxu0 %v2466
  %3384 = vmatprep.subr.bf16.mxu0 0
  %3385 = vmatpush1.bf16.msra.mxu0 %v2467
  %3386 = vmatprep.subr.bf16.mxu0 0
  %3387 = vmatpush1.bf16.msra.mxu0 %v2468
  %3388 = vmatprep.subr.bf16.mxu0 0
  %3389 = vmatpush1.bf16.msra.mxu0 %v2469
  %3390 = vmatprep.mubr.bf16.mxu0 %v1063
  %3391 = vmatmul.mubr.bf16.gmra.mrb[0].mxu0 %v1062
  %v3392 = vpop.f32.mrb[0].mxu0
  %v3393 = vadd.f32 %v3328, %v3392
  %v3394 = vpop.f32.mrb[0].mxu0
  %v3395 = vpop.f32.mrb[0].mxu0
  %v3396 = vadd.f32 %v3331, %v3395
  %v3397 = vpop.f32.mrb[0].mxu0
  %3398 = vmatprep.mubr.bf16.mxu0 %v1095
  %3399 = vmatmul.mubr.bf16.gmra.mrb[0].mxu0 %v1094
  %v3400 = vpop.f32.mrb[0].mxu0
  %v3401 = vadd.f32 %v3336, %v3400
  %v3402 = vpop.f32.mrb[0].mxu0
  %v3403 = vpop.f32.mrb[0].mxu0
  %v3404 = vadd.f32 %v3339, %v3403
  %v3405 = vpop.f32.mrb[0].mxu0
  %3406 = vmatprep.mubr.bf16.mxu0 %v1127
  %3407 = vmatmul.mubr.bf16.gmra.mrb[0].mxu0 %v1126
  %v3408 = vpop.f32.mrb[0].mxu0
  %v3409 = vadd.f32 %v3344, %v3408
  %v3410 = vpop.f32.mrb[0].mxu0
  %v3411 = vpop.f32.mrb[0].mxu0
  %v3412 = vadd.f32 %v3347, %v3411
  %v3413 = vpop.f32.mrb[0].mxu0
  %3414 = vmatprep.mubr.bf16.mxu0 %v1159
  %3415 = vmatmul.mubr.bf16.gmra.mrb[0].mxu0 %v1158
  %v3416 = vpop.f32.mrb[0].mxu0
  %v3417 = vadd.f32 %v3352, %v3416
  %v3418 = vpop.f32.mrb[0].mxu0
  %v3419 = vpop.f32.mrb[0].mxu0
  %v3420 = vadd.f32 %v3355, %v3419
  %v3421 = vpop.f32.mrb[0].mxu0
  %3422 = vdwg.mxu0
  %3423 = vmatprep.subr.bf16.mxu0 0
  %3424 = vmatpush1.bf16.msra.mxu0 %v2470
  %3425 = vmatprep.subr.bf16.mxu0 0
  %3426 = vmatpush1.bf16.msra.mxu0 %v2471
  %3427 = vmatprep.subr.bf16.mxu0 0
  %3428 = vmatpush1.bf16.msra.mxu0 %v2472
  %3429 = vmatprep.subr.bf16.mxu0 0
  %3430 = vmatpush1.bf16.msra.mxu0 %v2473
  %3431 = vmatprep.subr.bf16.mxu0 0
  %3432 = vmatpush1.bf16.msra.mxu0 %v2474
  %3433 = vmatprep.subr.bf16.mxu0 0
  %3434 = vmatpush1.bf16.msra.mxu0 %v2475
  %3435 = vmatprep.subr.bf16.mxu0 0
  %3436 = vmatpush1.bf16.msra.mxu0 %v2476
  %3437 = vmatprep.subr.bf16.mxu0 0
  %3438 = vmatpush1.bf16.msra.mxu0 %v2477
  %3439 = vmatprep.subr.bf16.mxu0 0
  %3440 = vmatpush1.bf16.msra.mxu0 %v2478
  %3441 = vmatprep.subr.bf16.mxu0 0
  %3442 = vmatpush1.bf16.msra.mxu0 %v2479
  %3443 = vmatprep.subr.bf16.mxu0 0
  %3444 = vmatpush1.bf16.msra.mxu0 %v2480
  %3445 = vmatprep.subr.bf16.mxu0 0
  %3446 = vmatpush1.bf16.msra.mxu0 %v2481
  %3447 = vmatprep.subr.bf16.mxu0 0
  %3448 = vmatpush1.bf16.msra.mxu0 %v2482
  %3449 = vmatprep.subr.bf16.mxu0 0
  %3450 = vmatpush1.bf16.msra.mxu0 %v2483
  %3451 = vmatprep.subr.bf16.mxu0 0
  %3452 = vmatpush1.bf16.msra.mxu0 %v2484
  %3453 = vmatprep.subr.bf16.mxu0 0
  %3454 = vmatpush1.bf16.msra.mxu0 %v2485
  %3455 = vmatprep.mubr.bf16.mxu0 %v1065
  %3456 = vmatmul.mubr.bf16.gmra.mrb[0].mxu0 %v1064
  %v3457 = vpop.f32.mrb[0].mxu0
  %v3458 = vadd.f32 %v3393, %v3457
  %v3459 = vpop.f32.mrb[0].mxu0
  %v3460 = vpop.f32.mrb[0].mxu0
  %v3461 = vadd.f32 %v3396, %v3460
  %v3462 = vpop.f32.mrb[0].mxu0
  %3463 = vmatprep.mubr.bf16.mxu0 %v1097
  %3464 = vmatmul.mubr.bf16.gmra.mrb[0].mxu0 %v1096
  %v3465 = vpop.f32.mrb[0].mxu0
  %v3466 = vadd.f32 %v3401, %v3465
  %v3467 = vpop.f32.mrb[0].mxu0
  %v3468 = vpop.f32.mrb[0].mxu0
  %v3469 = vadd.f32 %v3404, %v3468
  %v3470 = vpop.f32.mrb[0].mxu0
  %3471 = vmatprep.mubr.bf16.mxu0 %v1129
  %3472 = vmatmul.mubr.bf16.gmra.mrb[0].mxu0 %v1128
  %v3473 = vpop.f32.mrb[0].mxu0
  %v3474 = vadd.f32 %v3409, %v3473
  %v3475 = vpop.f32.mrb[0].mxu0
  %v3476 = vpop.f32.mrb[0].mxu0
  %v3477 = vadd.f32 %v3412, %v3476
  %v3478 = vpop.f32.mrb[0].mxu0
  %3479 = vmatprep.mubr.bf16.mxu0 %v1161
  %3480 = vmatmul.mubr.bf16.gmra.mrb[0].mxu0 %v1160
  %v3481 = vpop.f32.mrb[0].mxu0
  %v3482 = vadd.f32 %v3417, %v3481
  %v3483 = vpop.f32.mrb[0].mxu0
  %v3484 = vpop.f32.mrb[0].mxu0
  %v3485 = vadd.f32 %v3420, %v3484
  %v3486 = vpop.f32.mrb[0].mxu0
  %3487 = vdwg.mxu0
  %3488 = vmatprep.subr.bf16.mxu0 0
  %3489 = vmatpush1.bf16.msra.mxu0 %v2486
  %3490 = vmatprep.subr.bf16.mxu0 0
  %3491 = vmatpush1.bf16.msra.mxu0 %v2487
  %3492 = vmatprep.subr.bf16.mxu0 0
  %3493 = vmatpush1.bf16.msra.mxu0 %v2488
  %3494 = vmatprep.subr.bf16.mxu0 0
  %3495 = vmatpush1.bf16.msra.mxu0 %v2489
  %3496 = vmatprep.subr.bf16.mxu0 0
  %3497 = vmatpush1.bf16.msra.mxu0 %v2490
  %3498 = vmatprep.subr.bf16.mxu0 0
  %3499 = vmatpush1.bf16.msra.mxu0 %v2491
  %3500 = vmatprep.subr.bf16.mxu0 0
  %3501 = vmatpush1.bf16.msra.mxu0 %v2492
  %3502 = vmatprep.subr.bf16.mxu0 0
  %3503 = vmatpush1.bf16.msra.mxu0 %v2493
  %3504 = vmatprep.subr.bf16.mxu0 0
  %3505 = vmatpush1.bf16.msra.mxu0 %v2494
  %3506 = vmatprep.subr.bf16.mxu0 0
  %3507 = vmatpush1.bf16.msra.mxu0 %v2495
  %3508 = vmatprep.subr.bf16.mxu0 0
  %3509 = vmatpush1.bf16.msra.mxu0 %v2496
  %3510 = vmatprep.subr.bf16.mxu0 0
  %3511 = vmatpush1.bf16.msra.mxu0 %v2497
  %3512 = vmatprep.subr.bf16.mxu0 0
  %3513 = vmatpush1.bf16.msra.mxu0 %v2498
  %3514 = vmatprep.subr.bf16.mxu0 0
  %3515 = vmatpush1.bf16.msra.mxu0 %v2499
  %3516 = vmatprep.subr.bf16.mxu0 0
  %3517 = vmatpush1.bf16.msra.mxu0 %v2500
  %3518 = vmatprep.subr.bf16.mxu0 0
  %3519 = vmatpush1.bf16.msra.mxu0 %v2501
  %3520 = vmatprep.mubr.bf16.mxu0 %v1067
  %3521 = vmatmul.mubr.bf16.gmra.mrb[0].mxu0 %v1066
  %v3522 = vpop.f32.mrb[0].mxu0
  %v3523 = vadd.f32 %v3458, %v3522
  %v3524 = vpop.f32.mrb[0].mxu0
  %v3525 = vpop.f32.mrb[0].mxu0
  %v3526 = vadd.f32 %v3461, %v3525
  %v3527 = vpop.f32.mrb[0].mxu0
  %3528 = vmatprep.mubr.bf16.mxu0 %v1099
  %3529 = vmatmul.mubr.bf16.gmra.mrb[0].mxu0 %v1098
  %v3530 = vpop.f32.mrb[0].mxu0
  %v3531 = vadd.f32 %v3466, %v3530
  %v3532 = vpop.f32.mrb[0].mxu0
  %v3533 = vpop.f32.mrb[0].mxu0
  %v3534 = vadd.f32 %v3469, %v3533
  %v3535 = vpop.f32.mrb[0].mxu0
  %3536 = vmatprep.mubr.bf16.mxu0 %v1131
  %3537 = vmatmul.mubr.bf16.gmra.mrb[0].mxu0 %v1130
  %v3538 = vpop.f32.mrb[0].mxu0
  %v3539 = vadd.f32 %v3474, %v3538
  %v3540 = vpop.f32.mrb[0].mxu0
  %v3541 = vpop.f32.mrb[0].mxu0
  %v3542 = vadd.f32 %v3477, %v3541
  %v3543 = vpop.f32.mrb[0].mxu0
  %3544 = vmatprep.mubr.bf16.mxu0 %v1163
  %3545 = vmatmul.mubr.bf16.gmra.mrb[0].mxu0 %v1162
  %v3546 = vpop.f32.mrb[0].mxu0
  %v3547 = vadd.f32 %v3482, %v3546
  %v3548 = vpop.f32.mrb[0].mxu0
  %v3549 = vpop.f32.mrb[0].mxu0
  %v3550 = vadd.f32 %v3485, %v3549
  %v3551 = vpop.f32.mrb[0].mxu0
  %3552 = vdwg.mxu0
  %3553 = vmatprep.subr.bf16.mxu0 0
  %3554 = vmatpush1.bf16.msra.mxu0 %v2502
  %3555 = vmatprep.subr.bf16.mxu0 0
  %3556 = vmatpush1.bf16.msra.mxu0 %v2503
  %3557 = vmatprep.subr.bf16.mxu0 0
  %3558 = vmatpush1.bf16.msra.mxu0 %v2504
  %3559 = vmatprep.subr.bf16.mxu0 0
  %3560 = vmatpush1.bf16.msra.mxu0 %v2505
  %3561 = vmatprep.subr.bf16.mxu0 0
  %3562 = vmatpush1.bf16.msra.mxu0 %v2506
  %3563 = vmatprep.subr.bf16.mxu0 0
  %3564 = vmatpush1.bf16.msra.mxu0 %v2507
  %3565 = vmatprep.subr.bf16.mxu0 0
  %3566 = vmatpush1.bf16.msra.mxu0 %v2508
  %3567 = vmatprep.subr.bf16.mxu0 0
  %3568 = vmatpush1.bf16.msra.mxu0 %v2509
  %3569 = vmatprep.subr.bf16.mxu0 0
  %3570 = vmatpush1.bf16.msra.mxu0 %v2510
  %3571 = vmatprep.subr.bf16.mxu0 0
  %3572 = vmatpush1.bf16.msra.mxu0 %v2511
  %3573 = vmatprep.subr.bf16.mxu0 0
  %3574 = vmatpush1.bf16.msra.mxu0 %v2512
  %3575 = vmatprep.subr.bf16.mxu0 0
  %3576 = vmatpush1.bf16.msra.mxu0 %v2513
  %3577 = vmatprep.subr.bf16.mxu0 0
  %3578 = vmatpush1.bf16.msra.mxu0 %v2514
  %3579 = vmatprep.subr.bf16.mxu0 0
  %3580 = vmatpush1.bf16.msra.mxu0 %v2515
  %3581 = vmatprep.subr.bf16.mxu0 0
  %3582 = vmatpush1.bf16.msra.mxu0 %v2516
  %3583 = vmatprep.subr.bf16.mxu0 0
  %3584 = vmatpush1.bf16.msra.mxu0 %v2517
  %3585 = vmatprep.mubr.bf16.mxu0 %v1069
  %3586 = vmatmul.mubr.bf16.gmra.mrb[0].mxu0 %v1068
  %v3587 = vpop.f32.mrb[0].mxu0
  %v3588 = vadd.f32 %v3523, %v3587
  %v3589 = vpop.f32.mrb[0].mxu0
  %v3590 = vpop.f32.mrb[0].mxu0
  %v3591 = vadd.f32 %v3526, %v3590
  %v3592 = vpop.f32.mrb[0].mxu0
  %3593 = vmatprep.mubr.bf16.mxu0 %v1101
  %3594 = vmatmul.mubr.bf16.gmra.mrb[0].mxu0 %v1100
  %v3595 = vpop.f32.mrb[0].mxu0
  %v3596 = vadd.f32 %v3531, %v3595
  %v3597 = vpop.f32.mrb[0].mxu0
  %v3598 = vpop.f32.mrb[0].mxu0
  %v3599 = vadd.f32 %v3534, %v3598
  %v3600 = vpop.f32.mrb[0].mxu0
  %3601 = vmatprep.mubr.bf16.mxu0 %v1133
  %3602 = vmatmul.mubr.bf16.gmra.mrb[0].mxu0 %v1132
  %v3603 = vpop.f32.mrb[0].mxu0
  %v3604 = vadd.f32 %v3539, %v3603
  %v3605 = vpop.f32.mrb[0].mxu0
  %v3606 = vpop.f32.mrb[0].mxu0
  %v3607 = vadd.f32 %v3542, %v3606
  %v3608 = vpop.f32.mrb[0].mxu0
  %3609 = vmatprep.mubr.bf16.mxu0 %v1165
  %3610 = vmatmul.mubr.bf16.gmra.mrb[0].mxu0 %v1164
  %v3611 = vpop.f32.mrb[0].mxu0
  %v3612 = vadd.f32 %v3547, %v3611
  %v3613 = vpop.f32.mrb[0].mxu0
  %v3614 = vpop.f32.mrb[0].mxu0
  %v3615 = vadd.f32 %v3550, %v3614
  %v3616 = vpop.f32.mrb[0].mxu0
  %3617 = vdwg.mxu0
  %3618 = vmatprep.subr.bf16.mxu0 0
  %3619 = vmatpush1.bf16.msra.mxu0 %v2518
  %3620 = vmatprep.subr.bf16.mxu0 0
  %3621 = vmatpush1.bf16.msra.mxu0 %v2519
  %3622 = vmatprep.subr.bf16.mxu0 0
  %3623 = vmatpush1.bf16.msra.mxu0 %v2520
  %3624 = vmatprep.subr.bf16.mxu0 0
  %3625 = vmatpush1.bf16.msra.mxu0 %v2521
  %3626 = vmatprep.subr.bf16.mxu0 0
  %3627 = vmatpush1.bf16.msra.mxu0 %v2522
  %3628 = vmatprep.subr.bf16.mxu0 0
  %3629 = vmatpush1.bf16.msra.mxu0 %v2523
  %3630 = vmatprep.subr.bf16.mxu0 0
  %3631 = vmatpush1.bf16.msra.mxu0 %v2524
  %3632 = vmatprep.subr.bf16.mxu0 0
  %3633 = vmatpush1.bf16.msra.mxu0 %v2525
  %3634 = vmatprep.subr.bf16.mxu0 0
  %3635 = vmatpush1.bf16.msra.mxu0 %v2526
  %3636 = vmatprep.subr.bf16.mxu0 0
  %3637 = vmatpush1.bf16.msra.mxu0 %v2527
  %3638 = vmatprep.subr.bf16.mxu0 0
  %3639 = vmatpush1.bf16.msra.mxu0 %v2528
  %3640 = vmatprep.subr.bf16.mxu0 0
  %3641 = vmatpush1.bf16.msra.mxu0 %v2529
  %3642 = vmatprep.subr.bf16.mxu0 0
  %3643 = vmatpush1.bf16.msra.mxu0 %v2530
  %3644 = vmatprep.subr.bf16.mxu0 0
  %3645 = vmatpush1.bf16.msra.mxu0 %v2531
  %3646 = vmatprep.subr.bf16.mxu0 0
  %3647 = vmatpush1.bf16.msra.mxu0 %v2532
  %3648 = vmatprep.subr.bf16.mxu0 0
  %3649 = vmatpush1.bf16.msra.mxu0 %v2533
  %3650 = vmatprep.mubr.bf16.mxu0 %v1071
  %3651 = vmatmul.mubr.bf16.gmra.mrb[0].mxu0 %v1070
  %v3652 = vpop.f32.mrb[0].mxu0
  %v3653 = vadd.f32 %v3588, %v3652
  %v3654 = vpop.f32.mrb[0].mxu0
  %v3655 = vpop.f32.mrb[0].mxu0
  %v3656 = vadd.f32 %v3591, %v3655
  %v3657 = vpop.f32.mrb[0].mxu0
  %3658 = vmatprep.mubr.bf16.mxu0 %v1103
  %3659 = vmatmul.mubr.bf16.gmra.mrb[0].mxu0 %v1102
  %v3660 = vpop.f32.mrb[0].mxu0
  %v3661 = vadd.f32 %v3596, %v3660
  %v3662 = vpop.f32.mrb[0].mxu0
  %v3663 = vpop.f32.mrb[0].mxu0
  %v3664 = vadd.f32 %v3599, %v3663
  %v3665 = vpop.f32.mrb[0].mxu0
  %3666 = vmatprep.mubr.bf16.mxu0 %v1135
  %3667 = vmatmul.mubr.bf16.gmra.mrb[0].mxu0 %v1134
  %v3668 = vpop.f32.mrb[0].mxu0
  %v3669 = vadd.f32 %v3604, %v3668
  %v3670 = vpop.f32.mrb[0].mxu0
  %v3671 = vpop.f32.mrb[0].mxu0
  %v3672 = vadd.f32 %v3607, %v3671
  %v3673 = vpop.f32.mrb[0].mxu0
  %3674 = vmatprep.mubr.bf16.mxu0 %v1167
  %3675 = vmatmul.mubr.bf16.gmra.mrb[0].mxu0 %v1166
  %v3676 = vpop.f32.mrb[0].mxu0
  %v3677 = vadd.f32 %v3612, %v3676
  %v3678 = vpop.f32.mrb[0].mxu0
  %v3679 = vpop.f32.mrb[0].mxu0
  %v3680 = vadd.f32 %v3615, %v3679
  %v3681 = vpop.f32.mrb[0].mxu0
  %3682 = vdwg.mxu0
  %3683 = vmatprep.subr.bf16.mxu0 0
  %3684 = vmatpush1.bf16.msra.mxu0 %v2534
  %3685 = vmatprep.subr.bf16.mxu0 0
  %3686 = vmatpush1.bf16.msra.mxu0 %v2535
  %3687 = vmatprep.subr.bf16.mxu0 0
  %3688 = vmatpush1.bf16.msra.mxu0 %v2536
  %3689 = vmatprep.subr.bf16.mxu0 0
  %3690 = vmatpush1.bf16.msra.mxu0 %v2537
  %3691 = vmatprep.subr.bf16.mxu0 0
  %3692 = vmatpush1.bf16.msra.mxu0 %v2538
  %3693 = vmatprep.subr.bf16.mxu0 0
  %3694 = vmatpush1.bf16.msra.mxu0 %v2539
  %3695 = vmatprep.subr.bf16.mxu0 0
  %3696 = vmatpush1.bf16.msra.mxu0 %v2540
  %3697 = vmatprep.subr.bf16.mxu0 0
  %3698 = vmatpush1.bf16.msra.mxu0 %v2541
  %3699 = vmatprep.subr.bf16.mxu0 0
  %3700 = vmatpush1.bf16.msra.mxu0 %v2542
  %3701 = vmatprep.subr.bf16.mxu0 0
  %3702 = vmatpush1.bf16.msra.mxu0 %v2543
  %3703 = vmatprep.subr.bf16.mxu0 0
  %3704 = vmatpush1.bf16.msra.mxu0 %v2544
  %3705 = vmatprep.subr.bf16.mxu0 0
  %3706 = vmatpush1.bf16.msra.mxu0 %v2545
  %3707 = vmatprep.subr.bf16.mxu0 0
  %3708 = vmatpush1.bf16.msra.mxu0 %v2546
  %3709 = vmatprep.subr.bf16.mxu0 0
  %3710 = vmatpush1.bf16.msra.mxu0 %v2547
  %3711 = vmatprep.subr.bf16.mxu0 0
  %3712 = vmatpush1.bf16.msra.mxu0 %v2548
  %3713 = vmatprep.subr.bf16.mxu0 0
  %3714 = vmatpush1.bf16.msra.mxu0 %v2549
  %3715 = vmatprep.mubr.bf16.mxu0 %v1073
  %3716 = vmatmul.mubr.bf16.gmra.mrb[0].mxu0 %v1072
  %v3717 = vpop.f32.mrb[0].mxu0
  %v3718 = vadd.f32 %v3653, %v3717
  %v3719 = vpop.f32.mrb[0].mxu0
  %v3720 = vpop.f32.mrb[0].mxu0
  %v3721 = vadd.f32 %v3656, %v3720
  %v3722 = vpop.f32.mrb[0].mxu0
  %3723 = vmatprep.mubr.bf16.mxu0 %v1105
  %3724 = vmatmul.mubr.bf16.gmra.mrb[0].mxu0 %v1104
  %v3725 = vpop.f32.mrb[0].mxu0
  %v3726 = vadd.f32 %v3661, %v3725
  %v3727 = vpop.f32.mrb[0].mxu0
  %v3728 = vpop.f32.mrb[0].mxu0
  %v3729 = vadd.f32 %v3664, %v3728
  %v3730 = vpop.f32.mrb[0].mxu0
  %3731 = vmatprep.mubr.bf16.mxu0 %v1137
  %3732 = vmatmul.mubr.bf16.gmra.mrb[0].mxu0 %v1136
  %v3733 = vpop.f32.mrb[0].mxu0
  %v3734 = vadd.f32 %v3669, %v3733
  %v3735 = vpop.f32.mrb[0].mxu0
  %v3736 = vpop.f32.mrb[0].mxu0
  %v3737 = vadd.f32 %v3672, %v3736
  %v3738 = vpop.f32.mrb[0].mxu0
  %3739 = vmatprep.mubr.bf16.mxu0 %v1169
  %3740 = vmatmul.mubr.bf16.gmra.mrb[0].mxu0 %v1168
  %v3741 = vpop.f32.mrb[0].mxu0
  %v3742 = vadd.f32 %v3677, %v3741
  %v3743 = vpop.f32.mrb[0].mxu0
  %v3744 = vpop.f32.mrb[0].mxu0
  %v3745 = vadd.f32 %v3680, %v3744
  %v3746 = vpop.f32.mrb[0].mxu0
  %3747 = vdwg.mxu0
  %3748 = vmatprep.subr.bf16.mxu0 0
  %3749 = vmatpush1.bf16.msra.mxu0 %v2550
  %3750 = vmatprep.subr.bf16.mxu0 0
  %3751 = vmatpush1.bf16.msra.mxu0 %v2551
  %3752 = vmatprep.subr.bf16.mxu0 0
  %3753 = vmatpush1.bf16.msra.mxu0 %v2552
  %3754 = vmatprep.subr.bf16.mxu0 0
  %3755 = vmatpush1.bf16.msra.mxu0 %v2553
  %3756 = vmatprep.subr.bf16.mxu0 0
  %3757 = vmatpush1.bf16.msra.mxu0 %v2554
  %3758 = vmatprep.subr.bf16.mxu0 0
  %3759 = vmatpush1.bf16.msra.mxu0 %v2555
  %3760 = vmatprep.subr.bf16.mxu0 0
  %3761 = vmatpush1.bf16.msra.mxu0 %v2556
  %3762 = vmatprep.subr.bf16.mxu0 0
  %3763 = vmatpush1.bf16.msra.mxu0 %v2557
  %3764 = vmatprep.subr.bf16.mxu0 0
  %3765 = vmatpush1.bf16.msra.mxu0 %v2558
  %3766 = vmatprep.subr.bf16.mxu0 0
  %3767 = vmatpush1.bf16.msra.mxu0 %v2559
  %3768 = vmatprep.subr.bf16.mxu0 0
  %3769 = vmatpush1.bf16.msra.mxu0 %v2560
  %3770 = vmatprep.subr.bf16.mxu0 0
  %3771 = vmatpush1.bf16.msra.mxu0 %v2561
  %3772 = vmatprep.subr.bf16.mxu0 0
  %3773 = vmatpush1.bf16.msra.mxu0 %v2562
  %3774 = vmatprep.subr.bf16.mxu0 0
  %3775 = vmatpush1.bf16.msra.mxu0 %v2563
  %3776 = vmatprep.subr.bf16.mxu0 0
  %3777 = vmatpush1.bf16.msra.mxu0 %v2564
  %3778 = vmatprep.subr.bf16.mxu0 0
  %3779 = vmatpush1.bf16.msra.mxu0 %v2565
  %3780 = vmatprep.mubr.bf16.mxu0 %v1075
  %3781 = vmatmul.mubr.bf16.gmra.mrb[0].mxu0 %v1074
  %v3782 = vpop.f32.mrb[0].mxu0
  %v3783 = vadd.f32 %v3718, %v3782
  %v3784 = vpop.f32.mrb[0].mxu0
  %v3785 = vpop.f32.mrb[0].mxu0
  %v3786 = vadd.f32 %v3721, %v3785
  %v3787 = vpop.f32.mrb[0].mxu0
  %3788 = vmatprep.mubr.bf16.mxu0 %v1107
  %3789 = vmatmul.mubr.bf16.gmra.mrb[0].mxu0 %v1106
  %v3790 = vpop.f32.mrb[0].mxu0
  %v3791 = vadd.f32 %v3726, %v3790
  %v3792 = vpop.f32.mrb[0].mxu0
  %v3793 = vpop.f32.mrb[0].mxu0
  %v3794 = vadd.f32 %v3729, %v3793
  %v3795 = vpop.f32.mrb[0].mxu0
  %3796 = vmatprep.mubr.bf16.mxu0 %v1139
  %3797 = vmatmul.mubr.bf16.gmra.mrb[0].mxu0 %v1138
  %v3798 = vpop.f32.mrb[0].mxu0
  %v3799 = vadd.f32 %v3734, %v3798
  %v3800 = vpop.f32.mrb[0].mxu0
  %v3801 = vpop.f32.mrb[0].mxu0
  %v3802 = vadd.f32 %v3737, %v3801
  %v3803 = vpop.f32.mrb[0].mxu0
  %3804 = vmatprep.mubr.bf16.mxu0 %v1171
  %3805 = vmatmul.mubr.bf16.gmra.mrb[0].mxu0 %v1170
  %v3806 = vpop.f32.mrb[0].mxu0
  %v3807 = vadd.f32 %v3742, %v3806
  %v3808 = vpop.f32.mrb[0].mxu0
  %v3809 = vpop.f32.mrb[0].mxu0
  %v3810 = vadd.f32 %v3745, %v3809
  %v3811 = vpop.f32.mrb[0].mxu0
  %3812 = vdwg.mxu0
  %3813 = vmatprep.subr.bf16.mxu0 0
  %3814 = vmatpush1.bf16.msra.mxu0 %v2566
  %3815 = vmatprep.subr.bf16.mxu0 0
  %3816 = vmatpush1.bf16.msra.mxu0 %v2567
  %3817 = vmatprep.subr.bf16.mxu0 0
  %3818 = vmatpush1.bf16.msra.mxu0 %v2568
  %3819 = vmatprep.subr.bf16.mxu0 0
  %3820 = vmatpush1.bf16.msra.mxu0 %v2569
  %3821 = vmatprep.subr.bf16.mxu0 0
  %3822 = vmatpush1.bf16.msra.mxu0 %v2570
  %3823 = vmatprep.subr.bf16.mxu0 0
  %3824 = vmatpush1.bf16.msra.mxu0 %v2571
  %3825 = vmatprep.subr.bf16.mxu0 0
  %3826 = vmatpush1.bf16.msra.mxu0 %v2572
  %3827 = vmatprep.subr.bf16.mxu0 0
  %3828 = vmatpush1.bf16.msra.mxu0 %v2573
  %3829 = vmatprep.subr.bf16.mxu0 0
  %3830 = vmatpush1.bf16.msra.mxu0 %v2574
  %3831 = vmatprep.subr.bf16.mxu0 0
  %3832 = vmatpush1.bf16.msra.mxu0 %v2575
  %3833 = vmatprep.subr.bf16.mxu0 0
  %3834 = vmatpush1.bf16.msra.mxu0 %v2576
  %3835 = vmatprep.subr.bf16.mxu0 0
  %3836 = vmatpush1.bf16.msra.mxu0 %v2577
  %3837 = vmatprep.subr.bf16.mxu0 0
  %3838 = vmatpush1.bf16.msra.mxu0 %v2578
  %3839 = vmatprep.subr.bf16.mxu0 0
  %3840 = vmatpush1.bf16.msra.mxu0 %v2579
  %3841 = vmatprep.subr.bf16.mxu0 0
  %3842 = vmatpush1.bf16.msra.mxu0 %v2580
  %3843 = vmatprep.subr.bf16.mxu0 0
  %3844 = vmatpush1.bf16.msra.mxu0 %v2581
  %3845 = vmatprep.mubr.bf16.mxu0 %v1077
  %3846 = vmatmul.mubr.bf16.gmra.mrb[0].mxu0 %v1076
  %v3847 = vpop.f32.mrb[0].mxu0
  %v3848 = vadd.f32 %v3783, %v3847
  %v3849 = vpop.f32.mrb[0].mxu0
  %v3850 = vpop.f32.mrb[0].mxu0
  %v3851 = vadd.f32 %v3786, %v3850
  %v3852 = vpop.f32.mrb[0].mxu0
  %3853 = vmatprep.mubr.bf16.mxu0 %v1109
  %3854 = vmatmul.mubr.bf16.gmra.mrb[0].mxu0 %v1108
  %v3855 = vpop.f32.mrb[0].mxu0
  %v3856 = vadd.f32 %v3791, %v3855
  %v3857 = vpop.f32.mrb[0].mxu0
  %v3858 = vpop.f32.mrb[0].mxu0
  %v3859 = vadd.f32 %v3794, %v3858
  %v3860 = vpop.f32.mrb[0].mxu0
  %3861 = vmatprep.mubr.bf16.mxu0 %v1141
  %3862 = vmatmul.mubr.bf16.gmra.mrb[0].mxu0 %v1140
  %v3863 = vpop.f32.mrb[0].mxu0
  %v3864 = vadd.f32 %v3799, %v3863
  %v3865 = vpop.f32.mrb[0].mxu0
  %v3866 = vpop.f32.mrb[0].mxu0
  %v3867 = vadd.f32 %v3802, %v3866
  %v3868 = vpop.f32.mrb[0].mxu0
  %3869 = vmatprep.mubr.bf16.mxu0 %v1173
  %3870 = vmatmul.mubr.bf16.gmra.mrb[0].mxu0 %v1172
  %v3871 = vpop.f32.mrb[0].mxu0
  %v3872 = vadd.f32 %v3807, %v3871
  %v3873 = vpop.f32.mrb[0].mxu0
  %v3874 = vpop.f32.mrb[0].mxu0
  %v3875 = vadd.f32 %v3810, %v3874
  %v3876 = vpop.f32.mrb[0].mxu0
  %3877 = vdwg.mxu0
  %v3878 = vmax.f32 %v3848, 0.0
  %v3879 = vmax.f32 %v3851, 0.0
  %v3880 = vmax.f32 %v3856, 0.0
  %v3881 = vmax.f32 %v3859, 0.0
  %v3882 = vmax.f32 %v3864, 0.0
  %v3883 = vmax.f32 %v3867, 0.0
  %v3884 = vmax.f32 %v3872, 0.0
  %v3885 = vmax.f32 %v3875, 0.0
  %v3886 = vpack.c.bf16 %v3879, %v3878
  %v3887 = vpack.c.bf16 %v3881, %v3880
  %v3888 = vpack.c.bf16 %v3883, %v3882
  %v3889 = vpack.c.bf16 %v3885, %v3884
  %v3894 = vunpack.c.l.b16 %v3886
  %v3895 = vunpack.c.h.b16 %v3886
  %v3896 = vunpack.c.l.b16 %v3887
  %v3897 = vunpack.c.h.b16 %v3887
  %v3898 = vunpack.c.l.b16 %v3888
  %v3899 = vunpack.c.h.b16 %v3888
  %v3900 = vunpack.c.l.b16 %v3889
  %v3901 = vunpack.c.h.b16 %v3889
  %v3902 = vpack.c.b16 %v3894, %v3894
  %v3903 = vpack.c.b16 %v3895, %v3895
  %v3904 = vpack.c.b16 %v3896, %v3896
  %v3905 = vpack.c.b16 %v3897, %v3897
  %v3906 = vpack.c.b16 %v3898, %v3898
  %v3907 = vpack.c.b16 %v3899, %v3899
  %v3908 = vpack.c.b16 %v3900, %v3900
  %v3909 = vpack.c.b16 %v3901, %v3901
  %3918 = vst [vmem:[%s3] sm:$0xf] %v3902
  %3919 = vst [vmem:[%s3 + $0x4] sm:$0xf] %v3903
  %3920 = vst [vmem:[%s3 + $0x8] sm:$0xf] %v3904
  %3921 = vst [vmem:[%s3 + $0xc] sm:$0xf] %v3905
  %3922 = vst [vmem:[%s3 + $0x10] sm:$0xf] %v3906
  %3923 = vst [vmem:[%s3 + $0x14] sm:$0xf] %v3907
  %3924 = vst [vmem:[%s3 + $0x18] sm:$0xf] %v3908
  %3925 = vst [vmem:[%s3 + $0x1c] sm:$0xf] %v3909
  // Predicated region
  $region14: #{simple_net_forward.4} parent=0 // pred_check
    _
  $region15: #{simple_net_forward.4} parent=0 // pred_check_branch
    %3927 = sbr.rel (0) target = $region17
  $region16: #{simple_net_forward.4} parent=0 // pred_region
    _
  $region17: #{simple_net_forward.4} parent=0 // pred_fallthru
    _
  // Predicated region
  $region18: #{simple_net_forward.4} parent=0 // pred_check
    _
  $region19: #{simple_net_forward.4} parent=0 // pred_check_branch
    %3929 = sbr.rel (0) target = $region21
  $region20: #{simple_net_forward.4} parent=0 // pred_region
    _
  $region21: #{simple_net_forward.4} parent=0 // pred_fallthru
    _

// kernel: simple_net_forward.5
$region0: #{simple_net_forward.5}
  #allocation0 [shape = 'u32[]', space=smem, size = 0x4, offset = 0x4, fixed_abs, tag = 'smem constant byte address 0x4 - core index']
  #allocation1 [shape = 'u32[144,128]{1,0:T(1,128)}', space=vmem, size = 0x12000, scoped, tag = 'internal scratch']
  %s0 = inlined_call_operand.vmem [shape: bf16[16,3200], index: 0, kind: input, shape index: {}]
  %s1 = inlined_call_operand.vmem [shape: bf16[3200,128], index: 1, kind: input, shape index: {}]
  %s2 = inlined_call_operand.vmem [shape: f32[1,128], index: 2, kind: input, shape index: {}]
  %s3 = inlined_call_operand.vmem [shape: bf16[128,128], index: 3, kind: input, shape index: {}]
  %s4 = inlined_call_operand.vmem [shape: f32[1,128], index: 4, kind: input, shape index: {}]
  %s5 = inlined_call_operand.vmem [shape: f32[16,128], index: 5, kind: output, shape index: {}]
  %s6 = sld [smem:[#allocation0]]
  $region30: #{simple_net_forward.5} parent=0
    _
  %s8 = ssub.s32 1, %s6
  %s9 = scalar_select 0, %s8, %s6
  // Predicated region
  $region2: #{simple_net_forward.5} parent=0 // pred_check
    _
  $region3: #{simple_net_forward.5} parent=0 // pred_check_branch
    %11 = sbr.rel (0) target = $region5
  $region4: #{simple_net_forward.5} parent=0 // pred_region
    _
  $region5: #{simple_net_forward.5} parent=0 // pred_fallthru
    _
  // Predicated region
  $region6: #{simple_net_forward.5} parent=0 // pred_check
    _
  $region7: #{simple_net_forward.5} parent=0 // pred_check_branch
    %13 = sbr.rel (0) target = $region9
  $region8: #{simple_net_forward.5} parent=0 // pred_region
    _
  $region9: #{simple_net_forward.5} parent=0 // pred_fallthru
    _
  // Predicated region
  $region10: #{simple_net_forward.5} parent=0 // pred_check
    _
  $region11: #{simple_net_forward.5} parent=0 // pred_check_branch
    %15 = sbr.rel (0) target = $region13
  $region12: #{simple_net_forward.5} parent=0 // pred_region
    _
  $region13: #{simple_net_forward.5} parent=0 // pred_fallthru
    _
  // Predicated region
  $region14: #{simple_net_forward.5} parent=0 // pred_check
    _
  $region15: #{simple_net_forward.5} parent=0 // pred_check_branch
    %17 = sbr.rel (0) target = $region17
  $region16: #{simple_net_forward.5} parent=0 // pred_region
    _
  $region17: #{simple_net_forward.5} parent=0 // pred_fallthru
    _
  // Predicated region
  $region18: #{simple_net_forward.5} parent=0 // pred_check
    _
  $region19: #{simple_net_forward.5} parent=0 // pred_check_branch
    %19 = sbr.rel (0) target = $region21
  $region20: #{simple_net_forward.5} parent=0 // pred_region
    _
  $region21: #{simple_net_forward.5} parent=0 // pred_fallthru
    _
  %v21 = vld [vmem:[%s0] sm:$0xff]
  %v22 = vld [vmem:[%s0 + $0x8] sm:$0xff]
  %v23 = vld [vmem:[%s0 + $0x10] sm:$0xff]
  %v24 = vld [vmem:[%s0 + $0x18] sm:$0xff]
  %v25 = vld [vmem:[%s0 + $0x20] sm:$0xff]
  %v26 = vld [vmem:[%s0 + $0x28] sm:$0xff]
  %v27 = vld [vmem:[%s0 + $0x30] sm:$0xff]
  %v28 = vld [vmem:[%s0 + $0x38] sm:$0xff]
  %v29 = vld [vmem:[%s0 + $0x40] sm:$0xff]
  %v30 = vld [vmem:[%s0 + $0x48] sm:$0xff]
  %v31 = vld [vmem:[%s0 + $0x50] sm:$0xff]
  %v32 = vld [vmem:[%s0 + $0x58] sm:$0xff]
  %v33 = vld [vmem:[%s0 + $0x60] sm:$0xf]
  %v34 = vld [vmem:[%s0 + $0x64] sm:$0xff]
  %v35 = vld [vmem:[%s0 + $0x6c] sm:$0xff]
  %v36 = vld [vmem:[%s0 + $0x74] sm:$0xff]
  %v37 = vld [vmem:[%s0 + $0x7c] sm:$0xff]
  %v38 = vld [vmem:[%s0 + $0x84] sm:$0xff]
  %v39 = vld [vmem:[%s0 + $0x8c] sm:$0xff]
  %v40 = vld [vmem:[%s0 + $0x94] sm:$0xff]
  %v41 = vld [vmem:[%s0 + $0x9c] sm:$0xff]
  %v42 = vld [vmem:[%s0 + $0xa4] sm:$0xff]
  %v43 = vld [vmem:[%s0 + $0xac] sm:$0xff]
  %v44 = vld [vmem:[%s0 + $0xb4] sm:$0xff]
  %v45 = vld [vmem:[%s0 + $0xbc] sm:$0xff]
  %v46 = vld [vmem:[%s0 + $0xc4] sm:$0xf]
  %v47 = vld [vmem:[%s1] sm:$0xf]
  %v48 = vld [vmem:[%s1 + $0x4] sm:$0xf]
  %v49 = vld [vmem:[%s1 + $0x8] sm:$0xf]
  %v50 = vld [vmem:[%s1 + $0xc] sm:$0xf]
  %v51 = vld [vmem:[%s1 + $0x10] sm:$0xf]
  %v52 = vld [vmem:[%s1 + $0x14] sm:$0xf]
  %v53 = vld [vmem:[%s1 + $0x18] sm:$0xf]
  %v54 = vld [vmem:[%s1 + $0x1c] sm:$0xf]
  %v55 = vld [vmem:[%s1 + $0x20] sm:$0xf]
  %v56 = vld [vmem:[%s1 + $0x24] sm:$0xf]
  %v57 = vld [vmem:[%s1 + $0x28] sm:$0xf]
  %v58 = vld [vmem:[%s1 + $0x2c] sm:$0xf]
  %v59 = vld [vmem:[%s1 + $0x30] sm:$0xf]
  %v60 = vld [vmem:[%s1 + $0x34] sm:$0xf]
  %v61 = vld [vmem:[%s1 + $0x38] sm:$0xf]
  %v62 = vld [vmem:[%s1 + $0x3c] sm:$0xf]
  %v63 = vld [vmem:[%s1 + $0x40] sm:$0xf]
  %v64 = vld [vmem:[%s1 + $0x44] sm:$0xf]
  %v65 = vld [vmem:[%s1 + $0x48] sm:$0xf]
  %v66 = vld [vmem:[%s1 + $0x4c] sm:$0xf]
  %v67 = vld [vmem:[%s1 + $0x50] sm:$0xf]
  %v68 = vld [vmem:[%s1 + $0x54] sm:$0xf]
  %v69 = vld [vmem:[%s1 + $0x58] sm:$0xf]
  %v70 = vld [vmem:[%s1 + $0x5c] sm:$0xf]
  %v71 = vld [vmem:[%s1 + $0x60] sm:$0xf]
  %v72 = vld [vmem:[%s1 + $0x64] sm:$0xf]
  %v73 = vld [vmem:[%s1 + $0x68] sm:$0xf]
  %v74 = vld [vmem:[%s1 + $0x6c] sm:$0xf]
  %v75 = vld [vmem:[%s1 + $0x70] sm:$0xf]
  %v76 = vld [vmem:[%s1 + $0x74] sm:$0xf]
  %v77 = vld [vmem:[%s1 + $0x78] sm:$0xf]
  %v78 = vld [vmem:[%s1 + $0x7c] sm:$0xf]
  %v79 = vld [vmem:[%s1 + $0x80] sm:$0xf]
  %v80 = vld [vmem:[%s1 + $0x84] sm:$0xf]
  %v81 = vld [vmem:[%s1 + $0x88] sm:$0xf]
  %v82 = vld [vmem:[%s1 + $0x8c] sm:$0xf]
  %v83 = vld [vmem:[%s1 + $0x90] sm:$0xf]
  %v84 = vld [vmem:[%s1 + $0x94] sm:$0xf]
  %v85 = vld [vmem:[%s1 + $0x98] sm:$0xf]
  %v86 = vld [vmem:[%s1 + $0x9c] sm:$0xf]
  %v87 = vld [vmem:[%s1 + $0xa0] sm:$0xf]
  %v88 = vld [vmem:[%s1 + $0xa4] sm:$0xf]
  %v89 = vld [vmem:[%s1 + $0xa8] sm:$0xf]
  %v90 = vld [vmem:[%s1 + $0xac] sm:$0xf]
  %v91 = vld [vmem:[%s1 + $0xb0] sm:$0xf]
  %v92 = vld [vmem:[%s1 + $0xb4] sm:$0xf]
  %v93 = vld [vmem:[%s1 + $0xb8] sm:$0xf]
  %v94 = vld [vmem:[%s1 + $0xbc] sm:$0xf]
  %v95 = vld [vmem:[%s1 + $0xc0] sm:$0xf]
  %v96 = vld [vmem:[%s1 + $0xc4] sm:$0xf]
  %v97 = vld [vmem:[%s1 + $0xc8] sm:$0xf]
  %v98 = vld [vmem:[%s1 + $0xcc] sm:$0xf]
  %v99 = vld [vmem:[%s1 + $0xd0] sm:$0xf]
  %v100 = vld [vmem:[%s1 + $0xd4] sm:$0xf]
  %v101 = vld [vmem:[%s1 + $0xd8] sm:$0xf]
  %v102 = vld [vmem:[%s1 + $0xdc] sm:$0xf]
  %v103 = vld [vmem:[%s1 + $0xe0] sm:$0xf]
  %v104 = vld [vmem:[%s1 + $0xe4] sm:$0xf]
  %v105 = vld [vmem:[%s1 + $0xe8] sm:$0xf]
  %v106 = vld [vmem:[%s1 + $0xec] sm:$0xf]
  %v107 = vld [vmem:[%s1 + $0xf0] sm:$0xf]
  %v108 = vld [vmem:[%s1 + $0xf4] sm:$0xf]
  %v109 = vld [vmem:[%s1 + $0xf8] sm:$0xf]
  %v110 = vld [vmem:[%s1 + $0xfc] sm:$0xf]
  %v111 = vld [vmem:[%s1 + $0x100] sm:$0xf]
  %v112 = vld [vmem:[%s1 + $0x104] sm:$0xf]
  %v113 = vld [vmem:[%s1 + $0x108] sm:$0xf]
  %v114 = vld [vmem:[%s1 + $0x10c] sm:$0xf]
  %v115 = vld [vmem:[%s1 + $0x110] sm:$0xf]
  %v116 = vld [vmem:[%s1 + $0x114] sm:$0xf]
  %v117 = vld [vmem:[%s1 + $0x118] sm:$0xf]
  %v118 = vld [vmem:[%s1 + $0x11c] sm:$0xf]
  %v119 = vld [vmem:[%s1 + $0x120] sm:$0xf]
  %v120 = vld [vmem:[%s1 + $0x124] sm:$0xf]
  %v121 = vld [vmem:[%s1 + $0x128] sm:$0xf]
  %v122 = vld [vmem:[%s1 + $0x12c] sm:$0xf]
  %v123 = vld [vmem:[%s1 + $0x130] sm:$0xf]
  %v124 = vld [vmem:[%s1 + $0x134] sm:$0xf]
  %v125 = vld [vmem:[%s1 + $0x138] sm:$0xf]
  %v126 = vld [vmem:[%s1 + $0x13c] sm:$0xf]
  %v127 = vld [vmem:[%s1 + $0x140] sm:$0xf]
  %v128 = vld [vmem:[%s1 + $0x144] sm:$0xf]
  %v129 = vld [vmem:[%s1 + $0x148] sm:$0xf]
  %v130 = vld [vmem:[%s1 + $0x14c] sm:$0xf]
  %v131 = vld [vmem:[%s1 + $0x150] sm:$0xf]
  %v132 = vld [vmem:[%s1 + $0x154] sm:$0xf]
  %v133 = vld [vmem:[%s1 + $0x158] sm:$0xf]
  %v134 = vld [vmem:[%s1 + $0x15c] sm:$0xf]
  %v135 = vld [vmem:[%s1 + $0x160] sm:$0xf]
  %v136 = vld [vmem:[%s1 + $0x164] sm:$0xf]
  %v137 = vld [vmem:[%s1 + $0x168] sm:$0xf]
  %v138 = vld [vmem:[%s1 + $0x16c] sm:$0xf]
  %v139 = vld [vmem:[%s1 + $0x170] sm:$0xf]
  %v140 = vld [vmem:[%s1 + $0x174] sm:$0xf]
  %v141 = vld [vmem:[%s1 + $0x178] sm:$0xf]
  %v142 = vld [vmem:[%s1 + $0x17c] sm:$0xf]
  %v143 = vld [vmem:[%s1 + $0x180] sm:$0xf]
  %v144 = vld [vmem:[%s1 + $0x184] sm:$0xf]
  %v145 = vld [vmem:[%s1 + $0x188] sm:$0xf]
  %v146 = vld [vmem:[%s1 + $0x18c] sm:$0xf]
  %v147 = vld [vmem:[%s1 + $0x190] sm:$0xf]
  %v148 = vld [vmem:[%s1 + $0x194] sm:$0xf]
  %v149 = vld [vmem:[%s1 + $0x198] sm:$0xf]
  %v150 = vld [vmem:[%s1 + $0x19c] sm:$0xf]
  %v151 = vld [vmem:[%s1 + $0x1a0] sm:$0xf]
  %v152 = vld [vmem:[%s1 + $0x1a4] sm:$0xf]
  %v153 = vld [vmem:[%s1 + $0x1a8] sm:$0xf]
  %v154 = vld [vmem:[%s1 + $0x1ac] sm:$0xf]
  %v155 = vld [vmem:[%s1 + $0x1b0] sm:$0xf]
  %v156 = vld [vmem:[%s1 + $0x1b4] sm:$0xf]
  %v157 = vld [vmem:[%s1 + $0x1b8] sm:$0xf]
  %v158 = vld [vmem:[%s1 + $0x1bc] sm:$0xf]
  %v159 = vld [vmem:[%s1 + $0x1c0] sm:$0xf]
  %v160 = vld [vmem:[%s1 + $0x1c4] sm:$0xf]
  %v161 = vld [vmem:[%s1 + $0x1c8] sm:$0xf]
  %v162 = vld [vmem:[%s1 + $0x1cc] sm:$0xf]
  %v163 = vld [vmem:[%s1 + $0x1d0] sm:$0xf]
  %v164 = vld [vmem:[%s1 + $0x1d4] sm:$0xf]
  %v165 = vld [vmem:[%s1 + $0x1d8] sm:$0xf]
  %v166 = vld [vmem:[%s1 + $0x1dc] sm:$0xf]
  %v167 = vld [vmem:[%s1 + $0x1e0] sm:$0xf]
  %v168 = vld [vmem:[%s1 + $0x1e4] sm:$0xf]
  %v169 = vld [vmem:[%s1 + $0x1e8] sm:$0xf]
  %v170 = vld [vmem:[%s1 + $0x1ec] sm:$0xf]
  %v171 = vld [vmem:[%s1 + $0x1f0] sm:$0xf]
  %v172 = vld [vmem:[%s1 + $0x1f4] sm:$0xf]
  %v173 = vld [vmem:[%s1 + $0x1f8] sm:$0xf]
  %v174 = vld [vmem:[%s1 + $0x1fc] sm:$0xf]
  %v175 = vld [vmem:[%s1 + $0x200] sm:$0xf]
  %v176 = vld [vmem:[%s1 + $0x204] sm:$0xf]
  %v177 = vld [vmem:[%s1 + $0x208] sm:$0xf]
  %v178 = vld [vmem:[%s1 + $0x20c] sm:$0xf]
  %v179 = vld [vmem:[%s1 + $0x210] sm:$0xf]
  %v180 = vld [vmem:[%s1 + $0x214] sm:$0xf]
  %v181 = vld [vmem:[%s1 + $0x218] sm:$0xf]
  %v182 = vld [vmem:[%s1 + $0x21c] sm:$0xf]
  %v183 = vld [vmem:[%s1 + $0x220] sm:$0xf]
  %v184 = vld [vmem:[%s1 + $0x224] sm:$0xf]
  %v185 = vld [vmem:[%s1 + $0x228] sm:$0xf]
  %v186 = vld [vmem:[%s1 + $0x22c] sm:$0xf]
  %v187 = vld [vmem:[%s1 + $0x230] sm:$0xf]
  %v188 = vld [vmem:[%s1 + $0x234] sm:$0xf]
  %v189 = vld [vmem:[%s1 + $0x238] sm:$0xf]
  %v190 = vld [vmem:[%s1 + $0x23c] sm:$0xf]
  %v191 = vld [vmem:[%s1 + $0x240] sm:$0xf]
  %v192 = vld [vmem:[%s1 + $0x244] sm:$0xf]
  %v193 = vld [vmem:[%s1 + $0x248] sm:$0xf]
  %v194 = vld [vmem:[%s1 + $0x24c] sm:$0xf]
  %v195 = vld [vmem:[%s1 + $0x250] sm:$0xf]
  %v196 = vld [vmem:[%s1 + $0x254] sm:$0xf]
  %v197 = vld [vmem:[%s1 + $0x258] sm:$0xf]
  %v198 = vld [vmem:[%s1 + $0x25c] sm:$0xf]
  %v199 = vld [vmem:[%s1 + $0x260] sm:$0xf]
  %v200 = vld [vmem:[%s1 + $0x264] sm:$0xf]
  %v201 = vld [vmem:[%s1 + $0x268] sm:$0xf]
  %v202 = vld [vmem:[%s1 + $0x26c] sm:$0xf]
  %v203 = vld [vmem:[%s1 + $0x270] sm:$0xf]
  %v204 = vld [vmem:[%s1 + $0x274] sm:$0xf]
  %v205 = vld [vmem:[%s1 + $0x278] sm:$0xf]
  %v206 = vld [vmem:[%s1 + $0x27c] sm:$0xf]
  %v207 = vld [vmem:[%s1 + $0x280] sm:$0xf]
  %v208 = vld [vmem:[%s1 + $0x284] sm:$0xf]
  %v209 = vld [vmem:[%s1 + $0x288] sm:$0xf]
  %v210 = vld [vmem:[%s1 + $0x28c] sm:$0xf]
  %v211 = vld [vmem:[%s1 + $0x290] sm:$0xf]
  %v212 = vld [vmem:[%s1 + $0x294] sm:$0xf]
  %v213 = vld [vmem:[%s1 + $0x298] sm:$0xf]
  %v214 = vld [vmem:[%s1 + $0x29c] sm:$0xf]
  %v215 = vld [vmem:[%s1 + $0x2a0] sm:$0xf]
  %v216 = vld [vmem:[%s1 + $0x2a4] sm:$0xf]
  %v217 = vld [vmem:[%s1 + $0x2a8] sm:$0xf]
  %v218 = vld [vmem:[%s1 + $0x2ac] sm:$0xf]
  %v219 = vld [vmem:[%s1 + $0x2b0] sm:$0xf]
  %v220 = vld [vmem:[%s1 + $0x2b4] sm:$0xf]
  %v221 = vld [vmem:[%s1 + $0x2b8] sm:$0xf]
  %v222 = vld [vmem:[%s1 + $0x2bc] sm:$0xf]
  %v223 = vld [vmem:[%s1 + $0x2c0] sm:$0xf]
  %v224 = vld [vmem:[%s1 + $0x2c4] sm:$0xf]
  %v225 = vld [vmem:[%s1 + $0x2c8] sm:$0xf]
  %v226 = vld [vmem:[%s1 + $0x2cc] sm:$0xf]
  %v227 = vld [vmem:[%s1 + $0x2d0] sm:$0xf]
  %v228 = vld [vmem:[%s1 + $0x2d4] sm:$0xf]
  %v229 = vld [vmem:[%s1 + $0x2d8] sm:$0xf]
  %v230 = vld [vmem:[%s1 + $0x2dc] sm:$0xf]
  %v231 = vld [vmem:[%s1 + $0x2e0] sm:$0xf]
  %v232 = vld [vmem:[%s1 + $0x2e4] sm:$0xf]
  %v233 = vld [vmem:[%s1 + $0x2e8] sm:$0xf]
  %v234 = vld [vmem:[%s1 + $0x2ec] sm:$0xf]
  %v235 = vld [vmem:[%s1 + $0x2f0] sm:$0xf]
  %v236 = vld [vmem:[%s1 + $0x2f4] sm:$0xf]
  %v237 = vld [vmem:[%s1 + $0x2f8] sm:$0xf]
  %v238 = vld [vmem:[%s1 + $0x2fc] sm:$0xf]
  %v239 = vld [vmem:[%s1 + $0x300] sm:$0xf]
  %v240 = vld [vmem:[%s1 + $0x304] sm:$0xf]
  %v241 = vld [vmem:[%s1 + $0x308] sm:$0xf]
  %v242 = vld [vmem:[%s1 + $0x30c] sm:$0xf]
  %v243 = vld [vmem:[%s1 + $0x310] sm:$0xf]
  %v244 = vld [vmem:[%s1 + $0x314] sm:$0xf]
  %v245 = vld [vmem:[%s1 + $0x318] sm:$0xf]
  %v246 = vld [vmem:[%s1 + $0x31c] sm:$0xf]
  %v247 = vld [vmem:[%s1 + $0x320] sm:$0xf]
  %v248 = vld [vmem:[%s1 + $0x324] sm:$0xf]
  %v249 = vld [vmem:[%s1 + $0x328] sm:$0xf]
  %v250 = vld [vmem:[%s1 + $0x32c] sm:$0xf]
  %v251 = vld [vmem:[%s1 + $0x330] sm:$0xf]
  %v252 = vld [vmem:[%s1 + $0x334] sm:$0xf]
  %v253 = vld [vmem:[%s1 + $0x338] sm:$0xf]
  %v254 = vld [vmem:[%s1 + $0x33c] sm:$0xf]
  %v255 = vld [vmem:[%s1 + $0x340] sm:$0xf]
  %v256 = vld [vmem:[%s1 + $0x344] sm:$0xf]
  %v257 = vld [vmem:[%s1 + $0x348] sm:$0xf]
  %v258 = vld [vmem:[%s1 + $0x34c] sm:$0xf]
  %v259 = vld [vmem:[%s1 + $0x350] sm:$0xf]
  %v260 = vld [vmem:[%s1 + $0x354] sm:$0xf]
  %v261 = vld [vmem:[%s1 + $0x358] sm:$0xf]
  %v262 = vld [vmem:[%s1 + $0x35c] sm:$0xf]
  %v263 = vld [vmem:[%s1 + $0x360] sm:$0xf]
  %v264 = vld [vmem:[%s1 + $0x364] sm:$0xf]
  %v265 = vld [vmem:[%s1 + $0x368] sm:$0xf]
  %v266 = vld [vmem:[%s1 + $0x36c] sm:$0xf]
  %v267 = vld [vmem:[%s1 + $0x370] sm:$0xf]
  %v268 = vld [vmem:[%s1 + $0x374] sm:$0xf]
  %v269 = vld [vmem:[%s1 + $0x378] sm:$0xf]
  %v270 = vld [vmem:[%s1 + $0x37c] sm:$0xf]
  %v271 = vld [vmem:[%s1 + $0x380] sm:$0xf]
  %v272 = vld [vmem:[%s1 + $0x384] sm:$0xf]
  %v273 = vld [vmem:[%s1 + $0x388] sm:$0xf]
  %v274 = vld [vmem:[%s1 + $0x38c] sm:$0xf]
  %v275 = vld [vmem:[%s1 + $0x390] sm:$0xf]
  %v276 = vld [vmem:[%s1 + $0x394] sm:$0xf]
  %v277 = vld [vmem:[%s1 + $0x398] sm:$0xf]
  %v278 = vld [vmem:[%s1 + $0x39c] sm:$0xf]
  %v279 = vld [vmem:[%s1 + $0x3a0] sm:$0xf]
  %v280 = vld [vmem:[%s1 + $0x3a4] sm:$0xf]
  %v281 = vld [vmem:[%s1 + $0x3a8] sm:$0xf]
  %v282 = vld [vmem:[%s1 + $0x3ac] sm:$0xf]
  %v283 = vld [vmem:[%s1 + $0x3b0] sm:$0xf]
  %v284 = vld [vmem:[%s1 + $0x3b4] sm:$0xf]
  %v285 = vld [vmem:[%s1 + $0x3b8] sm:$0xf]
  %v286 = vld [vmem:[%s1 + $0x3bc] sm:$0xf]
  %v287 = vld [vmem:[%s1 + $0x3c0] sm:$0xf]
  %v288 = vld [vmem:[%s1 + $0x3c4] sm:$0xf]
  %v289 = vld [vmem:[%s1 + $0x3c8] sm:$0xf]
  %v290 = vld [vmem:[%s1 + $0x3cc] sm:$0xf]
  %v291 = vld [vmem:[%s1 + $0x3d0] sm:$0xf]
  %v292 = vld [vmem:[%s1 + $0x3d4] sm:$0xf]
  %v293 = vld [vmem:[%s1 + $0x3d8] sm:$0xf]
  %v294 = vld [vmem:[%s1 + $0x3dc] sm:$0xf]
  %v295 = vld [vmem:[%s1 + $0x3e0] sm:$0xf]
  %v296 = vld [vmem:[%s1 + $0x3e4] sm:$0xf]
  %v297 = vld [vmem:[%s1 + $0x3e8] sm:$0xf]
  %v298 = vld [vmem:[%s1 + $0x3ec] sm:$0xf]
  %v299 = vld [vmem:[%s1 + $0x3f0] sm:$0xf]
  %v300 = vld [vmem:[%s1 + $0x3f4] sm:$0xf]
  %v301 = vld [vmem:[%s1 + $0x3f8] sm:$0xf]
  %v302 = vld [vmem:[%s1 + $0x3fc] sm:$0xf]
  %v303 = vld [vmem:[%s1 + $0x400] sm:$0xf]
  %v304 = vld [vmem:[%s1 + $0x404] sm:$0xf]
  %v305 = vld [vmem:[%s1 + $0x408] sm:$0xf]
  %v306 = vld [vmem:[%s1 + $0x40c] sm:$0xf]
  %v307 = vld [vmem:[%s1 + $0x410] sm:$0xf]
  %v308 = vld [vmem:[%s1 + $0x414] sm:$0xf]
  %v309 = vld [vmem:[%s1 + $0x418] sm:$0xf]
  %v310 = vld [vmem:[%s1 + $0x41c] sm:$0xf]
  %v311 = vld [vmem:[%s1 + $0x420] sm:$0xf]
  %v312 = vld [vmem:[%s1 + $0x424] sm:$0xf]
  %v313 = vld [vmem:[%s1 + $0x428] sm:$0xf]
  %v314 = vld [vmem:[%s1 + $0x42c] sm:$0xf]
  %v315 = vld [vmem:[%s1 + $0x430] sm:$0xf]
  %v316 = vld [vmem:[%s1 + $0x434] sm:$0xf]
  %v317 = vld [vmem:[%s1 + $0x438] sm:$0xf]
  %v318 = vld [vmem:[%s1 + $0x43c] sm:$0xf]
  %v319 = vld [vmem:[%s1 + $0x440] sm:$0xf]
  %v320 = vld [vmem:[%s1 + $0x444] sm:$0xf]
  %v321 = vld [vmem:[%s1 + $0x448] sm:$0xf]
  %v322 = vld [vmem:[%s1 + $0x44c] sm:$0xf]
  %v323 = vld [vmem:[%s1 + $0x450] sm:$0xf]
  %v324 = vld [vmem:[%s1 + $0x454] sm:$0xf]
  %v325 = vld [vmem:[%s1 + $0x458] sm:$0xf]
  %v326 = vld [vmem:[%s1 + $0x45c] sm:$0xf]
  %v327 = vld [vmem:[%s1 + $0x460] sm:$0xf]
  %v328 = vld [vmem:[%s1 + $0x464] sm:$0xf]
  %v329 = vld [vmem:[%s1 + $0x468] sm:$0xf]
  %v330 = vld [vmem:[%s1 + $0x46c] sm:$0xf]
  %v331 = vld [vmem:[%s1 + $0x470] sm:$0xf]
  %v332 = vld [vmem:[%s1 + $0x474] sm:$0xf]
  %v333 = vld [vmem:[%s1 + $0x478] sm:$0xf]
  %v334 = vld [vmem:[%s1 + $0x47c] sm:$0xf]
  %v335 = vld [vmem:[%s1 + $0x480] sm:$0xf]
  %v336 = vld [vmem:[%s1 + $0x484] sm:$0xf]
  %v337 = vld [vmem:[%s1 + $0x488] sm:$0xf]
  %v338 = vld [vmem:[%s1 + $0x48c] sm:$0xf]
  %v339 = vld [vmem:[%s1 + $0x490] sm:$0xf]
  %v340 = vld [vmem:[%s1 + $0x494] sm:$0xf]
  %v341 = vld [vmem:[%s1 + $0x498] sm:$0xf]
  %v342 = vld [vmem:[%s1 + $0x49c] sm:$0xf]
  %v343 = vld [vmem:[%s1 + $0x4a0] sm:$0xf]
  %v344 = vld [vmem:[%s1 + $0x4a4] sm:$0xf]
  %v345 = vld [vmem:[%s1 + $0x4a8] sm:$0xf]
  %v346 = vld [vmem:[%s1 + $0x4ac] sm:$0xf]
  %v347 = vld [vmem:[%s1 + $0x4b0] sm:$0xf]
  %v348 = vld [vmem:[%s1 + $0x4b4] sm:$0xf]
  %v349 = vld [vmem:[%s1 + $0x4b8] sm:$0xf]
  %v350 = vld [vmem:[%s1 + $0x4bc] sm:$0xf]
  %v351 = vld [vmem:[%s1 + $0x4c0] sm:$0xf]
  %v352 = vld [vmem:[%s1 + $0x4c4] sm:$0xf]
  %v353 = vld [vmem:[%s1 + $0x4c8] sm:$0xf]
  %v354 = vld [vmem:[%s1 + $0x4cc] sm:$0xf]
  %v355 = vld [vmem:[%s1 + $0x4d0] sm:$0xf]
  %v356 = vld [vmem:[%s1 + $0x4d4] sm:$0xf]
  %v357 = vld [vmem:[%s1 + $0x4d8] sm:$0xf]
  %v358 = vld [vmem:[%s1 + $0x4dc] sm:$0xf]
  %v359 = vld [vmem:[%s1 + $0x4e0] sm:$0xf]
  %v360 = vld [vmem:[%s1 + $0x4e4] sm:$0xf]
  %v361 = vld [vmem:[%s1 + $0x4e8] sm:$0xf]
  %v362 = vld [vmem:[%s1 + $0x4ec] sm:$0xf]
  %v363 = vld [vmem:[%s1 + $0x4f0] sm:$0xf]
  %v364 = vld [vmem:[%s1 + $0x4f4] sm:$0xf]
  %v365 = vld [vmem:[%s1 + $0x4f8] sm:$0xf]
  %v366 = vld [vmem:[%s1 + $0x4fc] sm:$0xf]
  %v367 = vld [vmem:[%s1 + $0x500] sm:$0xf]
  %v368 = vld [vmem:[%s1 + $0x504] sm:$0xf]
  %v369 = vld [vmem:[%s1 + $0x508] sm:$0xf]
  %v370 = vld [vmem:[%s1 + $0x50c] sm:$0xf]
  %v371 = vld [vmem:[%s1 + $0x510] sm:$0xf]
  %v372 = vld [vmem:[%s1 + $0x514] sm:$0xf]
  %v373 = vld [vmem:[%s1 + $0x518] sm:$0xf]
  %v374 = vld [vmem:[%s1 + $0x51c] sm:$0xf]
  %v375 = vld [vmem:[%s1 + $0x520] sm:$0xf]
  %v376 = vld [vmem:[%s1 + $0x524] sm:$0xf]
  %v377 = vld [vmem:[%s1 + $0x528] sm:$0xf]
  %v378 = vld [vmem:[%s1 + $0x52c] sm:$0xf]
  %v379 = vld [vmem:[%s1 + $0x530] sm:$0xf]
  %v380 = vld [vmem:[%s1 + $0x534] sm:$0xf]
  %v381 = vld [vmem:[%s1 + $0x538] sm:$0xf]
  %v382 = vld [vmem:[%s1 + $0x53c] sm:$0xf]
  %v383 = vld [vmem:[%s1 + $0x540] sm:$0xf]
  %v384 = vld [vmem:[%s1 + $0x544] sm:$0xf]
  %v385 = vld [vmem:[%s1 + $0x548] sm:$0xf]
  %v386 = vld [vmem:[%s1 + $0x54c] sm:$0xf]
  %v387 = vld [vmem:[%s1 + $0x550] sm:$0xf]
  %v388 = vld [vmem:[%s1 + $0x554] sm:$0xf]
  %v389 = vld [vmem:[%s1 + $0x558] sm:$0xf]
  %v390 = vld [vmem:[%s1 + $0x55c] sm:$0xf]
  %v391 = vld [vmem:[%s1 + $0x560] sm:$0xf]
  %v392 = vld [vmem:[%s1 + $0x564] sm:$0xf]
  %v393 = vld [vmem:[%s1 + $0x568] sm:$0xf]
  %v394 = vld [vmem:[%s1 + $0x56c] sm:$0xf]
  %v395 = vld [vmem:[%s1 + $0x570] sm:$0xf]
  %v396 = vld [vmem:[%s1 + $0x574] sm:$0xf]
  %v397 = vld [vmem:[%s1 + $0x578] sm:$0xf]
  %v398 = vld [vmem:[%s1 + $0x57c] sm:$0xf]
  %v399 = vld [vmem:[%s1 + $0x580] sm:$0xf]
  %v400 = vld [vmem:[%s1 + $0x584] sm:$0xf]
  %v401 = vld [vmem:[%s1 + $0x588] sm:$0xf]
  %v402 = vld [vmem:[%s1 + $0x58c] sm:$0xf]
  %v403 = vld [vmem:[%s1 + $0x590] sm:$0xf]
  %v404 = vld [vmem:[%s1 + $0x594] sm:$0xf]
  %v405 = vld [vmem:[%s1 + $0x598] sm:$0xf]
  %v406 = vld [vmem:[%s1 + $0x59c] sm:$0xf]
  %v407 = vld [vmem:[%s1 + $0x5a0] sm:$0xf]
  %v408 = vld [vmem:[%s1 + $0x5a4] sm:$0xf]
  %v409 = vld [vmem:[%s1 + $0x5a8] sm:$0xf]
  %v410 = vld [vmem:[%s1 + $0x5ac] sm:$0xf]
  %v411 = vld [vmem:[%s1 + $0x5b0] sm:$0xf]
  %v412 = vld [vmem:[%s1 + $0x5b4] sm:$0xf]
  %v413 = vld [vmem:[%s1 + $0x5b8] sm:$0xf]
  %v414 = vld [vmem:[%s1 + $0x5bc] sm:$0xf]
  %v415 = vld [vmem:[%s1 + $0x5c0] sm:$0xf]
  %v416 = vld [vmem:[%s1 + $0x5c4] sm:$0xf]
  %v417 = vld [vmem:[%s1 + $0x5c8] sm:$0xf]
  %v418 = vld [vmem:[%s1 + $0x5cc] sm:$0xf]
  %v419 = vld [vmem:[%s1 + $0x5d0] sm:$0xf]
  %v420 = vld [vmem:[%s1 + $0x5d4] sm:$0xf]
  %v421 = vld [vmem:[%s1 + $0x5d8] sm:$0xf]
  %v422 = vld [vmem:[%s1 + $0x5dc] sm:$0xf]
  %v423 = vld [vmem:[%s1 + $0x5e0] sm:$0xf]
  %v424 = vld [vmem:[%s1 + $0x5e4] sm:$0xf]
  %v425 = vld [vmem:[%s1 + $0x5e8] sm:$0xf]
  %v426 = vld [vmem:[%s1 + $0x5ec] sm:$0xf]
  %v427 = vld [vmem:[%s1 + $0x5f0] sm:$0xf]
  %v428 = vld [vmem:[%s1 + $0x5f4] sm:$0xf]
  %v429 = vld [vmem:[%s1 + $0x5f8] sm:$0xf]
  %v430 = vld [vmem:[%s1 + $0x5fc] sm:$0xf]
  %v431 = vld [vmem:[%s1 + $0x600] sm:$0xf]
  %v432 = vld [vmem:[%s1 + $0x604] sm:$0xf]
  %v433 = vld [vmem:[%s1 + $0x608] sm:$0xf]
  %v434 = vld [vmem:[%s1 + $0x60c] sm:$0xf]
  %v435 = vld [vmem:[%s1 + $0x610] sm:$0xf]
  %v436 = vld [vmem:[%s1 + $0x614] sm:$0xf]
  %v437 = vld [vmem:[%s1 + $0x618] sm:$0xf]
  %v438 = vld [vmem:[%s1 + $0x61c] sm:$0xf]
  %v439 = vld [vmem:[%s1 + $0x620] sm:$0xf]
  %v440 = vld [vmem:[%s1 + $0x624] sm:$0xf]
  %v441 = vld [vmem:[%s1 + $0x628] sm:$0xf]
  %v442 = vld [vmem:[%s1 + $0x62c] sm:$0xf]
  %v443 = vld [vmem:[%s1 + $0x630] sm:$0xf]
  %v444 = vld [vmem:[%s1 + $0x634] sm:$0xf]
  %v445 = vld [vmem:[%s1 + $0x638] sm:$0xf]
  %v446 = vld [vmem:[%s1 + $0x63c] sm:$0xf]
  %v447 = vld [vmem:[%s2] sm:$0x1]
  %v449 = vlaneseq
  %v450 = vshrl.u32 %v449, 7
  %v451 = vsub.s32 0, %v450
  %v452 = vrot.slane %v447, %v451
  %v480 = vunpack.c.l.b16 %v21
  %v481 = vunpack.c.h.b16 %v21
  %v482 = vunpack.c.l.b16 %v22
  %v483 = vunpack.c.h.b16 %v22
  %v484 = vunpack.c.l.b16 %v23
  %v485 = vunpack.c.h.b16 %v23
  %v486 = vunpack.c.l.b16 %v24
  %v487 = vunpack.c.h.b16 %v24
  %v488 = vunpack.c.l.b16 %v25
  %v489 = vunpack.c.h.b16 %v25
  %v490 = vunpack.c.l.b16 %v26
  %v491 = vunpack.c.h.b16 %v26
  %v492 = vunpack.c.l.b16 %v27
  %v493 = vunpack.c.h.b16 %v27
  %v494 = vunpack.c.l.b16 %v28
  %v495 = vunpack.c.h.b16 %v28
  %v496 = vunpack.c.l.b16 %v29
  %v497 = vunpack.c.h.b16 %v29
  %v498 = vunpack.c.l.b16 %v30
  %v499 = vunpack.c.h.b16 %v30
  %v500 = vunpack.c.l.b16 %v31
  %v501 = vunpack.c.h.b16 %v31
  %v502 = vunpack.c.l.b16 %v32
  %v503 = vunpack.c.h.b16 %v32
  %v504 = vunpack.c.l.b16 %v33
  %v505 = vunpack.c.l.b16 %v34
  %v506 = vunpack.c.h.b16 %v34
  %v507 = vunpack.c.l.b16 %v35
  %v508 = vunpack.c.h.b16 %v35
  %v509 = vunpack.c.l.b16 %v36
  %v510 = vunpack.c.h.b16 %v36
  %v511 = vunpack.c.l.b16 %v37
  %v512 = vunpack.c.h.b16 %v37
  %v513 = vunpack.c.l.b16 %v38
  %v514 = vunpack.c.h.b16 %v38
  %v515 = vunpack.c.l.b16 %v39
  %v516 = vunpack.c.h.b16 %v39
  %v517 = vunpack.c.l.b16 %v40
  %v518 = vunpack.c.h.b16 %v40
  %v519 = vunpack.c.l.b16 %v41
  %v520 = vunpack.c.h.b16 %v41
  %v521 = vunpack.c.l.b16 %v42
  %v522 = vunpack.c.h.b16 %v42
  %v523 = vunpack.c.l.b16 %v43
  %v524 = vunpack.c.h.b16 %v43
  %v525 = vunpack.c.l.b16 %v44
  %v526 = vunpack.c.h.b16 %v44
  %v527 = vunpack.c.l.b16 %v45
  %v528 = vunpack.c.h.b16 %v45
  %v529 = vunpack.c.l.b16 %v46
  %v530 = vpack.c.b16 %v505, %v480
  %v531 = vpack.c.b16 %v506, %v481
  %v532 = vpack.c.b16 %v507, %v482
  %v533 = vpack.c.b16 %v508, %v483
  %v534 = vpack.c.b16 %v509, %v484
  %v535 = vpack.c.b16 %v510, %v485
  %v536 = vpack.c.b16 %v511, %v486
  %v537 = vpack.c.b16 %v512, %v487
  %v538 = vpack.c.b16 %v513, %v488
  %v539 = vpack.c.b16 %v514, %v489
  %v540 = vpack.c.b16 %v515, %v490
  %v541 = vpack.c.b16 %v516, %v491
  %v542 = vpack.c.b16 %v517, %v492
  %v543 = vpack.c.b16 %v518, %v493
  %v544 = vpack.c.b16 %v519, %v494
  %v545 = vpack.c.b16 %v520, %v495
  %v546 = vpack.c.b16 %v521, %v496
  %v547 = vpack.c.b16 %v522, %v497
  %v548 = vpack.c.b16 %v523, %v498
  %v549 = vpack.c.b16 %v524, %v499
  %v550 = vpack.c.b16 %v525, %v500
  %v551 = vpack.c.b16 %v526, %v501
  %v552 = vpack.c.b16 %v527, %v502
  %v553 = vpack.c.b16 %v528, %v503
  %v554 = vpack.c.b16 %v529, %v504
  %v980 = vunpack.c.l.b16 %v47
  %v981 = vunpack.c.l.b16 %v48
  %v982 = vunpack.c.l.b16 %v49
  %v983 = vunpack.c.l.b16 %v50
  %v984 = vunpack.c.l.b16 %v51
  %v985 = vunpack.c.l.b16 %v52
  %v986 = vunpack.c.l.b16 %v53
  %v987 = vunpack.c.l.b16 %v54
  %v988 = vunpack.c.l.b16 %v55
  %v989 = vunpack.c.l.b16 %v56
  %v990 = vunpack.c.l.b16 %v57
  %v991 = vunpack.c.l.b16 %v58
  %v992 = vunpack.c.l.b16 %v59
  %v993 = vunpack.c.l.b16 %v60
  %v994 = vunpack.c.l.b16 %v61
  %v995 = vunpack.c.l.b16 %v62
  %v996 = vunpack.c.l.b16 %v63
  %v997 = vunpack.c.l.b16 %v64
  %v998 = vunpack.c.l.b16 %v65
  %v999 = vunpack.c.l.b16 %v66
  %v1000 = vunpack.c.l.b16 %v67
  %v1001 = vunpack.c.l.b16 %v68
  %v1002 = vunpack.c.l.b16 %v69
  %v1003 = vunpack.c.l.b16 %v70
  %v1004 = vunpack.c.l.b16 %v71
  %v1005 = vunpack.c.l.b16 %v72
  %v1006 = vunpack.c.l.b16 %v73
  %v1007 = vunpack.c.l.b16 %v74
  %v1008 = vunpack.c.l.b16 %v75
  %v1009 = vunpack.c.l.b16 %v76
  %v1010 = vunpack.c.l.b16 %v77
  %v1011 = vunpack.c.l.b16 %v78
  %v1012 = vunpack.c.l.b16 %v79
  %v1013 = vunpack.c.l.b16 %v80
  %v1014 = vunpack.c.l.b16 %v81
  %v1015 = vunpack.c.l.b16 %v82
  %v1016 = vunpack.c.l.b16 %v83
  %v1017 = vunpack.c.l.b16 %v84
  %v1018 = vunpack.c.l.b16 %v85
  %v1019 = vunpack.c.l.b16 %v86
  %v1020 = vunpack.c.l.b16 %v87
  %v1021 = vunpack.c.l.b16 %v88
  %v1022 = vunpack.c.l.b16 %v89
  %v1023 = vunpack.c.l.b16 %v90
  %v1024 = vunpack.c.l.b16 %v91
  %v1025 = vunpack.c.l.b16 %v92
  %v1026 = vunpack.c.l.b16 %v93
  %v1027 = vunpack.c.l.b16 %v94
  %v1028 = vunpack.c.l.b16 %v95
  %v1029 = vunpack.c.l.b16 %v96
  %v1030 = vunpack.c.l.b16 %v97
  %v1031 = vunpack.c.l.b16 %v98
  %v1032 = vunpack.c.l.b16 %v99
  %v1033 = vunpack.c.l.b16 %v100
  %v1034 = vunpack.c.l.b16 %v101
  %v1035 = vunpack.c.l.b16 %v102
  %v1036 = vunpack.c.l.b16 %v103
  %v1037 = vunpack.c.l.b16 %v104
  %v1038 = vunpack.c.l.b16 %v105
  %v1039 = vunpack.c.l.b16 %v106
  %v1040 = vunpack.c.l.b16 %v107
  %v1041 = vunpack.c.l.b16 %v108
  %v1042 = vunpack.c.l.b16 %v109
  %v1043 = vunpack.c.l.b16 %v110
  %v1044 = vunpack.c.l.b16 %v111
  %v1045 = vunpack.c.l.b16 %v112
  %v1046 = vunpack.c.l.b16 %v113
  %v1047 = vunpack.c.l.b16 %v114
  %v1048 = vunpack.c.l.b16 %v115
  %v1049 = vunpack.c.l.b16 %v116
  %v1050 = vunpack.c.l.b16 %v117
  %v1051 = vunpack.c.l.b16 %v118
  %v1052 = vunpack.c.l.b16 %v119
  %v1053 = vunpack.c.l.b16 %v120
  %v1054 = vunpack.c.l.b16 %v121
  %v1055 = vunpack.c.l.b16 %v122
  %v1056 = vunpack.c.l.b16 %v123
  %v1057 = vunpack.c.l.b16 %v124
  %v1058 = vunpack.c.l.b16 %v125
  %v1059 = vunpack.c.l.b16 %v126
  %v1060 = vunpack.c.l.b16 %v127
  %v1061 = vunpack.c.l.b16 %v128
  %v1062 = vunpack.c.l.b16 %v129
  %v1063 = vunpack.c.l.b16 %v130
  %v1064 = vunpack.c.l.b16 %v131
  %v1065 = vunpack.c.l.b16 %v132
  %v1066 = vunpack.c.l.b16 %v133
  %v1067 = vunpack.c.l.b16 %v134
  %v1068 = vunpack.c.l.b16 %v135
  %v1069 = vunpack.c.l.b16 %v136
  %v1070 = vunpack.c.l.b16 %v137
  %v1071 = vunpack.c.l.b16 %v138
  %v1072 = vunpack.c.l.b16 %v139
  %v1073 = vunpack.c.l.b16 %v140
  %v1074 = vunpack.c.l.b16 %v141
  %v1075 = vunpack.c.l.b16 %v142
  %v1076 = vunpack.c.l.b16 %v143
  %v1077 = vunpack.c.l.b16 %v144
  %v1078 = vunpack.c.l.b16 %v145
  %v1079 = vunpack.c.l.b16 %v146
  %v1080 = vunpack.c.l.b16 %v147
  %v1081 = vunpack.c.l.b16 %v148
  %v1082 = vunpack.c.l.b16 %v149
  %v1083 = vunpack.c.l.b16 %v150
  %v1084 = vunpack.c.l.b16 %v151
  %v1085 = vunpack.c.l.b16 %v152
  %v1086 = vunpack.c.l.b16 %v153
  %v1087 = vunpack.c.l.b16 %v154
  %v1088 = vunpack.c.l.b16 %v155
  %v1089 = vunpack.c.l.b16 %v156
  %v1090 = vunpack.c.l.b16 %v157
  %v1091 = vunpack.c.l.b16 %v158
  %v1092 = vunpack.c.l.b16 %v159
  %v1093 = vunpack.c.l.b16 %v160
  %v1094 = vunpack.c.l.b16 %v161
  %v1095 = vunpack.c.l.b16 %v162
  %v1096 = vunpack.c.l.b16 %v163
  %v1097 = vunpack.c.l.b16 %v164
  %v1098 = vunpack.c.l.b16 %v165
  %v1099 = vunpack.c.l.b16 %v166
  %v1100 = vunpack.c.l.b16 %v167
  %v1101 = vunpack.c.l.b16 %v168
  %v1102 = vunpack.c.l.b16 %v169
  %v1103 = vunpack.c.l.b16 %v170
  %v1104 = vunpack.c.l.b16 %v171
  %v1105 = vunpack.c.l.b16 %v172
  %v1106 = vunpack.c.l.b16 %v173
  %v1107 = vunpack.c.l.b16 %v174
  %v1108 = vunpack.c.l.b16 %v175
  %v1109 = vunpack.c.l.b16 %v176
  %v1110 = vunpack.c.l.b16 %v177
  %v1111 = vunpack.c.l.b16 %v178
  %v1112 = vunpack.c.l.b16 %v179
  %v1113 = vunpack.c.l.b16 %v180
  %v1114 = vunpack.c.l.b16 %v181
  %v1115 = vunpack.c.l.b16 %v182
  %v1116 = vunpack.c.l.b16 %v183
  %v1117 = vunpack.c.l.b16 %v184
  %v1118 = vunpack.c.l.b16 %v185
  %v1119 = vunpack.c.l.b16 %v186
  %v1120 = vunpack.c.l.b16 %v187
  %v1121 = vunpack.c.l.b16 %v188
  %v1122 = vunpack.c.l.b16 %v189
  %v1123 = vunpack.c.l.b16 %v190
  %v1124 = vunpack.c.l.b16 %v191
  %v1125 = vunpack.c.l.b16 %v192
  %v1126 = vunpack.c.l.b16 %v193
  %v1127 = vunpack.c.l.b16 %v194
  %v1128 = vunpack.c.l.b16 %v195
  %v1129 = vunpack.c.l.b16 %v196
  %v1130 = vunpack.c.l.b16 %v197
  %v1131 = vunpack.c.l.b16 %v198
  %v1132 = vunpack.c.l.b16 %v199
  %v1133 = vunpack.c.l.b16 %v200
  %v1134 = vunpack.c.l.b16 %v201
  %v1135 = vunpack.c.l.b16 %v202
  %v1136 = vunpack.c.l.b16 %v203
  %v1137 = vunpack.c.l.b16 %v204
  %v1138 = vunpack.c.l.b16 %v205
  %v1139 = vunpack.c.l.b16 %v206
  %v1140 = vunpack.c.l.b16 %v207
  %v1141 = vunpack.c.l.b16 %v208
  %v1142 = vunpack.c.l.b16 %v209
  %v1143 = vunpack.c.l.b16 %v210
  %v1144 = vunpack.c.l.b16 %v211
  %v1145 = vunpack.c.l.b16 %v212
  %v1146 = vunpack.c.l.b16 %v213
  %v1147 = vunpack.c.l.b16 %v214
  %v1148 = vunpack.c.l.b16 %v215
  %v1149 = vunpack.c.l.b16 %v216
  %v1150 = vunpack.c.l.b16 %v217
  %v1151 = vunpack.c.l.b16 %v218
  %v1152 = vunpack.c.l.b16 %v219
  %v1153 = vunpack.c.l.b16 %v220
  %v1154 = vunpack.c.l.b16 %v221
  %v1155 = vunpack.c.l.b16 %v222
  %v1156 = vunpack.c.l.b16 %v223
  %v1157 = vunpack.c.l.b16 %v224
  %v1158 = vunpack.c.l.b16 %v225
  %v1159 = vunpack.c.l.b16 %v226
  %v1160 = vunpack.c.l.b16 %v227
  %v1161 = vunpack.c.l.b16 %v228
  %v1162 = vunpack.c.l.b16 %v229
  %v1163 = vunpack.c.l.b16 %v230
  %v1164 = vunpack.c.l.b16 %v231
  %v1165 = vunpack.c.l.b16 %v232
  %v1166 = vunpack.c.l.b16 %v233
  %v1167 = vunpack.c.l.b16 %v234
  %v1168 = vunpack.c.l.b16 %v235
  %v1169 = vunpack.c.l.b16 %v236
  %v1170 = vunpack.c.l.b16 %v237
  %v1171 = vunpack.c.l.b16 %v238
  %v1172 = vunpack.c.l.b16 %v239
  %v1173 = vunpack.c.l.b16 %v240
  %v1174 = vunpack.c.l.b16 %v241
  %v1175 = vunpack.c.l.b16 %v242
  %v1176 = vunpack.c.l.b16 %v243
  %v1177 = vunpack.c.l.b16 %v244
  %v1178 = vunpack.c.l.b16 %v245
  %v1179 = vunpack.c.l.b16 %v246
  %v1180 = vunpack.c.l.b16 %v247
  %v1181 = vunpack.c.l.b16 %v248
  %v1182 = vunpack.c.l.b16 %v249
  %v1183 = vunpack.c.l.b16 %v250
  %v1184 = vunpack.c.l.b16 %v251
  %v1185 = vunpack.c.l.b16 %v252
  %v1186 = vunpack.c.l.b16 %v253
  %v1187 = vunpack.c.l.b16 %v254
  %v1188 = vunpack.c.l.b16 %v255
  %v1189 = vunpack.c.l.b16 %v256
  %v1190 = vunpack.c.l.b16 %v257
  %v1191 = vunpack.c.l.b16 %v258
  %v1192 = vunpack.c.l.b16 %v259
  %v1193 = vunpack.c.l.b16 %v260
  %v1194 = vunpack.c.l.b16 %v261
  %v1195 = vunpack.c.l.b16 %v262
  %v1196 = vunpack.c.l.b16 %v263
  %v1197 = vunpack.c.l.b16 %v264
  %v1198 = vunpack.c.l.b16 %v265
  %v1199 = vunpack.c.l.b16 %v266
  %v1200 = vunpack.c.l.b16 %v267
  %v1201 = vunpack.c.l.b16 %v268
  %v1202 = vunpack.c.l.b16 %v269
  %v1203 = vunpack.c.l.b16 %v270
  %v1204 = vunpack.c.l.b16 %v271
  %v1205 = vunpack.c.l.b16 %v272
  %v1206 = vunpack.c.l.b16 %v273
  %v1207 = vunpack.c.l.b16 %v274
  %v1208 = vunpack.c.l.b16 %v275
  %v1209 = vunpack.c.l.b16 %v276
  %v1210 = vunpack.c.l.b16 %v277
  %v1211 = vunpack.c.l.b16 %v278
  %v1212 = vunpack.c.l.b16 %v279
  %v1213 = vunpack.c.l.b16 %v280
  %v1214 = vunpack.c.l.b16 %v281
  %v1215 = vunpack.c.l.b16 %v282
  %v1216 = vunpack.c.l.b16 %v283
  %v1217 = vunpack.c.l.b16 %v284
  %v1218 = vunpack.c.l.b16 %v285
  %v1219 = vunpack.c.l.b16 %v286
  %v1220 = vunpack.c.l.b16 %v287
  %v1221 = vunpack.c.l.b16 %v288
  %v1222 = vunpack.c.l.b16 %v289
  %v1223 = vunpack.c.l.b16 %v290
  %v1224 = vunpack.c.l.b16 %v291
  %v1225 = vunpack.c.l.b16 %v292
  %v1226 = vunpack.c.l.b16 %v293
  %v1227 = vunpack.c.l.b16 %v294
  %v1228 = vunpack.c.l.b16 %v295
  %v1229 = vunpack.c.l.b16 %v296
  %v1230 = vunpack.c.l.b16 %v297
  %v1231 = vunpack.c.l.b16 %v298
  %v1232 = vunpack.c.l.b16 %v299
  %v1233 = vunpack.c.l.b16 %v300
  %v1234 = vunpack.c.l.b16 %v301
  %v1235 = vunpack.c.l.b16 %v302
  %v1236 = vunpack.c.l.b16 %v303
  %v1237 = vunpack.c.l.b16 %v304
  %v1238 = vunpack.c.l.b16 %v305
  %v1239 = vunpack.c.l.b16 %v306
  %v1240 = vunpack.c.l.b16 %v307
  %v1241 = vunpack.c.l.b16 %v308
  %v1242 = vunpack.c.l.b16 %v309
  %v1243 = vunpack.c.l.b16 %v310
  %v1244 = vunpack.c.l.b16 %v311
  %v1245 = vunpack.c.l.b16 %v312
  %v1246 = vunpack.c.l.b16 %v313
  %v1247 = vunpack.c.l.b16 %v314
  %v1248 = vunpack.c.l.b16 %v315
  %v1249 = vunpack.c.l.b16 %v316
  %v1250 = vunpack.c.l.b16 %v317
  %v1251 = vunpack.c.l.b16 %v318
  %v1252 = vunpack.c.l.b16 %v319
  %v1253 = vunpack.c.l.b16 %v320
  %v1254 = vunpack.c.l.b16 %v321
  %v1255 = vunpack.c.l.b16 %v322
  %v1256 = vunpack.c.l.b16 %v323
  %v1257 = vunpack.c.l.b16 %v324
  %v1258 = vunpack.c.l.b16 %v325
  %v1259 = vunpack.c.l.b16 %v326
  %v1260 = vunpack.c.l.b16 %v327
  %v1261 = vunpack.c.l.b16 %v328
  %v1262 = vunpack.c.l.b16 %v329
  %v1263 = vunpack.c.l.b16 %v330
  %v1264 = vunpack.c.l.b16 %v331
  %v1265 = vunpack.c.l.b16 %v332
  %v1266 = vunpack.c.l.b16 %v333
  %v1267 = vunpack.c.l.b16 %v334
  %v1268 = vunpack.c.l.b16 %v335
  %v1269 = vunpack.c.l.b16 %v336
  %v1270 = vunpack.c.l.b16 %v337
  %v1271 = vunpack.c.l.b16 %v338
  %v1272 = vunpack.c.l.b16 %v339
  %v1273 = vunpack.c.l.b16 %v340
  %v1274 = vunpack.c.l.b16 %v341
  %v1275 = vunpack.c.l.b16 %v342
  %v1276 = vunpack.c.l.b16 %v343
  %v1277 = vunpack.c.l.b16 %v344
  %v1278 = vunpack.c.l.b16 %v345
  %v1279 = vunpack.c.l.b16 %v346
  %v1280 = vunpack.c.l.b16 %v347
  %v1281 = vunpack.c.l.b16 %v348
  %v1282 = vunpack.c.l.b16 %v349
  %v1283 = vunpack.c.l.b16 %v350
  %v1284 = vunpack.c.l.b16 %v351
  %v1285 = vunpack.c.l.b16 %v352
  %v1286 = vunpack.c.l.b16 %v353
  %v1287 = vunpack.c.l.b16 %v354
  %v1288 = vunpack.c.l.b16 %v355
  %v1289 = vunpack.c.l.b16 %v356
  %v1290 = vunpack.c.l.b16 %v357
  %v1291 = vunpack.c.l.b16 %v358
  %v1292 = vunpack.c.l.b16 %v359
  %v1293 = vunpack.c.l.b16 %v360
  %v1294 = vunpack.c.l.b16 %v361
  %v1295 = vunpack.c.l.b16 %v362
  %v1296 = vunpack.c.l.b16 %v363
  %v1297 = vunpack.c.l.b16 %v364
  %v1298 = vunpack.c.l.b16 %v365
  %v1299 = vunpack.c.l.b16 %v366
  %v1300 = vunpack.c.l.b16 %v367
  %v1301 = vunpack.c.l.b16 %v368
  %v1302 = vunpack.c.l.b16 %v369
  %v1303 = vunpack.c.l.b16 %v370
  %v1304 = vunpack.c.l.b16 %v371
  %v1305 = vunpack.c.l.b16 %v372
  %v1306 = vunpack.c.l.b16 %v373
  %v1307 = vunpack.c.l.b16 %v374
  %v1308 = vunpack.c.l.b16 %v375
  %v1309 = vunpack.c.l.b16 %v376
  %v1310 = vunpack.c.l.b16 %v377
  %v1311 = vunpack.c.l.b16 %v378
  %v1312 = vunpack.c.l.b16 %v379
  %v1313 = vunpack.c.l.b16 %v380
  %v1314 = vunpack.c.l.b16 %v381
  %v1315 = vunpack.c.l.b16 %v382
  %v1316 = vunpack.c.l.b16 %v383
  %v1317 = vunpack.c.l.b16 %v384
  %v1318 = vunpack.c.l.b16 %v385
  %v1319 = vunpack.c.l.b16 %v386
  %v1320 = vunpack.c.l.b16 %v387
  %v1321 = vunpack.c.l.b16 %v388
  %v1322 = vunpack.c.l.b16 %v389
  %v1323 = vunpack.c.l.b16 %v390
  %v1324 = vunpack.c.l.b16 %v391
  %v1325 = vunpack.c.l.b16 %v392
  %v1326 = vunpack.c.l.b16 %v393
  %v1327 = vunpack.c.l.b16 %v394
  %v1328 = vunpack.c.l.b16 %v395
  %v1329 = vunpack.c.l.b16 %v396
  %v1330 = vunpack.c.l.b16 %v397
  %v1331 = vunpack.c.l.b16 %v398
  %v1332 = vunpack.c.l.b16 %v399
  %v1333 = vunpack.c.l.b16 %v400
  %v1334 = vunpack.c.l.b16 %v401
  %v1335 = vunpack.c.l.b16 %v402
  %v1336 = vunpack.c.l.b16 %v403
  %v1337 = vunpack.c.l.b16 %v404
  %v1338 = vunpack.c.l.b16 %v405
  %v1339 = vunpack.c.l.b16 %v406
  %v1340 = vunpack.c.l.b16 %v407
  %v1341 = vunpack.c.l.b16 %v408
  %v1342 = vunpack.c.l.b16 %v409
  %v1343 = vunpack.c.l.b16 %v410
  %v1344 = vunpack.c.l.b16 %v411
  %v1345 = vunpack.c.l.b16 %v412
  %v1346 = vunpack.c.l.b16 %v413
  %v1347 = vunpack.c.l.b16 %v414
  %v1348 = vunpack.c.l.b16 %v415
  %v1349 = vunpack.c.l.b16 %v416
  %v1350 = vunpack.c.l.b16 %v417
  %v1351 = vunpack.c.l.b16 %v418
  %v1352 = vunpack.c.l.b16 %v419
  %v1353 = vunpack.c.l.b16 %v420
  %v1354 = vunpack.c.l.b16 %v421
  %v1355 = vunpack.c.l.b16 %v422
  %v1356 = vunpack.c.l.b16 %v423
  %v1357 = vunpack.c.l.b16 %v424
  %v1358 = vunpack.c.l.b16 %v425
  %v1359 = vunpack.c.l.b16 %v426
  %v1360 = vunpack.c.l.b16 %v427
  %v1361 = vunpack.c.l.b16 %v428
  %v1362 = vunpack.c.l.b16 %v429
  %v1363 = vunpack.c.l.b16 %v430
  %v1364 = vunpack.c.l.b16 %v431
  %v1365 = vunpack.c.l.b16 %v432
  %v1366 = vunpack.c.l.b16 %v433
  %v1367 = vunpack.c.l.b16 %v434
  %v1368 = vunpack.c.l.b16 %v435
  %v1369 = vunpack.c.l.b16 %v436
  %v1370 = vunpack.c.l.b16 %v437
  %v1371 = vunpack.c.l.b16 %v438
  %v1372 = vunpack.c.l.b16 %v439
  %v1373 = vunpack.c.l.b16 %v440
  %v1374 = vunpack.c.l.b16 %v441
  %v1375 = vunpack.c.l.b16 %v442
  %v1376 = vunpack.c.l.b16 %v443
  %v1377 = vunpack.c.l.b16 %v444
  %v1378 = vunpack.c.l.b16 %v445
  %v1379 = vunpack.c.l.b16 %v446
  %v1380 = vpack.c.b16 %v981, %v980
  %v1381 = vpack.c.b16 %v983, %v982
  %v1382 = vpack.c.b16 %v985, %v984
  %v1383 = vpack.c.b16 %v987, %v986
  %v1384 = vpack.c.b16 %v989, %v988
  %v1385 = vpack.c.b16 %v991, %v990
  %v1386 = vpack.c.b16 %v993, %v992
  %v1387 = vpack.c.b16 %v995, %v994
  %v1388 = vpack.c.b16 %v997, %v996
  %v1389 = vpack.c.b16 %v999, %v998
  %v1390 = vpack.c.b16 %v1001, %v1000
  %v1391 = vpack.c.b16 %v1003, %v1002
  %v1392 = vpack.c.b16 %v1005, %v1004
  %v1393 = vpack.c.b16 %v1007, %v1006
  %v1394 = vpack.c.b16 %v1009, %v1008
  %v1395 = vpack.c.b16 %v1011, %v1010
  %v1396 = vpack.c.b16 %v1013, %v1012
  %v1397 = vpack.c.b16 %v1015, %v1014
  %v1398 = vpack.c.b16 %v1017, %v1016
  %v1399 = vpack.c.b16 %v1019, %v1018
  %v1400 = vpack.c.b16 %v1021, %v1020
  %v1401 = vpack.c.b16 %v1023, %v1022
  %v1402 = vpack.c.b16 %v1025, %v1024
  %v1403 = vpack.c.b16 %v1027, %v1026
  %v1404 = vpack.c.b16 %v1029, %v1028
  %v1405 = vpack.c.b16 %v1031, %v1030
  %v1406 = vpack.c.b16 %v1033, %v1032
  %v1407 = vpack.c.b16 %v1035, %v1034
  %v1408 = vpack.c.b16 %v1037, %v1036
  %v1409 = vpack.c.b16 %v1039, %v1038
  %v1410 = vpack.c.b16 %v1041, %v1040
  %v1411 = vpack.c.b16 %v1043, %v1042
  %v1412 = vpack.c.b16 %v1045, %v1044
  %v1413 = vpack.c.b16 %v1047, %v1046
  %v1414 = vpack.c.b16 %v1049, %v1048
  %v1415 = vpack.c.b16 %v1051, %v1050
  %v1416 = vpack.c.b16 %v1053, %v1052
  %v1417 = vpack.c.b16 %v1055, %v1054
  %v1418 = vpack.c.b16 %v1057, %v1056
  %v1419 = vpack.c.b16 %v1059, %v1058
  %v1420 = vpack.c.b16 %v1061, %v1060
  %v1421 = vpack.c.b16 %v1063, %v1062
  %v1422 = vpack.c.b16 %v1065, %v1064
  %v1423 = vpack.c.b16 %v1067, %v1066
  %v1424 = vpack.c.b16 %v1069, %v1068
  %v1425 = vpack.c.b16 %v1071, %v1070
  %v1426 = vpack.c.b16 %v1073, %v1072
  %v1427 = vpack.c.b16 %v1075, %v1074
  %v1428 = vpack.c.b16 %v1077, %v1076
  %v1429 = vpack.c.b16 %v1079, %v1078
  %v1430 = vpack.c.b16 %v1081, %v1080
  %v1431 = vpack.c.b16 %v1083, %v1082
  %v1432 = vpack.c.b16 %v1085, %v1084
  %v1433 = vpack.c.b16 %v1087, %v1086
  %v1434 = vpack.c.b16 %v1089, %v1088
  %v1435 = vpack.c.b16 %v1091, %v1090
  %v1436 = vpack.c.b16 %v1093, %v1092
  %v1437 = vpack.c.b16 %v1095, %v1094
  %v1438 = vpack.c.b16 %v1097, %v1096
  %v1439 = vpack.c.b16 %v1099, %v1098
  %v1440 = vpack.c.b16 %v1101, %v1100
  %v1441 = vpack.c.b16 %v1103, %v1102
  %v1442 = vpack.c.b16 %v1105, %v1104
  %v1443 = vpack.c.b16 %v1107, %v1106
  %v1444 = vpack.c.b16 %v1109, %v1108
  %v1445 = vpack.c.b16 %v1111, %v1110
  %v1446 = vpack.c.b16 %v1113, %v1112
  %v1447 = vpack.c.b16 %v1115, %v1114
  %v1448 = vpack.c.b16 %v1117, %v1116
  %v1449 = vpack.c.b16 %v1119, %v1118
  %v1450 = vpack.c.b16 %v1121, %v1120
  %v1451 = vpack.c.b16 %v1123, %v1122
  %v1452 = vpack.c.b16 %v1125, %v1124
  %v1453 = vpack.c.b16 %v1127, %v1126
  %v1454 = vpack.c.b16 %v1129, %v1128
  %v1455 = vpack.c.b16 %v1131, %v1130
  %v1456 = vpack.c.b16 %v1133, %v1132
  %v1457 = vpack.c.b16 %v1135, %v1134
  %v1458 = vpack.c.b16 %v1137, %v1136
  %v1459 = vpack.c.b16 %v1139, %v1138
  %v1460 = vpack.c.b16 %v1141, %v1140
  %v1461 = vpack.c.b16 %v1143, %v1142
  %v1462 = vpack.c.b16 %v1145, %v1144
  %v1463 = vpack.c.b16 %v1147, %v1146
  %v1464 = vpack.c.b16 %v1149, %v1148
  %v1465 = vpack.c.b16 %v1151, %v1150
  %v1466 = vpack.c.b16 %v1153, %v1152
  %v1467 = vpack.c.b16 %v1155, %v1154
  %v1468 = vpack.c.b16 %v1157, %v1156
  %v1469 = vpack.c.b16 %v1159, %v1158
  %v1470 = vpack.c.b16 %v1161, %v1160
  %v1471 = vpack.c.b16 %v1163, %v1162
  %v1472 = vpack.c.b16 %v1165, %v1164
  %v1473 = vpack.c.b16 %v1167, %v1166
  %v1474 = vpack.c.b16 %v1169, %v1168
  %v1475 = vpack.c.b16 %v1171, %v1170
  %v1476 = vpack.c.b16 %v1173, %v1172
  %v1477 = vpack.c.b16 %v1175, %v1174
  %v1478 = vpack.c.b16 %v1177, %v1176
  %v1479 = vpack.c.b16 %v1179, %v1178
  %v1480 = vpack.c.b16 %v1181, %v1180
  %v1481 = vpack.c.b16 %v1183, %v1182
  %v1482 = vpack.c.b16 %v1185, %v1184
  %v1483 = vpack.c.b16 %v1187, %v1186
  %v1484 = vpack.c.b16 %v1189, %v1188
  %v1485 = vpack.c.b16 %v1191, %v1190
  %v1486 = vpack.c.b16 %v1193, %v1192
  %v1487 = vpack.c.b16 %v1195, %v1194
  %v1488 = vpack.c.b16 %v1197, %v1196
  %v1489 = vpack.c.b16 %v1199, %v1198
  %v1490 = vpack.c.b16 %v1201, %v1200
  %v1491 = vpack.c.b16 %v1203, %v1202
  %v1492 = vpack.c.b16 %v1205, %v1204
  %v1493 = vpack.c.b16 %v1207, %v1206
  %v1494 = vpack.c.b16 %v1209, %v1208
  %v1495 = vpack.c.b16 %v1211, %v1210
  %v1496 = vpack.c.b16 %v1213, %v1212
  %v1497 = vpack.c.b16 %v1215, %v1214
  %v1498 = vpack.c.b16 %v1217, %v1216
  %v1499 = vpack.c.b16 %v1219, %v1218
  %v1500 = vpack.c.b16 %v1221, %v1220
  %v1501 = vpack.c.b16 %v1223, %v1222
  %v1502 = vpack.c.b16 %v1225, %v1224
  %v1503 = vpack.c.b16 %v1227, %v1226
  %v1504 = vpack.c.b16 %v1229, %v1228
  %v1505 = vpack.c.b16 %v1231, %v1230
  %v1506 = vpack.c.b16 %v1233, %v1232
  %v1507 = vpack.c.b16 %v1235, %v1234
  %v1508 = vpack.c.b16 %v1237, %v1236
  %v1509 = vpack.c.b16 %v1239, %v1238
  %v1510 = vpack.c.b16 %v1241, %v1240
  %v1511 = vpack.c.b16 %v1243, %v1242
  %v1512 = vpack.c.b16 %v1245, %v1244
  %v1513 = vpack.c.b16 %v1247, %v1246
  %v1514 = vpack.c.b16 %v1249, %v1248
  %v1515 = vpack.c.b16 %v1251, %v1250
  %v1516 = vpack.c.b16 %v1253, %v1252
  %v1517 = vpack.c.b16 %v1255, %v1254
  %v1518 = vpack.c.b16 %v1257, %v1256
  %v1519 = vpack.c.b16 %v1259, %v1258
  %v1520 = vpack.c.b16 %v1261, %v1260
  %v1521 = vpack.c.b16 %v1263, %v1262
  %v1522 = vpack.c.b16 %v1265, %v1264
  %v1523 = vpack.c.b16 %v1267, %v1266
  %v1524 = vpack.c.b16 %v1269, %v1268
  %v1525 = vpack.c.b16 %v1271, %v1270
  %v1526 = vpack.c.b16 %v1273, %v1272
  %v1527 = vpack.c.b16 %v1275, %v1274
  %v1528 = vpack.c.b16 %v1277, %v1276
  %v1529 = vpack.c.b16 %v1279, %v1278
  %v1530 = vpack.c.b16 %v1281, %v1280
  %v1531 = vpack.c.b16 %v1283, %v1282
  %v1532 = vpack.c.b16 %v1285, %v1284
  %v1533 = vpack.c.b16 %v1287, %v1286
  %v1534 = vpack.c.b16 %v1289, %v1288
  %v1535 = vpack.c.b16 %v1291, %v1290
  %v1536 = vpack.c.b16 %v1293, %v1292
  %v1537 = vpack.c.b16 %v1295, %v1294
  %v1538 = vpack.c.b16 %v1297, %v1296
  %v1539 = vpack.c.b16 %v1299, %v1298
  %v1540 = vpack.c.b16 %v1301, %v1300
  %v1541 = vpack.c.b16 %v1303, %v1302
  %v1542 = vpack.c.b16 %v1305, %v1304
  %v1543 = vpack.c.b16 %v1307, %v1306
  %v1544 = vpack.c.b16 %v1309, %v1308
  %v1545 = vpack.c.b16 %v1311, %v1310
  %v1546 = vpack.c.b16 %v1313, %v1312
  %v1547 = vpack.c.b16 %v1315, %v1314
  %v1548 = vpack.c.b16 %v1317, %v1316
  %v1549 = vpack.c.b16 %v1319, %v1318
  %v1550 = vpack.c.b16 %v1321, %v1320
  %v1551 = vpack.c.b16 %v1323, %v1322
  %v1552 = vpack.c.b16 %v1325, %v1324
  %v1553 = vpack.c.b16 %v1327, %v1326
  %v1554 = vpack.c.b16 %v1329, %v1328
  %v1555 = vpack.c.b16 %v1331, %v1330
  %v1556 = vpack.c.b16 %v1333, %v1332
  %v1557 = vpack.c.b16 %v1335, %v1334
  %v1558 = vpack.c.b16 %v1337, %v1336
  %v1559 = vpack.c.b16 %v1339, %v1338
  %v1560 = vpack.c.b16 %v1341, %v1340
  %v1561 = vpack.c.b16 %v1343, %v1342
  %v1562 = vpack.c.b16 %v1345, %v1344
  %v1563 = vpack.c.b16 %v1347, %v1346
  %v1564 = vpack.c.b16 %v1349, %v1348
  %v1565 = vpack.c.b16 %v1351, %v1350
  %v1566 = vpack.c.b16 %v1353, %v1352
  %v1567 = vpack.c.b16 %v1355, %v1354
  %v1568 = vpack.c.b16 %v1357, %v1356
  %v1569 = vpack.c.b16 %v1359, %v1358
  %v1570 = vpack.c.b16 %v1361, %v1360
  %v1571 = vpack.c.b16 %v1363, %v1362
  %v1572 = vpack.c.b16 %v1365, %v1364
  %v1573 = vpack.c.b16 %v1367, %v1366
  %v1574 = vpack.c.b16 %v1369, %v1368
  %v1575 = vpack.c.b16 %v1371, %v1370
  %v1576 = vpack.c.b16 %v1373, %v1372
  %v1577 = vpack.c.b16 %v1375, %v1374
  %v1578 = vpack.c.b16 %v1377, %v1376
  %v1579 = vpack.c.b16 %v1379, %v1378
  %1780 = vmatprep.subr.bf16.mxu0 0
  %1781 = vmatpush1.bf16.msra.mxu0 %v1380
  %1782 = vmatprep.subr.bf16.mxu0 0
  %1783 = vmatpush1.bf16.msra.mxu0 %v1381
  %1784 = vmatprep.subr.bf16.mxu0 0
  %1785 = vmatpush1.bf16.msra.mxu0 %v1382
  %1786 = vmatprep.subr.bf16.mxu0 0
  %1787 = vmatpush1.bf16.msra.mxu0 %v1383
  %1788 = vmatprep.subr.bf16.mxu0 0
  %1789 = vmatpush1.bf16.msra.mxu0 %v1384
  %1790 = vmatprep.subr.bf16.mxu0 0
  %1791 = vmatpush1.bf16.msra.mxu0 %v1385
  %1792 = vmatprep.subr.bf16.mxu0 0
  %1793 = vmatpush1.bf16.msra.mxu0 %v1386
  %1794 = vmatprep.subr.bf16.mxu0 0
  %1795 = vmatpush1.bf16.msra.mxu0 %v1387
  %1796 = vmatprep.subr.bf16.mxu0 0
  %1797 = vmatpush1.bf16.msra.mxu0 %v1388
  %1798 = vmatprep.subr.bf16.mxu0 0
  %1799 = vmatpush1.bf16.msra.mxu0 %v1389
  %1800 = vmatprep.subr.bf16.mxu0 0
  %1801 = vmatpush1.bf16.msra.mxu0 %v1390
  %1802 = vmatprep.subr.bf16.mxu0 0
  %1803 = vmatpush1.bf16.msra.mxu0 %v1391
  %1804 = vmatprep.subr.bf16.mxu0 0
  %1805 = vmatpush1.bf16.msra.mxu0 %v1392
  %1806 = vmatprep.subr.bf16.mxu0 0
  %1807 = vmatpush1.bf16.msra.mxu0 %v1393
  %1808 = vmatprep.subr.bf16.mxu0 0
  %1809 = vmatpush1.bf16.msra.mxu0 %v1394
  %1810 = vmatprep.subr.bf16.mxu0 0
  %1811 = vmatpush1.bf16.msra.mxu0 %v1395
  %1812 = vmatprep.mubr.bf16.mxu0 %v531
  %1813 = vmatmul.mubr.bf16.gmra.mrb[0].mxu0 %v530
  %v1814 = vpop.f32.mrb[0].mxu0
  %v1815 = vadd.f32 %v452, %v1814
  %v1816 = vpop.f32.mrb[0].mxu0
  %v1817 = vpop.f32.mrb[0].mxu0
  %v1818 = vadd.f32 %v452, %v1817
  %v1819 = vpop.f32.mrb[0].mxu0
  %1820 = vdwg.mxu0
  %1821 = vmatprep.subr.bf16.mxu0 0
  %1822 = vmatpush1.bf16.msra.mxu0 %v1396
  %1823 = vmatprep.subr.bf16.mxu0 0
  %1824 = vmatpush1.bf16.msra.mxu0 %v1397
  %1825 = vmatprep.subr.bf16.mxu0 0
  %1826 = vmatpush1.bf16.msra.mxu0 %v1398
  %1827 = vmatprep.subr.bf16.mxu0 0
  %1828 = vmatpush1.bf16.msra.mxu0 %v1399
  %1829 = vmatprep.subr.bf16.mxu0 0
  %1830 = vmatpush1.bf16.msra.mxu0 %v1400
  %1831 = vmatprep.subr.bf16.mxu0 0
  %1832 = vmatpush1.bf16.msra.mxu0 %v1401
  %1833 = vmatprep.subr.bf16.mxu0 0
  %1834 = vmatpush1.bf16.msra.mxu0 %v1402
  %1835 = vmatprep.subr.bf16.mxu0 0
  %1836 = vmatpush1.bf16.msra.mxu0 %v1403
  %1837 = vmatprep.subr.bf16.mxu0 0
  %1838 = vmatpush1.bf16.msra.mxu0 %v1404
  %1839 = vmatprep.subr.bf16.mxu0 0
  %1840 = vmatpush1.bf16.msra.mxu0 %v1405
  %1841 = vmatprep.subr.bf16.mxu0 0
  %1842 = vmatpush1.bf16.msra.mxu0 %v1406
  %1843 = vmatprep.subr.bf16.mxu0 0
  %1844 = vmatpush1.bf16.msra.mxu0 %v1407
  %1845 = vmatprep.subr.bf16.mxu0 0
  %1846 = vmatpush1.bf16.msra.mxu0 %v1408
  %1847 = vmatprep.subr.bf16.mxu0 0
  %1848 = vmatpush1.bf16.msra.mxu0 %v1409
  %1849 = vmatprep.subr.bf16.mxu0 0
  %1850 = vmatpush1.bf16.msra.mxu0 %v1410
  %1851 = vmatprep.subr.bf16.mxu0 0
  %1852 = vmatpush1.bf16.msra.mxu0 %v1411
  %1853 = vmatprep.mubr.bf16.mxu0 %v533
  %1854 = vmatmul.mubr.bf16.gmra.mrb[0].mxu0 %v532
  %v1855 = vpop.f32.mrb[0].mxu0
  %v1856 = vadd.f32 %v1815, %v1855
  %v1857 = vpop.f32.mrb[0].mxu0
  %v1858 = vpop.f32.mrb[0].mxu0
  %v1859 = vadd.f32 %v1818, %v1858
  %v1860 = vpop.f32.mrb[0].mxu0
  %1861 = vdwg.mxu0
  %1862 = vmatprep.subr.bf16.mxu0 0
  %1863 = vmatpush1.bf16.msra.mxu0 %v1412
  %1864 = vmatprep.subr.bf16.mxu0 0
  %1865 = vmatpush1.bf16.msra.mxu0 %v1413
  %1866 = vmatprep.subr.bf16.mxu0 0
  %1867 = vmatpush1.bf16.msra.mxu0 %v1414
  %1868 = vmatprep.subr.bf16.mxu0 0
  %1869 = vmatpush1.bf16.msra.mxu0 %v1415
  %1870 = vmatprep.subr.bf16.mxu0 0
  %1871 = vmatpush1.bf16.msra.mxu0 %v1416
  %1872 = vmatprep.subr.bf16.mxu0 0
  %1873 = vmatpush1.bf16.msra.mxu0 %v1417
  %1874 = vmatprep.subr.bf16.mxu0 0
  %1875 = vmatpush1.bf16.msra.mxu0 %v1418
  %1876 = vmatprep.subr.bf16.mxu0 0
  %1877 = vmatpush1.bf16.msra.mxu0 %v1419
  %1878 = vmatprep.subr.bf16.mxu0 0
  %1879 = vmatpush1.bf16.msra.mxu0 %v1420
  %1880 = vmatprep.subr.bf16.mxu0 0
  %1881 = vmatpush1.bf16.msra.mxu0 %v1421
  %1882 = vmatprep.subr.bf16.mxu0 0
  %1883 = vmatpush1.bf16.msra.mxu0 %v1422
  %1884 = vmatprep.subr.bf16.mxu0 0
  %1885 = vmatpush1.bf16.msra.mxu0 %v1423
  %1886 = vmatprep.subr.bf16.mxu0 0
  %1887 = vmatpush1.bf16.msra.mxu0 %v1424
  %1888 = vmatprep.subr.bf16.mxu0 0
  %1889 = vmatpush1.bf16.msra.mxu0 %v1425
  %1890 = vmatprep.subr.bf16.mxu0 0
  %1891 = vmatpush1.bf16.msra.mxu0 %v1426
  %1892 = vmatprep.subr.bf16.mxu0 0
  %1893 = vmatpush1.bf16.msra.mxu0 %v1427
  %1894 = vmatprep.mubr.bf16.mxu0 %v535
  %1895 = vmatmul.mubr.bf16.gmra.mrb[0].mxu0 %v534
  %v1896 = vpop.f32.mrb[0].mxu0
  %v1897 = vadd.f32 %v1856, %v1896
  %v1898 = vpop.f32.mrb[0].mxu0
  %v1899 = vpop.f32.mrb[0].mxu0
  %v1900 = vadd.f32 %v1859, %v1899
  %v1901 = vpop.f32.mrb[0].mxu0
  %1902 = vdwg.mxu0
  %1903 = vmatprep.subr.bf16.mxu0 0
  %1904 = vmatpush1.bf16.msra.mxu0 %v1428
  %1905 = vmatprep.subr.bf16.mxu0 0
  %1906 = vmatpush1.bf16.msra.mxu0 %v1429
  %1907 = vmatprep.subr.bf16.mxu0 0
  %1908 = vmatpush1.bf16.msra.mxu0 %v1430
  %1909 = vmatprep.subr.bf16.mxu0 0
  %1910 = vmatpush1.bf16.msra.mxu0 %v1431
  %1911 = vmatprep.subr.bf16.mxu0 0
  %1912 = vmatpush1.bf16.msra.mxu0 %v1432
  %1913 = vmatprep.subr.bf16.mxu0 0
  %1914 = vmatpush1.bf16.msra.mxu0 %v1433
  %1915 = vmatprep.subr.bf16.mxu0 0
  %1916 = vmatpush1.bf16.msra.mxu0 %v1434
  %1917 = vmatprep.subr.bf16.mxu0 0
  %1918 = vmatpush1.bf16.msra.mxu0 %v1435
  %1919 = vmatprep.subr.bf16.mxu0 0
  %1920 = vmatpush1.bf16.msra.mxu0 %v1436
  %1921 = vmatprep.subr.bf16.mxu0 0
  %1922 = vmatpush1.bf16.msra.mxu0 %v1437
  %1923 = vmatprep.subr.bf16.mxu0 0
  %1924 = vmatpush1.bf16.msra.mxu0 %v1438
  %1925 = vmatprep.subr.bf16.mxu0 0
  %1926 = vmatpush1.bf16.msra.mxu0 %v1439
  %1927 = vmatprep.subr.bf16.mxu0 0
  %1928 = vmatpush1.bf16.msra.mxu0 %v1440
  %1929 = vmatprep.subr.bf16.mxu0 0
  %1930 = vmatpush1.bf16.msra.mxu0 %v1441
  %1931 = vmatprep.subr.bf16.mxu0 0
  %1932 = vmatpush1.bf16.msra.mxu0 %v1442
  %1933 = vmatprep.subr.bf16.mxu0 0
  %1934 = vmatpush1.bf16.msra.mxu0 %v1443
  %1935 = vmatprep.mubr.bf16.mxu0 %v537
  %1936 = vmatmul.mubr.bf16.gmra.mrb[0].mxu0 %v536
  %v1937 = vpop.f32.mrb[0].mxu0
  %v1938 = vadd.f32 %v1897, %v1937
  %v1939 = vpop.f32.mrb[0].mxu0
  %v1940 = vpop.f32.mrb[0].mxu0
  %v1941 = vadd.f32 %v1900, %v1940
  %v1942 = vpop.f32.mrb[0].mxu0
  %1943 = vdwg.mxu0
  %1944 = vmatprep.subr.bf16.mxu0 0
  %1945 = vmatpush1.bf16.msra.mxu0 %v1444
  %1946 = vmatprep.subr.bf16.mxu0 0
  %1947 = vmatpush1.bf16.msra.mxu0 %v1445
  %1948 = vmatprep.subr.bf16.mxu0 0
  %1949 = vmatpush1.bf16.msra.mxu0 %v1446
  %1950 = vmatprep.subr.bf16.mxu0 0
  %1951 = vmatpush1.bf16.msra.mxu0 %v1447
  %1952 = vmatprep.subr.bf16.mxu0 0
  %1953 = vmatpush1.bf16.msra.mxu0 %v1448
  %1954 = vmatprep.subr.bf16.mxu0 0
  %1955 = vmatpush1.bf16.msra.mxu0 %v1449
  %1956 = vmatprep.subr.bf16.mxu0 0
  %1957 = vmatpush1.bf16.msra.mxu0 %v1450
  %1958 = vmatprep.subr.bf16.mxu0 0
  %1959 = vmatpush1.bf16.msra.mxu0 %v1451
  %1960 = vmatprep.subr.bf16.mxu0 0
  %1961 = vmatpush1.bf16.msra.mxu0 %v1452
  %1962 = vmatprep.subr.bf16.mxu0 0
  %1963 = vmatpush1.bf16.msra.mxu0 %v1453
  %1964 = vmatprep.subr.bf16.mxu0 0
  %1965 = vmatpush1.bf16.msra.mxu0 %v1454
  %1966 = vmatprep.subr.bf16.mxu0 0
  %1967 = vmatpush1.bf16.msra.mxu0 %v1455
  %1968 = vmatprep.subr.bf16.mxu0 0
  %1969 = vmatpush1.bf16.msra.mxu0 %v1456
  %1970 = vmatprep.subr.bf16.mxu0 0
  %1971 = vmatpush1.bf16.msra.mxu0 %v1457
  %1972 = vmatprep.subr.bf16.mxu0 0
  %1973 = vmatpush1.bf16.msra.mxu0 %v1458
  %1974 = vmatprep.subr.bf16.mxu0 0
  %1975 = vmatpush1.bf16.msra.mxu0 %v1459
  %1976 = vmatprep.mubr.bf16.mxu0 %v539
  %1977 = vmatmul.mubr.bf16.gmra.mrb[0].mxu0 %v538
  %v1978 = vpop.f32.mrb[0].mxu0
  %v1979 = vadd.f32 %v1938, %v1978
  %v1980 = vpop.f32.mrb[0].mxu0
  %v1981 = vpop.f32.mrb[0].mxu0
  %v1982 = vadd.f32 %v1941, %v1981
  %v1983 = vpop.f32.mrb[0].mxu0
  %1984 = vdwg.mxu0
  %1985 = vmatprep.subr.bf16.mxu0 0
  %1986 = vmatpush1.bf16.msra.mxu0 %v1460
  %1987 = vmatprep.subr.bf16.mxu0 0
  %1988 = vmatpush1.bf16.msra.mxu0 %v1461
  %1989 = vmatprep.subr.bf16.mxu0 0
  %1990 = vmatpush1.bf16.msra.mxu0 %v1462
  %1991 = vmatprep.subr.bf16.mxu0 0
  %1992 = vmatpush1.bf16.msra.mxu0 %v1463
  %1993 = vmatprep.subr.bf16.mxu0 0
  %1994 = vmatpush1.bf16.msra.mxu0 %v1464
  %1995 = vmatprep.subr.bf16.mxu0 0
  %1996 = vmatpush1.bf16.msra.mxu0 %v1465
  %1997 = vmatprep.subr.bf16.mxu0 0
  %1998 = vmatpush1.bf16.msra.mxu0 %v1466
  %1999 = vmatprep.subr.bf16.mxu0 0
  %2000 = vmatpush1.bf16.msra.mxu0 %v1467
  %2001 = vmatprep.subr.bf16.mxu0 0
  %2002 = vmatpush1.bf16.msra.mxu0 %v1468
  %2003 = vmatprep.subr.bf16.mxu0 0
  %2004 = vmatpush1.bf16.msra.mxu0 %v1469
  %2005 = vmatprep.subr.bf16.mxu0 0
  %2006 = vmatpush1.bf16.msra.mxu0 %v1470
  %2007 = vmatprep.subr.bf16.mxu0 0
  %2008 = vmatpush1.bf16.msra.mxu0 %v1471
  %2009 = vmatprep.subr.bf16.mxu0 0
  %2010 = vmatpush1.bf16.msra.mxu0 %v1472
  %2011 = vmatprep.subr.bf16.mxu0 0
  %2012 = vmatpush1.bf16.msra.mxu0 %v1473
  %2013 = vmatprep.subr.bf16.mxu0 0
  %2014 = vmatpush1.bf16.msra.mxu0 %v1474
  %2015 = vmatprep.subr.bf16.mxu0 0
  %2016 = vmatpush1.bf16.msra.mxu0 %v1475
  %2017 = vmatprep.mubr.bf16.mxu0 %v541
  %2018 = vmatmul.mubr.bf16.gmra.mrb[0].mxu0 %v540
  %v2019 = vpop.f32.mrb[0].mxu0
  %v2020 = vadd.f32 %v1979, %v2019
  %v2021 = vpop.f32.mrb[0].mxu0
  %v2022 = vpop.f32.mrb[0].mxu0
  %v2023 = vadd.f32 %v1982, %v2022
  %v2024 = vpop.f32.mrb[0].mxu0
  %2025 = vdwg.mxu0
  %2026 = vmatprep.subr.bf16.mxu0 0
  %2027 = vmatpush1.bf16.msra.mxu0 %v1476
  %2028 = vmatprep.subr.bf16.mxu0 0
  %2029 = vmatpush1.bf16.msra.mxu0 %v1477
  %2030 = vmatprep.subr.bf16.mxu0 0
  %2031 = vmatpush1.bf16.msra.mxu0 %v1478
  %2032 = vmatprep.subr.bf16.mxu0 0
  %2033 = vmatpush1.bf16.msra.mxu0 %v1479
  %2034 = vmatprep.subr.bf16.mxu0 0
  %2035 = vmatpush1.bf16.msra.mxu0 %v1480
  %2036 = vmatprep.subr.bf16.mxu0 0
  %2037 = vmatpush1.bf16.msra.mxu0 %v1481
  %2038 = vmatprep.subr.bf16.mxu0 0
  %2039 = vmatpush1.bf16.msra.mxu0 %v1482
  %2040 = vmatprep.subr.bf16.mxu0 0
  %2041 = vmatpush1.bf16.msra.mxu0 %v1483
  %2042 = vmatprep.subr.bf16.mxu0 0
  %2043 = vmatpush1.bf16.msra.mxu0 %v1484
  %2044 = vmatprep.subr.bf16.mxu0 0
  %2045 = vmatpush1.bf16.msra.mxu0 %v1485
  %2046 = vmatprep.subr.bf16.mxu0 0
  %2047 = vmatpush1.bf16.msra.mxu0 %v1486
  %2048 = vmatprep.subr.bf16.mxu0 0
  %2049 = vmatpush1.bf16.msra.mxu0 %v1487
  %2050 = vmatprep.subr.bf16.mxu0 0
  %2051 = vmatpush1.bf16.msra.mxu0 %v1488
  %2052 = vmatprep.subr.bf16.mxu0 0
  %2053 = vmatpush1.bf16.msra.mxu0 %v1489
  %2054 = vmatprep.subr.bf16.mxu0 0
  %2055 = vmatpush1.bf16.msra.mxu0 %v1490
  %2056 = vmatprep.subr.bf16.mxu0 0
  %2057 = vmatpush1.bf16.msra.mxu0 %v1491
  %2058 = vmatprep.mubr.bf16.mxu0 %v543
  %2059 = vmatmul.mubr.bf16.gmra.mrb[0].mxu0 %v542
  %v2060 = vpop.f32.mrb[0].mxu0
  %v2061 = vadd.f32 %v2020, %v2060
  %v2062 = vpop.f32.mrb[0].mxu0
  %v2063 = vpop.f32.mrb[0].mxu0
  %v2064 = vadd.f32 %v2023, %v2063
  %v2065 = vpop.f32.mrb[0].mxu0
  %2066 = vdwg.mxu0
  %2067 = vmatprep.subr.bf16.mxu0 0
  %2068 = vmatpush1.bf16.msra.mxu0 %v1492
  %2069 = vmatprep.subr.bf16.mxu0 0
  %2070 = vmatpush1.bf16.msra.mxu0 %v1493
  %2071 = vmatprep.subr.bf16.mxu0 0
  %2072 = vmatpush1.bf16.msra.mxu0 %v1494
  %2073 = vmatprep.subr.bf16.mxu0 0
  %2074 = vmatpush1.bf16.msra.mxu0 %v1495
  %2075 = vmatprep.subr.bf16.mxu0 0
  %2076 = vmatpush1.bf16.msra.mxu0 %v1496
  %2077 = vmatprep.subr.bf16.mxu0 0
  %2078 = vmatpush1.bf16.msra.mxu0 %v1497
  %2079 = vmatprep.subr.bf16.mxu0 0
  %2080 = vmatpush1.bf16.msra.mxu0 %v1498
  %2081 = vmatprep.subr.bf16.mxu0 0
  %2082 = vmatpush1.bf16.msra.mxu0 %v1499
  %2083 = vmatprep.subr.bf16.mxu0 0
  %2084 = vmatpush1.bf16.msra.mxu0 %v1500
  %2085 = vmatprep.subr.bf16.mxu0 0
  %2086 = vmatpush1.bf16.msra.mxu0 %v1501
  %2087 = vmatprep.subr.bf16.mxu0 0
  %2088 = vmatpush1.bf16.msra.mxu0 %v1502
  %2089 = vmatprep.subr.bf16.mxu0 0
  %2090 = vmatpush1.bf16.msra.mxu0 %v1503
  %2091 = vmatprep.subr.bf16.mxu0 0
  %2092 = vmatpush1.bf16.msra.mxu0 %v1504
  %2093 = vmatprep.subr.bf16.mxu0 0
  %2094 = vmatpush1.bf16.msra.mxu0 %v1505
  %2095 = vmatprep.subr.bf16.mxu0 0
  %2096 = vmatpush1.bf16.msra.mxu0 %v1506
  %2097 = vmatprep.subr.bf16.mxu0 0
  %2098 = vmatpush1.bf16.msra.mxu0 %v1507
  %2099 = vmatprep.mubr.bf16.mxu0 %v545
  %2100 = vmatmul.mubr.bf16.gmra.mrb[0].mxu0 %v544
  %v2101 = vpop.f32.mrb[0].mxu0
  %v2102 = vadd.f32 %v2061, %v2101
  %v2103 = vpop.f32.mrb[0].mxu0
  %v2104 = vpop.f32.mrb[0].mxu0
  %v2105 = vadd.f32 %v2064, %v2104
  %v2106 = vpop.f32.mrb[0].mxu0
  %2107 = vdwg.mxu0
  %2108 = vmatprep.subr.bf16.mxu0 0
  %2109 = vmatpush1.bf16.msra.mxu0 %v1508
  %2110 = vmatprep.subr.bf16.mxu0 0
  %2111 = vmatpush1.bf16.msra.mxu0 %v1509
  %2112 = vmatprep.subr.bf16.mxu0 0
  %2113 = vmatpush1.bf16.msra.mxu0 %v1510
  %2114 = vmatprep.subr.bf16.mxu0 0
  %2115 = vmatpush1.bf16.msra.mxu0 %v1511
  %2116 = vmatprep.subr.bf16.mxu0 0
  %2117 = vmatpush1.bf16.msra.mxu0 %v1512
  %2118 = vmatprep.subr.bf16.mxu0 0
  %2119 = vmatpush1.bf16.msra.mxu0 %v1513
  %2120 = vmatprep.subr.bf16.mxu0 0
  %2121 = vmatpush1.bf16.msra.mxu0 %v1514
  %2122 = vmatprep.subr.bf16.mxu0 0
  %2123 = vmatpush1.bf16.msra.mxu0 %v1515
  %2124 = vmatprep.subr.bf16.mxu0 0
  %2125 = vmatpush1.bf16.msra.mxu0 %v1516
  %2126 = vmatprep.subr.bf16.mxu0 0
  %2127 = vmatpush1.bf16.msra.mxu0 %v1517
  %2128 = vmatprep.subr.bf16.mxu0 0
  %2129 = vmatpush1.bf16.msra.mxu0 %v1518
  %2130 = vmatprep.subr.bf16.mxu0 0
  %2131 = vmatpush1.bf16.msra.mxu0 %v1519
  %2132 = vmatprep.subr.bf16.mxu0 0
  %2133 = vmatpush1.bf16.msra.mxu0 %v1520
  %2134 = vmatprep.subr.bf16.mxu0 0
  %2135 = vmatpush1.bf16.msra.mxu0 %v1521
  %2136 = vmatprep.subr.bf16.mxu0 0
  %2137 = vmatpush1.bf16.msra.mxu0 %v1522
  %2138 = vmatprep.subr.bf16.mxu0 0
  %2139 = vmatpush1.bf16.msra.mxu0 %v1523
  %2140 = vmatprep.mubr.bf16.mxu0 %v547
  %2141 = vmatmul.mubr.bf16.gmra.mrb[0].mxu0 %v546
  %v2142 = vpop.f32.mrb[0].mxu0
  %v2143 = vadd.f32 %v2102, %v2142
  %v2144 = vpop.f32.mrb[0].mxu0
  %v2145 = vpop.f32.mrb[0].mxu0
  %v2146 = vadd.f32 %v2105, %v2145
  %v2147 = vpop.f32.mrb[0].mxu0
  %2148 = vdwg.mxu0
  %2149 = vmatprep.subr.bf16.mxu0 0
  %2150 = vmatpush1.bf16.msra.mxu0 %v1524
  %2151 = vmatprep.subr.bf16.mxu0 0
  %2152 = vmatpush1.bf16.msra.mxu0 %v1525
  %2153 = vmatprep.subr.bf16.mxu0 0
  %2154 = vmatpush1.bf16.msra.mxu0 %v1526
  %2155 = vmatprep.subr.bf16.mxu0 0
  %2156 = vmatpush1.bf16.msra.mxu0 %v1527
  %2157 = vmatprep.subr.bf16.mxu0 0
  %2158 = vmatpush1.bf16.msra.mxu0 %v1528
  %2159 = vmatprep.subr.bf16.mxu0 0
  %2160 = vmatpush1.bf16.msra.mxu0 %v1529
  %2161 = vmatprep.subr.bf16.mxu0 0
  %2162 = vmatpush1.bf16.msra.mxu0 %v1530
  %2163 = vmatprep.subr.bf16.mxu0 0
  %2164 = vmatpush1.bf16.msra.mxu0 %v1531
  %2165 = vmatprep.subr.bf16.mxu0 0
  %2166 = vmatpush1.bf16.msra.mxu0 %v1532
  %2167 = vmatprep.subr.bf16.mxu0 0
  %2168 = vmatpush1.bf16.msra.mxu0 %v1533
  %2169 = vmatprep.subr.bf16.mxu0 0
  %2170 = vmatpush1.bf16.msra.mxu0 %v1534
  %2171 = vmatprep.subr.bf16.mxu0 0
  %2172 = vmatpush1.bf16.msra.mxu0 %v1535
  %2173 = vmatprep.subr.bf16.mxu0 0
  %2174 = vmatpush1.bf16.msra.mxu0 %v1536
  %2175 = vmatprep.subr.bf16.mxu0 0
  %2176 = vmatpush1.bf16.msra.mxu0 %v1537
  %2177 = vmatprep.subr.bf16.mxu0 0
  %2178 = vmatpush1.bf16.msra.mxu0 %v1538
  %2179 = vmatprep.subr.bf16.mxu0 0
  %2180 = vmatpush1.bf16.msra.mxu0 %v1539
  %2181 = vmatprep.mubr.bf16.mxu0 %v549
  %2182 = vmatmul.mubr.bf16.gmra.mrb[0].mxu0 %v548
  %v2183 = vpop.f32.mrb[0].mxu0
  %v2184 = vadd.f32 %v2143, %v2183
  %v2185 = vpop.f32.mrb[0].mxu0
  %v2186 = vpop.f32.mrb[0].mxu0
  %v2187 = vadd.f32 %v2146, %v2186
  %v2188 = vpop.f32.mrb[0].mxu0
  %2189 = vdwg.mxu0
  %2190 = vmatprep.subr.bf16.mxu0 0
  %2191 = vmatpush1.bf16.msra.mxu0 %v1540
  %2192 = vmatprep.subr.bf16.mxu0 0
  %2193 = vmatpush1.bf16.msra.mxu0 %v1541
  %2194 = vmatprep.subr.bf16.mxu0 0
  %2195 = vmatpush1.bf16.msra.mxu0 %v1542
  %2196 = vmatprep.subr.bf16.mxu0 0
  %2197 = vmatpush1.bf16.msra.mxu0 %v1543
  %2198 = vmatprep.subr.bf16.mxu0 0
  %2199 = vmatpush1.bf16.msra.mxu0 %v1544
  %2200 = vmatprep.subr.bf16.mxu0 0
  %2201 = vmatpush1.bf16.msra.mxu0 %v1545
  %2202 = vmatprep.subr.bf16.mxu0 0
  %2203 = vmatpush1.bf16.msra.mxu0 %v1546
  %2204 = vmatprep.subr.bf16.mxu0 0
  %2205 = vmatpush1.bf16.msra.mxu0 %v1547
  %2206 = vmatprep.subr.bf16.mxu0 0
  %2207 = vmatpush1.bf16.msra.mxu0 %v1548
  %2208 = vmatprep.subr.bf16.mxu0 0
  %2209 = vmatpush1.bf16.msra.mxu0 %v1549
  %2210 = vmatprep.subr.bf16.mxu0 0
  %2211 = vmatpush1.bf16.msra.mxu0 %v1550
  %2212 = vmatprep.subr.bf16.mxu0 0
  %2213 = vmatpush1.bf16.msra.mxu0 %v1551
  %2214 = vmatprep.subr.bf16.mxu0 0
  %2215 = vmatpush1.bf16.msra.mxu0 %v1552
  %2216 = vmatprep.subr.bf16.mxu0 0
  %2217 = vmatpush1.bf16.msra.mxu0 %v1553
  %2218 = vmatprep.subr.bf16.mxu0 0
  %2219 = vmatpush1.bf16.msra.mxu0 %v1554
  %2220 = vmatprep.subr.bf16.mxu0 0
  %2221 = vmatpush1.bf16.msra.mxu0 %v1555
  %2222 = vmatprep.mubr.bf16.mxu0 %v551
  %2223 = vmatmul.mubr.bf16.gmra.mrb[0].mxu0 %v550
  %v2224 = vpop.f32.mrb[0].mxu0
  %v2225 = vadd.f32 %v2184, %v2224
  %v2226 = vpop.f32.mrb[0].mxu0
  %v2227 = vpop.f32.mrb[0].mxu0
  %v2228 = vadd.f32 %v2187, %v2227
  %v2229 = vpop.f32.mrb[0].mxu0
  %2230 = vdwg.mxu0
  %2231 = vmatprep.subr.bf16.mxu0 0
  %2232 = vmatpush1.bf16.msra.mxu0 %v1556
  %2233 = vmatprep.subr.bf16.mxu0 0
  %2234 = vmatpush1.bf16.msra.mxu0 %v1557
  %2235 = vmatprep.subr.bf16.mxu0 0
  %2236 = vmatpush1.bf16.msra.mxu0 %v1558
  %2237 = vmatprep.subr.bf16.mxu0 0
  %2238 = vmatpush1.bf16.msra.mxu0 %v1559
  %2239 = vmatprep.subr.bf16.mxu0 0
  %2240 = vmatpush1.bf16.msra.mxu0 %v1560
  %2241 = vmatprep.subr.bf16.mxu0 0
  %2242 = vmatpush1.bf16.msra.mxu0 %v1561
  %2243 = vmatprep.subr.bf16.mxu0 0
  %2244 = vmatpush1.bf16.msra.mxu0 %v1562
  %2245 = vmatprep.subr.bf16.mxu0 0
  %2246 = vmatpush1.bf16.msra.mxu0 %v1563
  %2247 = vmatprep.subr.bf16.mxu0 0
  %2248 = vmatpush1.bf16.msra.mxu0 %v1564
  %2249 = vmatprep.subr.bf16.mxu0 0
  %2250 = vmatpush1.bf16.msra.mxu0 %v1565
  %2251 = vmatprep.subr.bf16.mxu0 0
  %2252 = vmatpush1.bf16.msra.mxu0 %v1566
  %2253 = vmatprep.subr.bf16.mxu0 0
  %2254 = vmatpush1.bf16.msra.mxu0 %v1567
  %2255 = vmatprep.subr.bf16.mxu0 0
  %2256 = vmatpush1.bf16.msra.mxu0 %v1568
  %2257 = vmatprep.subr.bf16.mxu0 0
  %2258 = vmatpush1.bf16.msra.mxu0 %v1569
  %2259 = vmatprep.subr.bf16.mxu0 0
  %2260 = vmatpush1.bf16.msra.mxu0 %v1570
  %2261 = vmatprep.subr.bf16.mxu0 0
  %2262 = vmatpush1.bf16.msra.mxu0 %v1571
  %2263 = vmatprep.mubr.bf16.mxu0 %v553
  %2264 = vmatmul.mubr.bf16.gmra.mrb[0].mxu0 %v552
  %v2265 = vpop.f32.mrb[0].mxu0
  %v2266 = vadd.f32 %v2225, %v2265
  %v2267 = vpop.f32.mrb[0].mxu0
  %v2268 = vpop.f32.mrb[0].mxu0
  %v2269 = vadd.f32 %v2228, %v2268
  %v2270 = vpop.f32.mrb[0].mxu0
  %2271 = vdwg.mxu0
  %2272 = vmatprep.subr.bf16.mxu0 0
  %2273 = vmatpush1.bf16.msra.mxu0 %v1572
  %2274 = vmatprep.subr.bf16.mxu0 0
  %2275 = vmatpush1.bf16.msra.mxu0 %v1573
  %2276 = vmatprep.subr.bf16.mxu0 0
  %2277 = vmatpush1.bf16.msra.mxu0 %v1574
  %2278 = vmatprep.subr.bf16.mxu0 0
  %2279 = vmatpush1.bf16.msra.mxu0 %v1575
  %2280 = vmatprep.subr.bf16.mxu0 0
  %2281 = vmatpush1.bf16.msra.mxu0 %v1576
  %2282 = vmatprep.subr.bf16.mxu0 0
  %2283 = vmatpush1.bf16.msra.mxu0 %v1577
  %2284 = vmatprep.subr.bf16.mxu0 0
  %2285 = vmatpush1.bf16.msra.mxu0 %v1578
  %2286 = vmatprep.subr.bf16.mxu0 0
  %2287 = vmatpush1.bf16.msra.mxu0 %v1579
  %2288 = vmatprep.subr.bf16.mxu0 0
  %2289 = vmatpush1.bf16.msra.mxu0 0
  %2290 = vmatprep.subr.bf16.mxu0 0
  %2291 = vmatpush1.bf16.msra.mxu0 0
  %2292 = vmatprep.subr.bf16.mxu0 0
  %2293 = vmatpush1.bf16.msra.mxu0 0
  %2294 = vmatprep.subr.bf16.mxu0 0
  %2295 = vmatpush1.bf16.msra.mxu0 0
  %2296 = vmatprep.subr.bf16.mxu0 0
  %2297 = vmatpush1.bf16.msra.mxu0 0
  %2298 = vmatprep.subr.bf16.mxu0 0
  %2299 = vmatpush1.bf16.msra.mxu0 0
  %2300 = vmatprep.subr.bf16.mxu0 0
  %2301 = vmatpush1.bf16.msra.mxu0 0
  %2302 = vmatprep.subr.bf16.mxu0 0
  %2303 = vmatpush1.bf16.msra.mxu0 0
  %2304 = vmatprep.mubr.bf16.mxu0 0
  %2305 = vmatmul.mubr.bf16.gmra.mrb[0].mxu0 %v554
  %v2306 = vpop.f32.mrb[0].mxu0
  %v2307 = vadd.f32 %v2266, %v2306
  %v2308 = vpop.f32.mrb[0].mxu0
  %v2309 = vpop.f32.mrb[0].mxu0
  %v2310 = vadd.f32 %v2269, %v2309
  %v2311 = vpop.f32.mrb[0].mxu0
  %2312 = vdwg.mxu0
  %v2313 = vpack.c.bf16 %v2310, %v2307
  %v2314 = vld [vmem:[%s3] sm:$0xf]
  %v2315 = vld [vmem:[%s3 + $0x4] sm:$0xf]
  %v2316 = vld [vmem:[%s3 + $0x8] sm:$0xf]
  %v2317 = vld [vmem:[%s3 + $0xc] sm:$0xf]
  %v2318 = vld [vmem:[%s3 + $0x10] sm:$0xf]
  %v2319 = vld [vmem:[%s3 + $0x14] sm:$0xf]
  %v2320 = vld [vmem:[%s3 + $0x18] sm:$0xf]
  %v2321 = vld [vmem:[%s3 + $0x1c] sm:$0xf]
  %v2322 = vld [vmem:[%s3 + $0x20] sm:$0xf]
  %v2323 = vld [vmem:[%s3 + $0x24] sm:$0xf]
  %v2324 = vld [vmem:[%s3 + $0x28] sm:$0xf]
  %v2325 = vld [vmem:[%s3 + $0x2c] sm:$0xf]
  %v2326 = vld [vmem:[%s3 + $0x30] sm:$0xf]
  %v2327 = vld [vmem:[%s3 + $0x34] sm:$0xf]
  %v2328 = vld [vmem:[%s3 + $0x38] sm:$0xf]
  %v2329 = vld [vmem:[%s3 + $0x3c] sm:$0xf]
  %v2330 = vld [vmem:[%s4] sm:$0x1]
  %v2332 = vlaneseq
  %v2333 = vshrl.u32 %v2332, 7
  %v2334 = vsub.s32 0, %v2333
  %v2335 = vrot.slane %v2330, %v2334
  %v2353 = vunpack.c.l.b16 %v2314
  %v2354 = vunpack.c.l.b16 %v2315
  %v2355 = vunpack.c.l.b16 %v2316
  %v2356 = vunpack.c.l.b16 %v2317
  %v2357 = vunpack.c.l.b16 %v2318
  %v2358 = vunpack.c.l.b16 %v2319
  %v2359 = vunpack.c.l.b16 %v2320
  %v2360 = vunpack.c.l.b16 %v2321
  %v2361 = vunpack.c.l.b16 %v2322
  %v2362 = vunpack.c.l.b16 %v2323
  %v2363 = vunpack.c.l.b16 %v2324
  %v2364 = vunpack.c.l.b16 %v2325
  %v2365 = vunpack.c.l.b16 %v2326
  %v2366 = vunpack.c.l.b16 %v2327
  %v2367 = vunpack.c.l.b16 %v2328
  %v2368 = vunpack.c.l.b16 %v2329
  %v2369 = vpack.c.b16 %v2354, %v2353
  %v2370 = vpack.c.b16 %v2356, %v2355
  %v2371 = vpack.c.b16 %v2358, %v2357
  %v2372 = vpack.c.b16 %v2360, %v2359
  %v2373 = vpack.c.b16 %v2362, %v2361
  %v2374 = vpack.c.b16 %v2364, %v2363
  %v2375 = vpack.c.b16 %v2366, %v2365
  %v2376 = vpack.c.b16 %v2368, %v2367
  %2385 = vmatprep.subr.bf16.mxu0 0
  %2386 = vmatpush1.bf16.msra.mxu0 %v2369
  %2387 = vmatprep.subr.bf16.mxu0 0
  %2388 = vmatpush1.bf16.msra.mxu0 %v2370
  %2389 = vmatprep.subr.bf16.mxu0 0
  %2390 = vmatpush1.bf16.msra.mxu0 %v2371
  %2391 = vmatprep.subr.bf16.mxu0 0
  %2392 = vmatpush1.bf16.msra.mxu0 %v2372
  %2393 = vmatprep.subr.bf16.mxu0 0
  %2394 = vmatpush1.bf16.msra.mxu0 %v2373
  %2395 = vmatprep.subr.bf16.mxu0 0
  %2396 = vmatpush1.bf16.msra.mxu0 %v2374
  %2397 = vmatprep.subr.bf16.mxu0 0
  %2398 = vmatpush1.bf16.msra.mxu0 %v2375
  %2399 = vmatprep.subr.bf16.mxu0 0
  %2400 = vmatpush1.bf16.msra.mxu0 %v2376
  %2401 = vmatprep.subr.bf16.mxu0 0
  %2402 = vmatpush1.bf16.msra.mxu0 0
  %2403 = vmatprep.subr.bf16.mxu0 0
  %2404 = vmatpush1.bf16.msra.mxu0 0
  %2405 = vmatprep.subr.bf16.mxu0 0
  %2406 = vmatpush1.bf16.msra.mxu0 0
  %2407 = vmatprep.subr.bf16.mxu0 0
  %2408 = vmatpush1.bf16.msra.mxu0 0
  %2409 = vmatprep.subr.bf16.mxu0 0
  %2410 = vmatpush1.bf16.msra.mxu0 0
  %2411 = vmatprep.subr.bf16.mxu0 0
  %2412 = vmatpush1.bf16.msra.mxu0 0
  %2413 = vmatprep.subr.bf16.mxu0 0
  %2414 = vmatpush1.bf16.msra.mxu0 0
  %2415 = vmatprep.subr.bf16.mxu0 0
  %2416 = vmatpush1.bf16.msra.mxu0 0
  %2417 = vmatprep.mubr.bf16.mxu0 0
  %2418 = vmatmul.mubr.bf16.gmra.mrb[0].mxu0 %v2313
  %v2419 = vpop.f32.mrb[0].mxu0
  %v2420 = vadd.f32 %v2335, %v2419
  %v2421 = vpop.f32.mrb[0].mxu0
  %v2422 = vpop.f32.mrb[0].mxu0
  %v2423 = vadd.f32 %v2335, %v2422
  %v2424 = vpop.f32.mrb[0].mxu0
  %2425 = vdwg.mxu0
  %2426 = vst [vmem:[%s5] sm:$0xff] %v2420
  %2427 = vst [vmem:[%s5 + $0x8] sm:$0xff] %v2423
  // Predicated region
  $region22: #{simple_net_forward.5} parent=0 // pred_check
    _
  $region23: #{simple_net_forward.5} parent=0 // pred_check_branch
    %2429 = sbr.rel (0) target = $region25
  $region24: #{simple_net_forward.5} parent=0 // pred_region
    _
  $region25: #{simple_net_forward.5} parent=0 // pred_fallthru
    _
  // Predicated region
  $region26: #{simple_net_forward.5} parent=0 // pred_check
    _
  $region27: #{simple_net_forward.5} parent=0 // pred_check_branch
    %2431 = sbr.rel (0) target = $region29
  $region28: #{simple_net_forward.5} parent=0 // pred_region
    _
  $region29: #{simple_net_forward.5} parent=0 // pred_fallthru
    _

</llo_original>
